<compile_context>
chip_gen: v5e
topology: v5e:2x2
jax: 0.10.0
libtpu: 0.0.40
codegen_flags: <defaults>
</compile_context>

<pallas_src>
import functools

import jax
import jax.numpy as jnp
from jax import lax
from jax.experimental import pallas as pl
from jax.experimental.pallas import tpu as pltpu


def _round_up(n, m):
    return (n + m - 1) // m * m


def _lstm_cell(gates, c, H):
    """PyTorch gate order [i, f, g, o]; f32 elementwise (sigmoid/tanh -> EUP)."""
    i = jax.nn.sigmoid(gates[:, 0 * H:1 * H])
    f = jax.nn.sigmoid(gates[:, 1 * H:2 * H])
    g = jnp.tanh(gates[:, 2 * H:3 * H])
    o = jax.nn.sigmoid(gates[:, 3 * H:4 * H])
    c_new = f * c + i * g
    return o * jnp.tanh(c_new), c_new


# ----------------------------------------------------------------------------
# Fused whole-model kernel.
#
# Ref layout (all default full-array blocks, no grid):
#   inputs : x_flat (T*Bp, D0),
#            per layer l: w_ih (Din_l, ndir*4H) bf16,
#                         b    (1, ndir*4H)    f32  (= b_ih + b_hh per dir),
#                         w_hh (ndir*H, ndir*4H) bf16  (block-diag if bidir),
#            fc_w (ndir*H, C) bf16, fc_b (1, C) f32
#   output : (Bp, C) f32
#   scratch: xproj (T*Bp, ndir*4H) f32, hbuf (T*Bp, ndir*H) f32
# Row layout everywhere: row t*Bp + b  <->  (time t, batch b).
# xproj / gate lanes are direction-major: [0:4H] forward, [4H:8H] reverse.
# hbuf lanes: [0:H] forward hidden, [H:2H] reverse hidden (PyTorch concat order).
# ----------------------------------------------------------------------------
def _fused_lstm_kernel(T, Bp, H, L, bidir, unroll, *refs):
    G = 4 * H
    x_ref = refs[0]
    fcw_ref = refs[1 + 3 * L]
    fcb_ref = refs[2 + 3 * L]
    o_ref = refs[3 + 3 * L]
    xp_ref = refs[4 + 3 * L]
    h_ref = refs[5 + 3 * L]

    z = jnp.zeros((Bp, H), jnp.float32)          # h0 = c0 = 0 (PyTorch)

    for l in range(L):
        wih_ref = refs[1 + 3 * l]
        b_ref = refs[2 + 3 * l]
        whh_ref = refs[3 + 3 * l]
        is_last = l == L - 1

        # Hoisted input projection for ALL timesteps and BOTH directions:
        # one big MXU matmul (rows = T*Bp), bias folded in.  Layer > 0 reads
        # the previous layer's lane-concatenated hidden buffer directly.
        src_ref = x_ref if l == 0 else h_ref
        xp_ref[...] = (
            jnp.dot(src_ref[...].astype(jnp.bfloat16), wih_ref[...],
                    preferred_element_type=jnp.float32)
            + b_ref[...]
        )

        if bidir and not is_last:
            # Both directions advanced in the same loop step (fwd t=s,
            # rev t=T-1-s); ONE block-diagonal matmul per step.
            whh = whh_ref[...]                    # (2H, 8H), resident all T steps

            def step(s, carry):
                h_cat, c_f, c_b = carry
                rf = pl.multiple_of(s * Bp, Bp)
                rb = pl.multiple_of((T - 1 - s) * Bp, Bp)
                mm = jnp.dot(h_cat.astype(jnp.bfloat16), whh,
                             preferred_element_type=jnp.float32)   # (Bp, 8H)
                g_f = xp_ref[pl.ds(rf, Bp), 0:G] + mm[:, 0:G]
                g_b = xp_ref[pl.ds(rb, Bp), G:2 * G] + mm[:, G:2 * G]
                h_f, c_f = _lstm_cell(g_f, c_f, H)
                h_b, c_b = _lstm_cell(g_b, c_b, H)
                h_ref[pl.ds(rf, Bp), 0:H] = h_f
                h_ref[pl.ds(rb, Bp), H:2 * H] = h_b
                return jnp.concatenate([h_f, h_b], axis=1), c_f, c_b

            lax.fori_loop(0, T, step,
                          (jnp.zeros((Bp, 2 * H), jnp.float32), z, z),
                          unroll=unroll)

        elif not bidir and not is_last:
            whh = whh_ref[...]                    # (H, 4H)

            def step(s, carry):
                h, c = carry
                r = pl.multiple_of(s * Bp, Bp)
                g = xp_ref[pl.ds(r, Bp), 0:G] + jnp.dot(
                    h.astype(jnp.bfloat16), whh,
                    preferred_element_type=jnp.float32)
                h, c = _lstm_cell(g, c, H)
                h_ref[pl.ds(r, Bp), 0:H] = h
                return h, c

            lax.fori_loop(0, T, step, (z, z), unroll=unroll)

        else:
            # Last layer: only the forward recurrence is needed.  The
            # forward-direction W_hh block is rows 0:H, lanes 0:4H of the
            # (block-diagonal) weight.
            whh_f = whh_ref[0:H, 0:G]             # resident across all T steps

            def step(s, carry):
                h, c = carry
                r = pl.multiple_of(s * Bp, Bp)
                g = xp_ref[pl.ds(r, Bp), 0:G] + jnp.dot(
                    h.astype(jnp.bfloat16), whh_f,
                    preferred_element_type=jnp.float32)
                return _lstm_cell(g, c, H)

            h_f, _ = lax.fori_loop(0, T, step, (z, z), unroll=unroll)

            if bidir:
                # Reverse-direction output at original t = T-1 is its FIRST
                # reverse step from h0 = c0 = 0, i.e. gates are just the
                # (already biased) projection at row (T-1)*Bp.
                g_b = xp_ref[pl.ds((T - 1) * Bp, Bp), G:2 * G]
                h_b, _ = _lstm_cell(g_b, z, H)
                h_last = jnp.concatenate([h_f, h_b], axis=1)   # (Bp, 2H)
            else:
                h_last = h_f

            # Fused fully-connected + ReLU on the last-timestep hidden.
            y = (jnp.dot(h_last.astype(jnp.bfloat16), fcw_ref[...],
                         preferred_element_type=jnp.float32)
                 + fcb_ref[...])
            o_ref[...] = jnp.maximum(y, 0.0)


# ----------------------------------------------------------------------------
# Parameters (PyTorch nn.LSTM / nn.Linear default U(-1/sqrt(fan), +1/sqrt(fan))
# init), stored pre-transposed / pre-combined in the layout the kernel eats:
#   per layer: w_ih : bf16 (Din_l, ndir*4H)   (directions concatenated on lanes)
#              b    : f32  (1, ndir*4H)       (= b_ih + b_hh, per direction)
#              w_hh : bf16 (ndir*H, ndir*4H)  (block-diag of the per-dir W_hh)
#   fc: fc_w : bf16 (ndir*H, C), fc_b : f32 (1, C)
# ----------------------------------------------------------------------------
def init_params(key, input_size, hidden_size, num_layers, bidirectional,
                num_classes):
    H = hidden_size
    k = 1.0 / float(H) ** 0.5
    ndir = 2 if bidirectional else 1
    layers = []
    in_dim = input_size
    for _ in range(num_layers):
        wih_dirs, whh_dirs, b_dirs = [], [], []
        for _ in range(ndir):
            key, k1, k2, k3, k4 = jax.random.split(key, 5)
            w_ih = jax.random.uniform(k1, (in_dim, 4 * H), jnp.float32, -k, k)
            w_hh = jax.random.uniform(k2, (H, 4 * H), jnp.float32, -k, k)
            b_ih = jax.random.uniform(k3, (4 * H,), jnp.float32, -k, k)
            b_hh = jax.random.uniform(k4, (4 * H,), jnp.float32, -k, k)
            wih_dirs.append(w_ih)
            whh_dirs.append(w_hh)
            b_dirs.append(b_ih + b_hh)
        w_ih_cat = jnp.concatenate(wih_dirs, axis=1).astype(jnp.bfloat16)
        b_cat = jnp.concatenate(b_dirs)[None, :]
        if ndir == 2:
            zblk = jnp.zeros((H, 4 * H), jnp.float32)
            w_hh_bd = jnp.concatenate(
                [jnp.concatenate([whh_dirs[0], zblk], axis=1),
                 jnp.concatenate([zblk, whh_dirs[1]], axis=1)], axis=0)
        else:
            w_hh_bd = whh_dirs[0]
        layers.append({"w_ih": w_ih_cat, "b": b_cat,
                       "w_hh": w_hh_bd.astype(jnp.bfloat16)})
        in_dim = ndir * H

    fc_in = ndir * H
    kf = 1.0 / float(fc_in) ** 0.5
    key, k5, k6 = jax.random.split(key, 3)
    fc_w = jax.random.uniform(k5, (fc_in, num_classes), jnp.float32, -kf, kf)
    fc_b = jax.random.uniform(k6, (1, num_classes), jnp.float32, -kf, kf)
    return {"layers": layers, "fc_w": fc_w.astype(jnp.bfloat16), "fc_b": fc_b}


@functools.partial(jax.jit, static_argnames=("bidirectional",))
def lstm_model_forward(x, params, *, bidirectional=True):
    """Forward pass of LSTMModel. x: (B, 1, T, input_size) -> (B, num_classes)."""
    ndir = 2 if bidirectional else 1
    layers = params["layers"]
    L = len(layers)
    H = layers[0]["w_hh"].shape[0] // ndir
    C = params["fc_w"].shape[1]

    B = x.shape[0]
    x = jnp.squeeze(x, axis=1)                 # (B, T, D)  == x.squeeze(1)
    x = jnp.transpose(x, (1, 0, 2))            # (T, B, D)  time-major
    T = x.shape[0]
    Bp = _round_up(max(B, 8), 8)               # pad batch to f32 sublane count
    x = jnp.pad(x, ((0, 0), (0, Bp - B), (0, 0)))
    x_flat = x.reshape(T * Bp, x.shape[-1])    # row t*Bp + b <-> (time t, batch b)

    # TODO(synk): inter-layer LSTM dropout omitted (inference / eval semantics).
    args = [x_flat]
    for lp in layers:
        args += [lp["w_ih"], lp["b"], lp["w_hh"]]
    args += [params["fc_w"], params["fc_b"]]

    # VMEM budget: all inputs + output + the two activation scratches, with a
    # generous margin; clamped so it is valid on v5e (16 MiB scoped default)
    # through v7x (64 MiB physical).
    est = sum(int(a.size) * a.dtype.itemsize for a in args)
    est += T * Bp * ndir * 4 * H * 4 + T * Bp * ndir * H * 4 + Bp * C * 4
    vmem_limit = int(min(max(4 * est, 32 * 1024 * 1024), 64 * 1024 * 1024))

    unroll = max(1, min(T, 8))                 # capped partial unroll

    out = pl.pallas_call(
        functools.partial(_fused_lstm_kernel, T, Bp, H, L, bidirectional,
                          unroll),
        out_shape=jax.ShapeDtypeStruct((Bp, C), jnp.float32),
        scratch_shapes=[
            pltpu.VMEM((T * Bp, ndir * 4 * H), jnp.float32),   # xproj
            pltpu.VMEM((T * Bp, ndir * H), jnp.float32),       # inter-layer h
        ],
        compiler_params=pltpu.CompilerParams(vmem_limit_bytes=vmem_limit),
    )(*args)
    return out[:B]


if __name__ == "__main__":
    # Small shapes consistent with the module's forward:
    #   x: (batch, n_channels=1, seq_len, input_size)
    batch, seq_len, input_size = 2, 8, 16
    hidden_size, num_layers, bidirectional, num_classes = 32, 2, True, 10

    key = jax.random.PRNGKey(0)
    key, kx = jax.random.split(key)
    x = jax.random.normal(kx, (batch, 1, seq_len, input_size), jnp.float32)
    params = init_params(key, input_size, hidden_size, num_layers,
                         bidirectional, num_classes)

    out = jax.block_until_ready(
        lstm_model_forward(x, params, bidirectional=bidirectional))
    assert out.shape == (batch, num_classes), out.shape
    assert bool(jnp.all(jnp.isfinite(out)))
    assert bool(jnp.all(out >= 0.0))           # nn.ReLU output
    print("KERNEL_OK")
</pallas_src>

<mosaic_0001>
module attributes {stable_mosaic.version = 11 : i64} {
  func.func @_fused_lstm_kernel(%arg0: memref<64x16xf32, #tpu.memory_space<vmem>>, %arg1: memref<16x256xbf16, #tpu.memory_space<vmem>>, %arg2: memref<1x256xf32, #tpu.memory_space<vmem>>, %arg3: memref<64x256xbf16, #tpu.memory_space<vmem>>, %arg4: memref<64x256xbf16, #tpu.memory_space<vmem>>, %arg5: memref<1x256xf32, #tpu.memory_space<vmem>>, %arg6: memref<64x256xbf16, #tpu.memory_space<vmem>>, %arg7: memref<64x10xbf16, #tpu.memory_space<vmem>>, %arg8: memref<1x10xf32, #tpu.memory_space<vmem>>, %arg9: memref<8x10xf32, #tpu.memory_space<vmem>>, %arg10: memref<64x256xf32, #tpu.memory_space<vmem>>, %arg11: memref<64x64xf32, #tpu.memory_space<vmem>>) attributes {dimension_semantics = [], scalar_prefetch = 0 : i64, scratch_operands = 2 : i64, tpu.core_type = #tpu.core_type<tc>} {
    %cst = arith.constant 0.000000e+00 : f32
    %0 = vector.broadcast %cst : f32 to vector<8x32xf32>
    %c0 = arith.constant 0 : index
    %c0_0 = arith.constant 0 : index
    %1 = vector.load %arg0[%c0, %c0_0] : memref<64x16xf32, #tpu.memory_space<vmem>>, vector<64x16xf32>
    %2 = arith.truncf %1 : vector<64x16xf32> to vector<64x16xbf16>
    %c0_1 = arith.constant 0 : index
    %c0_2 = arith.constant 0 : index
    %3 = vector.load %arg1[%c0_1, %c0_2] : memref<16x256xbf16, #tpu.memory_space<vmem>>, vector<16x256xbf16>
    %cst_3 = arith.constant dense<0.000000e+00> : vector<64x256xf32>
    %4 = tpu.matmul %2, %3, %cst_3 {dimension_numbers = #tpu.dot_dimension_numbers<[1], [0], [0], [1], [0, 0, 1, 1], [], []>} : vector<64x16xbf16>, vector<16x256xbf16>, vector<64x256xf32> -> vector<64x256xf32>
    %c0_4 = arith.constant 0 : index
    %c0_5 = arith.constant 0 : index
    %5 = vector.load %arg2[%c0_4, %c0_5] : memref<1x256xf32, #tpu.memory_space<vmem>>, vector<1x256xf32>
    %6 = vector.broadcast %5 : vector<1x256xf32> to vector<64x256xf32>
    %7 = arith.addf %4, %6 : vector<64x256xf32>
    %c0_6 = arith.constant 0 : index
    %c0_7 = arith.constant 0 : index
    %8 = vector.load %arg10[%c0_6, %c0_7] : memref<64x256xf32, #tpu.memory_space<vmem>>, vector<64x256xf32>
    tpu.vector_store %arg10[%c0_6, %c0_7], %7 {strides = array<i32>} : memref<64x256xf32, #tpu.memory_space<vmem>>, vector<64x256xf32>,
    %c0_8 = arith.constant 0 : index
    %c0_9 = arith.constant 0 : index
    %9 = vector.load %arg3[%c0_8, %c0_9] : memref<64x256xbf16, #tpu.memory_space<vmem>>, vector<64x256xbf16>
    %cst_10 = arith.constant 0.000000e+00 : f32
    %10 = vector.broadcast %cst_10 : f32 to vector<8x64xf32>
    %c0_i32 = arith.constant 0 : i32
    %c8_i32 = arith.constant 8 : i32
    %11 = arith.muli %c0_i32, %c8_i32 : i32
    %12 = tpu.assume_multiple %11, 8 : i32
    %c7_i32 = arith.constant 7 : i32
    %13 = arith.subi %c7_i32, %c0_i32 : i32
    %c8_i32_11 = arith.constant 8 : i32
    %14 = arith.muli %13, %c8_i32_11 : i32
    %15 = tpu.assume_multiple %14, 8 : i32
    %16 = arith.truncf %10 : vector<8x64xf32> to vector<8x64xbf16>
    %cst_12 = arith.constant dense<0.000000e+00> : vector<8x256xf32>
    %17 = tpu.matmul %16, %9, %cst_12 {dimension_numbers = #tpu.dot_dimension_numbers<[1], [0], [0], [1], [0, 0, 1, 1], [], []>} : vector<8x64xbf16>, vector<64x256xbf16>, vector<8x256xf32> -> vector<8x256xf32>
    %18 = arith.index_cast %12 : i32 to index
    %c0_13 = arith.constant 0 : index
    %19 = vector.load %arg10[%18, %c0_13] : memref<64x256xf32, #tpu.memory_space<vmem>>, vector<8x128xf32>
    %20 = vector.extract_strided_slice %17 {offsets = [0, 0], sizes = [8, 128], strides = [1, 1]} : vector<8x256xf32> to vector<8x128xf32>
    %21 = arith.addf %19, %20 : vector<8x128xf32>
    %22 = arith.index_cast %15 : i32 to index
    %c128 = arith.constant 128 : index
    %23 = vector.load %arg10[%22, %c128] : memref<64x256xf32, #tpu.memory_space<vmem>>, vector<8x128xf32>
    %24 = vector.extract_strided_slice %17 {offsets = [0, 128], sizes = [8, 128], strides = [1, 1]} : vector<8x256xf32> to vector<8x128xf32>
    %25 = arith.addf %23, %24 : vector<8x128xf32>
    %26 = vector.extract_strided_slice %21 {offsets = [0, 0], sizes = [8, 32], strides = [1, 1]} : vector<8x128xf32> to vector<8x32xf32>
    %27 = arith.negf %26 : vector<8x32xf32>
    %28 = math.exp %27 : vector<8x32xf32>
    %cst_14 = arith.constant 1.000000e+00 : f32
    %29 = vector.broadcast %cst_14 : f32 to vector<8x32xf32>
    %30 = arith.addf %29, %28 : vector<8x32xf32>
    %31 = arith.divf %29, %30 : vector<8x32xf32>
    %32 = vector.extract_strided_slice %21 {offsets = [0, 32], sizes = [8, 32], strides = [1, 1]} : vector<8x128xf32> to vector<8x32xf32>
    %33 = arith.negf %32 : vector<8x32xf32>
    %34 = math.exp %33 : vector<8x32xf32>
    %cst_15 = arith.constant 1.000000e+00 : f32
    %35 = vector.broadcast %cst_15 : f32 to vector<8x32xf32>
    %36 = arith.addf %35, %34 : vector<8x32xf32>
    %37 = arith.divf %35, %36 : vector<8x32xf32>
    %38 = vector.extract_strided_slice %21 {offsets = [0, 64], sizes = [8, 32], strides = [1, 1]} : vector<8x128xf32> to vector<8x32xf32>
    %39 = math.tanh %38 : vector<8x32xf32>
    %40 = vector.extract_strided_slice %21 {offsets = [0, 96], sizes = [8, 32], strides = [1, 1]} : vector<8x128xf32> to vector<8x32xf32>
    %41 = arith.negf %40 : vector<8x32xf32>
    %42 = math.exp %41 : vector<8x32xf32>
    %cst_16 = arith.constant 1.000000e+00 : f32
    %43 = vector.broadcast %cst_16 : f32 to vector<8x32xf32>
    %44 = arith.addf %43, %42 : vector<8x32xf32>
    %45 = arith.divf %43, %44 : vector<8x32xf32>
    %46 = arith.mulf %37, %0 : vector<8x32xf32>
    %47 = arith.mulf %31, %39 : vector<8x32xf32>
    %48 = arith.addf %46, %47 : vector<8x32xf32>
    %49 = math.tanh %48 : vector<8x32xf32>
    %50 = arith.mulf %45, %49 : vector<8x32xf32>
    %51 = vector.extract_strided_slice %25 {offsets = [0, 0], sizes = [8, 32], strides = [1, 1]} : vector<8x128xf32> to vector<8x32xf32>
    %52 = arith.negf %51 : vector<8x32xf32>
    %53 = math.exp %52 : vector<8x32xf32>
    %cst_17 = arith.constant 1.000000e+00 : f32
    %54 = vector.broadcast %cst_17 : f32 to vector<8x32xf32>
    %55 = arith.addf %54, %53 : vector<8x32xf32>
    %56 = arith.divf %54, %55 : vector<8x32xf32>
    %57 = vector.extract_strided_slice %25 {offsets = [0, 32], sizes = [8, 32], strides = [1, 1]} : vector<8x128xf32> to vector<8x32xf32>
    %58 = arith.negf %57 : vector<8x32xf32>
    %59 = math.exp %58 : vector<8x32xf32>
    %cst_18 = arith.constant 1.000000e+00 : f32
    %60 = vector.broadcast %cst_18 : f32 to vector<8x32xf32>
    %61 = arith.addf %60, %59 : vector<8x32xf32>
    %62 = arith.divf %60, %61 : vector<8x32xf32>
    %63 = vector.extract_strided_slice %25 {offsets = [0, 64], sizes = [8, 32], strides = [1, 1]} : vector<8x128xf32> to vector<8x32xf32>
    %64 = math.tanh %63 : vector<8x32xf32>
    %65 = vector.extract_strided_slice %25 {offsets = [0, 96], sizes = [8, 32], strides = [1, 1]} : vector<8x128xf32> to vector<8x32xf32>
    %66 = arith.negf %65 : vector<8x32xf32>
    %67 = math.exp %66 : vector<8x32xf32>
    %cst_19 = arith.constant 1.000000e+00 : f32
    %68 = vector.broadcast %cst_19 : f32 to vector<8x32xf32>
    %69 = arith.addf %68, %67 : vector<8x32xf32>
    %70 = arith.divf %68, %69 : vector<8x32xf32>
    %71 = arith.mulf %62, %0 : vector<8x32xf32>
    %72 = arith.mulf %56, %64 : vector<8x32xf32>
    %73 = arith.addf %71, %72 : vector<8x32xf32>
    %74 = math.tanh %73 : vector<8x32xf32>
    %75 = arith.mulf %70, %74 : vector<8x32xf32>
    %76 = arith.index_cast %12 : i32 to index
    %c0_20 = arith.constant 0 : index
    %77 = vector.load %arg11[%76, %c0_20] : memref<64x64xf32, #tpu.memory_space<vmem>>, vector<8x32xf32>
    tpu.vector_store %arg11[%76, %c0_20], %50 {strides = array<i32>} : memref<64x64xf32, #tpu.memory_space<vmem>>, vector<8x32xf32>,
    %78 = arith.index_cast %15 : i32 to index
    %c32 = arith.constant 32 : index
    %79 = vector.load %arg11[%78, %c32] : memref<64x64xf32, #tpu.memory_space<vmem>>, vector<8x32xf32>
    tpu.vector_store %arg11[%78, %c32], %75 {strides = array<i32>} : memref<64x64xf32, #tpu.memory_space<vmem>>, vector<8x32xf32>,
    %80 = tpu.concatenate %50, %75 in 1 : vector<8x32xf32>, vector<8x32xf32> -> vector<8x64xf32>
    %c1_i32 = arith.constant 1 : i32
    %c8_i32_21 = arith.constant 8 : i32
    %81 = arith.muli %c1_i32, %c8_i32_21 : i32
    %82 = tpu.assume_multiple %81, 8 : i32
    %c7_i32_22 = arith.constant 7 : i32
    %83 = arith.subi %c7_i32_22, %c1_i32 : i32
    %c8_i32_23 = arith.constant 8 : i32
    %84 = arith.muli %83, %c8_i32_23 : i32
    %85 = tpu.assume_multiple %84, 8 : i32
    %86 = arith.truncf %80 : vector<8x64xf32> to vector<8x64xbf16>
    %cst_24 = arith.constant dense<0.000000e+00> : vector<8x256xf32>
    %87 = tpu.matmul %86, %9, %cst_24 {dimension_numbers = #tpu.dot_dimension_numbers<[1], [0], [0], [1], [0, 0, 1, 1], [], []>} : vector<8x64xbf16>, vector<64x256xbf16>, vector<8x256xf32> -> vector<8x256xf32>
    %88 = arith.index_cast %82 : i32 to index
    %c0_25 = arith.constant 0 : index
    %89 = vector.load %arg10[%88, %c0_25] : memref<64x256xf32, #tpu.memory_space<vmem>>, vector<8x128xf32>
    %90 = vector.extract_strided_slice %87 {offsets = [0, 0], sizes = [8, 128], strides = [1, 1]} : vector<8x256xf32> to vector<8x128xf32>
    %91 = arith.addf %89, %90 : vector<8x128xf32>
    %92 = arith.index_cast %85 : i32 to index
    %c128_26 = arith.constant 128 : index
    %93 = vector.load %arg10[%92, %c128_26] : memref<64x256xf32, #tpu.memory_space<vmem>>, vector<8x128xf32>
    %94 = vector.extract_strided_slice %87 {offsets = [0, 128], sizes = [8, 128], strides = [1, 1]} : vector<8x256xf32> to vector<8x128xf32>
    %95 = arith.addf %93, %94 : vector<8x128xf32>
    %96 = vector.extract_strided_slice %91 {offsets = [0, 0], sizes = [8, 32], strides = [1, 1]} : vector<8x128xf32> to vector<8x32xf32>
    %97 = arith.negf %96 : vector<8x32xf32>
    %98 = math.exp %97 : vector<8x32xf32>
    %cst_27 = arith.constant 1.000000e+00 : f32
    %99 = vector.broadcast %cst_27 : f32 to vector<8x32xf32>
    %100 = arith.addf %99, %98 : vector<8x32xf32>
    %101 = arith.divf %99, %100 : vector<8x32xf32>
    %102 = vector.extract_strided_slice %91 {offsets = [0, 32], sizes = [8, 32], strides = [1, 1]} : vector<8x128xf32> to vector<8x32xf32>
    %103 = arith.negf %102 : vector<8x32xf32>
    %104 = math.exp %103 : vector<8x32xf32>
    %cst_28 = arith.constant 1.000000e+00 : f32
    %105 = vector.broadcast %cst_28 : f32 to vector<8x32xf32>
    %106 = arith.addf %105, %104 : vector<8x32xf32>
    %107 = arith.divf %105, %106 : vector<8x32xf32>
    %108 = vector.extract_strided_slice %91 {offsets = [0, 64], sizes = [8, 32], strides = [1, 1]} : vector<8x128xf32> to vector<8x32xf32>
    %109 = math.tanh %108 : vector<8x32xf32>
    %110 = vector.extract_strided_slice %91 {offsets = [0, 96], sizes = [8, 32], strides = [1, 1]} : vector<8x128xf32> to vector<8x32xf32>
    %111 = arith.negf %110 : vector<8x32xf32>
    %112 = math.exp %111 : vector<8x32xf32>
    %cst_29 = arith.constant 1.000000e+00 : f32
    %113 = vector.broadcast %cst_29 : f32 to vector<8x32xf32>
    %114 = arith.addf %113, %112 : vector<8x32xf32>
    %115 = arith.divf %113, %114 : vector<8x32xf32>
    %116 = arith.mulf %107, %48 : vector<8x32xf32>
    %117 = arith.mulf %101, %109 : vector<8x32xf32>
    %118 = arith.addf %116, %117 : vector<8x32xf32>
    %119 = math.tanh %118 : vector<8x32xf32>
    %120 = arith.mulf %115, %119 : vector<8x32xf32>
    %121 = vector.extract_strided_slice %95 {offsets = [0, 0], sizes = [8, 32], strides = [1, 1]} : vector<8x128xf32> to vector<8x32xf32>
    %122 = arith.negf %121 : vector<8x32xf32>
    %123 = math.exp %122 : vector<8x32xf32>
    %cst_30 = arith.constant 1.000000e+00 : f32
    %124 = vector.broadcast %cst_30 : f32 to vector<8x32xf32>
    %125 = arith.addf %124, %123 : vector<8x32xf32>
    %126 = arith.divf %124, %125 : vector<8x32xf32>
    %127 = vector.extract_strided_slice %95 {offsets = [0, 32], sizes = [8, 32], strides = [1, 1]} : vector<8x128xf32> to vector<8x32xf32>
    %128 = arith.negf %127 : vector<8x32xf32>
    %129 = math.exp %128 : vector<8x32xf32>
    %cst_31 = arith.constant 1.000000e+00 : f32
    %130 = vector.broadcast %cst_31 : f32 to vector<8x32xf32>
    %131 = arith.addf %130, %129 : vector<8x32xf32>
    %132 = arith.divf %130, %131 : vector<8x32xf32>
    %133 = vector.extract_strided_slice %95 {offsets = [0, 64], sizes = [8, 32], strides = [1, 1]} : vector<8x128xf32> to vector<8x32xf32>
    %134 = math.tanh %133 : vector<8x32xf32>
    %135 = vector.extract_strided_slice %95 {offsets = [0, 96], sizes = [8, 32], strides = [1, 1]} : vector<8x128xf32> to vector<8x32xf32>
    %136 = arith.negf %135 : vector<8x32xf32>
    %137 = math.exp %136 : vector<8x32xf32>
    %cst_32 = arith.constant 1.000000e+00 : f32
    %138 = vector.broadcast %cst_32 : f32 to vector<8x32xf32>
    %139 = arith.addf %138, %137 : vector<8x32xf32>
    %140 = arith.divf %138, %139 : vector<8x32xf32>
    %141 = arith.mulf %132, %73 : vector<8x32xf32>
    %142 = arith.mulf %126, %134 : vector<8x32xf32>
    %143 = arith.addf %141, %142 : vector<8x32xf32>
    %144 = math.tanh %143 : vector<8x32xf32>
    %145 = arith.mulf %140, %144 : vector<8x32xf32>
    %146 = arith.index_cast %82 : i32 to index
    %c0_33 = arith.constant 0 : index
    %147 = vector.load %arg11[%146, %c0_33] : memref<64x64xf32, #tpu.memory_space<vmem>>, vector<8x32xf32>
    tpu.vector_store %arg11[%146, %c0_33], %120 {strides = array<i32>} : memref<64x64xf32, #tpu.memory_space<vmem>>, vector<8x32xf32>,
    %148 = arith.index_cast %85 : i32 to index
    %c32_34 = arith.constant 32 : index
    %149 = vector.load %arg11[%148, %c32_34] : memref<64x64xf32, #tpu.memory_space<vmem>>, vector<8x32xf32>
    tpu.vector_store %arg11[%148, %c32_34], %145 {strides = array<i32>} : memref<64x64xf32, #tpu.memory_space<vmem>>, vector<8x32xf32>,
    %150 = tpu.concatenate %120, %145 in 1 : vector<8x32xf32>, vector<8x32xf32> -> vector<8x64xf32>
    %c2_i32 = arith.constant 2 : i32
    %c8_i32_35 = arith.constant 8 : i32
    %151 = arith.muli %c2_i32, %c8_i32_35 : i32
    %152 = tpu.assume_multiple %151, 8 : i32
    %c7_i32_36 = arith.constant 7 : i32
    %153 = arith.subi %c7_i32_36, %c2_i32 : i32
    %c8_i32_37 = arith.constant 8 : i32
    %154 = arith.muli %153, %c8_i32_37 : i32
    %155 = tpu.assume_multiple %154, 8 : i32
    %156 = arith.truncf %150 : vector<8x64xf32> to vector<8x64xbf16>
    %cst_38 = arith.constant dense<0.000000e+00> : vector<8x256xf32>
    %157 = tpu.matmul %156, %9, %cst_38 {dimension_numbers = #tpu.dot_dimension_numbers<[1], [0], [0], [1], [0, 0, 1, 1], [], []>} : vector<8x64xbf16>, vector<64x256xbf16>, vector<8x256xf32> -> vector<8x256xf32>
    %158 = arith.index_cast %152 : i32 to index
    %c0_39 = arith.constant 0 : index
    %159 = vector.load %arg10[%158, %c0_39] : memref<64x256xf32, #tpu.memory_space<vmem>>, vector<8x128xf32>
    %160 = vector.extract_strided_slice %157 {offsets = [0, 0], sizes = [8, 128], strides = [1, 1]} : vector<8x256xf32> to vector<8x128xf32>
    %161 = arith.addf %159, %160 : vector<8x128xf32>
    %162 = arith.index_cast %155 : i32 to index
    %c128_40 = arith.constant 128 : index
    %163 = vector.load %arg10[%162, %c128_40] : memref<64x256xf32, #tpu.memory_space<vmem>>, vector<8x128xf32>
    %164 = vector.extract_strided_slice %157 {offsets = [0, 128], sizes = [8, 128], strides = [1, 1]} : vector<8x256xf32> to vector<8x128xf32>
    %165 = arith.addf %163, %164 : vector<8x128xf32>
    %166 = vector.extract_strided_slice %161 {offsets = [0, 0], sizes = [8, 32], strides = [1, 1]} : vector<8x128xf32> to vector<8x32xf32>
    %167 = arith.negf %166 : vector<8x32xf32>
    %168 = math.exp %167 : vector<8x32xf32>
    %cst_41 = arith.constant 1.000000e+00 : f32
    %169 = vector.broadcast %cst_41 : f32 to vector<8x32xf32>
    %170 = arith.addf %169, %168 : vector<8x32xf32>
    %171 = arith.divf %169, %170 : vector<8x32xf32>
    %172 = vector.extract_strided_slice %161 {offsets = [0, 32], sizes = [8, 32], strides = [1, 1]} : vector<8x128xf32> to vector<8x32xf32>
    %173 = arith.negf %172 : vector<8x32xf32>
    %174 = math.exp %173 : vector<8x32xf32>
    %cst_42 = arith.constant 1.000000e+00 : f32
    %175 = vector.broadcast %cst_42 : f32 to vector<8x32xf32>
    %176 = arith.addf %175, %174 : vector<8x32xf32>
    %177 = arith.divf %175, %176 : vector<8x32xf32>
    %178 = vector.extract_strided_slice %161 {offsets = [0, 64], sizes = [8, 32], strides = [1, 1]} : vector<8x128xf32> to vector<8x32xf32>
    %179 = math.tanh %178 : vector<8x32xf32>
    %180 = vector.extract_strided_slice %161 {offsets = [0, 96], sizes = [8, 32], strides = [1, 1]} : vector<8x128xf32> to vector<8x32xf32>
    %181 = arith.negf %180 : vector<8x32xf32>
    %182 = math.exp %181 : vector<8x32xf32>
    %cst_43 = arith.constant 1.000000e+00 : f32
    %183 = vector.broadcast %cst_43 : f32 to vector<8x32xf32>
    %184 = arith.addf %183, %182 : vector<8x32xf32>
    %185 = arith.divf %183, %184 : vector<8x32xf32>
    %186 = arith.mulf %177, %118 : vector<8x32xf32>
    %187 = arith.mulf %171, %179 : vector<8x32xf32>
    %188 = arith.addf %186, %187 : vector<8x32xf32>
    %189 = math.tanh %188 : vector<8x32xf32>
    %190 = arith.mulf %185, %189 : vector<8x32xf32>
    %191 = vector.extract_strided_slice %165 {offsets = [0, 0], sizes = [8, 32], strides = [1, 1]} : vector<8x128xf32> to vector<8x32xf32>
    %192 = arith.negf %191 : vector<8x32xf32>
    %193 = math.exp %192 : vector<8x32xf32>
    %cst_44 = arith.constant 1.000000e+00 : f32
    %194 = vector.broadcast %cst_44 : f32 to vector<8x32xf32>
    %195 = arith.addf %194, %193 : vector<8x32xf32>
    %196 = arith.divf %194, %195 : vector<8x32xf32>
    %197 = vector.extract_strided_slice %165 {offsets = [0, 32], sizes = [8, 32], strides = [1, 1]} : vector<8x128xf32> to vector<8x32xf32>
    %198 = arith.negf %197 : vector<8x32xf32>
    %199 = math.exp %198 : vector<8x32xf32>
    %cst_45 = arith.constant 1.000000e+00 : f32
    %200 = vector.broadcast %cst_45 : f32 to vector<8x32xf32>
    %201 = arith.addf %200, %199 : vector<8x32xf32>
    %202 = arith.divf %200, %201 : vector<8x32xf32>
    %203 = vector.extract_strided_slice %165 {offsets = [0, 64], sizes = [8, 32], strides = [1, 1]} : vector<8x128xf32> to vector<8x32xf32>
    %204 = math.tanh %203 : vector<8x32xf32>
    %205 = vector.extract_strided_slice %165 {offsets = [0, 96], sizes = [8, 32], strides = [1, 1]} : vector<8x128xf32> to vector<8x32xf32>
    %206 = arith.negf %205 : vector<8x32xf32>
    %207 = math.exp %206 : vector<8x32xf32>
    %cst_46 = arith.constant 1.000000e+00 : f32
    %208 = vector.broadcast %cst_46 : f32 to vector<8x32xf32>
    %209 = arith.addf %208, %207 : vector<8x32xf32>
    %210 = arith.divf %208, %209 : vector<8x32xf32>
    %211 = arith.mulf %202, %143 : vector<8x32xf32>
    %212 = arith.mulf %196, %204 : vector<8x32xf32>
    %213 = arith.addf %211, %212 : vector<8x32xf32>
    %214 = math.tanh %213 : vector<8x32xf32>
    %215 = arith.mulf %210, %214 : vector<8x32xf32>
    %216 = arith.index_cast %152 : i32 to index
    %c0_47 = arith.constant 0 : index
    %217 = vector.load %arg11[%216, %c0_47] : memref<64x64xf32, #tpu.memory_space<vmem>>, vector<8x32xf32>
    tpu.vector_store %arg11[%216, %c0_47], %190 {strides = array<i32>} : memref<64x64xf32, #tpu.memory_space<vmem>>, vector<8x32xf32>,
    %218 = arith.index_cast %155 : i32 to index
    %c32_48 = arith.constant 32 : index
    %219 = vector.load %arg11[%218, %c32_48] : memref<64x64xf32, #tpu.memory_space<vmem>>, vector<8x32xf32>
    tpu.vector_store %arg11[%218, %c32_48], %215 {strides = array<i32>} : memref<64x64xf32, #tpu.memory_space<vmem>>, vector<8x32xf32>,
    %220 = tpu.concatenate %190, %215 in 1 : vector<8x32xf32>, vector<8x32xf32> -> vector<8x64xf32>
    %c3_i32 = arith.constant 3 : i32
    %c8_i32_49 = arith.constant 8 : i32
    %221 = arith.muli %c3_i32, %c8_i32_49 : i32
    %222 = tpu.assume_multiple %221, 8 : i32
    %c7_i32_50 = arith.constant 7 : i32
    %223 = arith.subi %c7_i32_50, %c3_i32 : i32
    %c8_i32_51 = arith.constant 8 : i32
    %224 = arith.muli %223, %c8_i32_51 : i32
    %225 = tpu.assume_multiple %224, 8 : i32
    %226 = arith.truncf %220 : vector<8x64xf32> to vector<8x64xbf16>
    %cst_52 = arith.constant dense<0.000000e+00> : vector<8x256xf32>
    %227 = tpu.matmul %226, %9, %cst_52 {dimension_numbers = #tpu.dot_dimension_numbers<[1], [0], [0], [1], [0, 0, 1, 1], [], []>} : vector<8x64xbf16>, vector<64x256xbf16>, vector<8x256xf32> -> vector<8x256xf32>
    %228 = arith.index_cast %222 : i32 to index
    %c0_53 = arith.constant 0 : index
    %229 = vector.load %arg10[%228, %c0_53] : memref<64x256xf32, #tpu.memory_space<vmem>>, vector<8x128xf32>
    %230 = vector.extract_strided_slice %227 {offsets = [0, 0], sizes = [8, 128], strides = [1, 1]} : vector<8x256xf32> to vector<8x128xf32>
    %231 = arith.addf %229, %230 : vector<8x128xf32>
    %232 = arith.index_cast %225 : i32 to index
    %c128_54 = arith.constant 128 : index
    %233 = vector.load %arg10[%232, %c128_54] : memref<64x256xf32, #tpu.memory_space<vmem>>, vector<8x128xf32>
    %234 = vector.extract_strided_slice %227 {offsets = [0, 128], sizes = [8, 128], strides = [1, 1]} : vector<8x256xf32> to vector<8x128xf32>
    %235 = arith.addf %233, %234 : vector<8x128xf32>
    %236 = vector.extract_strided_slice %231 {offsets = [0, 0], sizes = [8, 32], strides = [1, 1]} : vector<8x128xf32> to vector<8x32xf32>
    %237 = arith.negf %236 : vector<8x32xf32>
    %238 = math.exp %237 : vector<8x32xf32>
    %cst_55 = arith.constant 1.000000e+00 : f32
    %239 = vector.broadcast %cst_55 : f32 to vector<8x32xf32>
    %240 = arith.addf %239, %238 : vector<8x32xf32>
    %241 = arith.divf %239, %240 : vector<8x32xf32>
    %242 = vector.extract_strided_slice %231 {offsets = [0, 32], sizes = [8, 32], strides = [1, 1]} : vector<8x128xf32> to vector<8x32xf32>
    %243 = arith.negf %242 : vector<8x32xf32>
    %244 = math.exp %243 : vector<8x32xf32>
    %cst_56 = arith.constant 1.000000e+00 : f32
    %245 = vector.broadcast %cst_56 : f32 to vector<8x32xf32>
    %246 = arith.addf %245, %244 : vector<8x32xf32>
    %247 = arith.divf %245, %246 : vector<8x32xf32>
    %248 = vector.extract_strided_slice %231 {offsets = [0, 64], sizes = [8, 32], strides = [1, 1]} : vector<8x128xf32> to vector<8x32xf32>
    %249 = math.tanh %248 : vector<8x32xf32>
    %250 = vector.extract_strided_slice %231 {offsets = [0, 96], sizes = [8, 32], strides = [1, 1]} : vector<8x128xf32> to vector<8x32xf32>
    %251 = arith.negf %250 : vector<8x32xf32>
    %252 = math.exp %251 : vector<8x32xf32>
    %cst_57 = arith.constant 1.000000e+00 : f32
    %253 = vector.broadcast %cst_57 : f32 to vector<8x32xf32>
    %254 = arith.addf %253, %252 : vector<8x32xf32>
    %255 = arith.divf %253, %254 : vector<8x32xf32>
    %256 = arith.mulf %247, %188 : vector<8x32xf32>
    %257 = arith.mulf %241, %249 : vector<8x32xf32>
    %258 = arith.addf %256, %257 : vector<8x32xf32>
    %259 = math.tanh %258 : vector<8x32xf32>
    %260 = arith.mulf %255, %259 : vector<8x32xf32>
    %261 = vector.extract_strided_slice %235 {offsets = [0, 0], sizes = [8, 32], strides = [1, 1]} : vector<8x128xf32> to vector<8x32xf32>
    %262 = arith.negf %261 : vector<8x32xf32>
    %263 = math.exp %262 : vector<8x32xf32>
    %cst_58 = arith.constant 1.000000e+00 : f32
    %264 = vector.broadcast %cst_58 : f32 to vector<8x32xf32>
    %265 = arith.addf %264, %263 : vector<8x32xf32>
    %266 = arith.divf %264, %265 : vector<8x32xf32>
    %267 = vector.extract_strided_slice %235 {offsets = [0, 32], sizes = [8, 32], strides = [1, 1]} : vector<8x128xf32> to vector<8x32xf32>
    %268 = arith.negf %267 : vector<8x32xf32>
    %269 = math.exp %268 : vector<8x32xf32>
    %cst_59 = arith.constant 1.000000e+00 : f32
    %270 = vector.broadcast %cst_59 : f32 to vector<8x32xf32>
    %271 = arith.addf %270, %269 : vector<8x32xf32>
    %272 = arith.divf %270, %271 : vector<8x32xf32>
    %273 = vector.extract_strided_slice %235 {offsets = [0, 64], sizes = [8, 32], strides = [1, 1]} : vector<8x128xf32> to vector<8x32xf32>
    %274 = math.tanh %273 : vector<8x32xf32>
    %275 = vector.extract_strided_slice %235 {offsets = [0, 96], sizes = [8, 32], strides = [1, 1]} : vector<8x128xf32> to vector<8x32xf32>
    %276 = arith.negf %275 : vector<8x32xf32>
    %277 = math.exp %276 : vector<8x32xf32>
    %cst_60 = arith.constant 1.000000e+00 : f32
    %278 = vector.broadcast %cst_60 : f32 to vector<8x32xf32>
    %279 = arith.addf %278, %277 : vector<8x32xf32>
    %280 = arith.divf %278, %279 : vector<8x32xf32>
    %281 = arith.mulf %272, %213 : vector<8x32xf32>
    %282 = arith.mulf %266, %274 : vector<8x32xf32>
    %283 = arith.addf %281, %282 : vector<8x32xf32>
    %284 = math.tanh %283 : vector<8x32xf32>
    %285 = arith.mulf %280, %284 : vector<8x32xf32>
    %286 = arith.index_cast %222 : i32 to index
    %c0_61 = arith.constant 0 : index
    %287 = vector.load %arg11[%286, %c0_61] : memref<64x64xf32, #tpu.memory_space<vmem>>, vector<8x32xf32>
    tpu.vector_store %arg11[%286, %c0_61], %260 {strides = array<i32>} : memref<64x64xf32, #tpu.memory_space<vmem>>, vector<8x32xf32>,
    %288 = arith.index_cast %225 : i32 to index
    %c32_62 = arith.constant 32 : index
    %289 = vector.load %arg11[%288, %c32_62] : memref<64x64xf32, #tpu.memory_space<vmem>>, vector<8x32xf32>
    tpu.vector_store %arg11[%288, %c32_62], %285 {strides = array<i32>} : memref<64x64xf32, #tpu.memory_space<vmem>>, vector<8x32xf32>,
    %290 = tpu.concatenate %260, %285 in 1 : vector<8x32xf32>, vector<8x32xf32> -> vector<8x64xf32>
    %c4_i32 = arith.constant 4 : i32
    %c8_i32_63 = arith.constant 8 : i32
    %291 = arith.muli %c4_i32, %c8_i32_63 : i32
    %292 = tpu.assume_multiple %291, 8 : i32
    %c7_i32_64 = arith.constant 7 : i32
    %293 = arith.subi %c7_i32_64, %c4_i32 : i32
    %c8_i32_65 = arith.constant 8 : i32
    %294 = arith.muli %293, %c8_i32_65 : i32
    %295 = tpu.assume_multiple %294, 8 : i32
    %296 = arith.truncf %290 : vector<8x64xf32> to vector<8x64xbf16>
    %cst_66 = arith.constant dense<0.000000e+00> : vector<8x256xf32>
    %297 = tpu.matmul %296, %9, %cst_66 {dimension_numbers = #tpu.dot_dimension_numbers<[1], [0], [0], [1], [0, 0, 1, 1], [], []>} : vector<8x64xbf16>, vector<64x256xbf16>, vector<8x256xf32> -> vector<8x256xf32>
    %298 = arith.index_cast %292 : i32 to index
    %c0_67 = arith.constant 0 : index
    %299 = vector.load %arg10[%298, %c0_67] : memref<64x256xf32, #tpu.memory_space<vmem>>, vector<8x128xf32>
    %300 = vector.extract_strided_slice %297 {offsets = [0, 0], sizes = [8, 128], strides = [1, 1]} : vector<8x256xf32> to vector<8x128xf32>
    %301 = arith.addf %299, %300 : vector<8x128xf32>
    %302 = arith.index_cast %295 : i32 to index
    %c128_68 = arith.constant 128 : index
    %303 = vector.load %arg10[%302, %c128_68] : memref<64x256xf32, #tpu.memory_space<vmem>>, vector<8x128xf32>
    %304 = vector.extract_strided_slice %297 {offsets = [0, 128], sizes = [8, 128], strides = [1, 1]} : vector<8x256xf32> to vector<8x128xf32>
    %305 = arith.addf %303, %304 : vector<8x128xf32>
    %306 = vector.extract_strided_slice %301 {offsets = [0, 0], sizes = [8, 32], strides = [1, 1]} : vector<8x128xf32> to vector<8x32xf32>
    %307 = arith.negf %306 : vector<8x32xf32>
    %308 = math.exp %307 : vector<8x32xf32>
    %cst_69 = arith.constant 1.000000e+00 : f32
    %309 = vector.broadcast %cst_69 : f32 to vector<8x32xf32>
    %310 = arith.addf %309, %308 : vector<8x32xf32>
    %311 = arith.divf %309, %310 : vector<8x32xf32>
    %312 = vector.extract_strided_slice %301 {offsets = [0, 32], sizes = [8, 32], strides = [1, 1]} : vector<8x128xf32> to vector<8x32xf32>
    %313 = arith.negf %312 : vector<8x32xf32>
    %314 = math.exp %313 : vector<8x32xf32>
    %cst_70 = arith.constant 1.000000e+00 : f32
    %315 = vector.broadcast %cst_70 : f32 to vector<8x32xf32>
    %316 = arith.addf %315, %314 : vector<8x32xf32>
    %317 = arith.divf %315, %316 : vector<8x32xf32>
    %318 = vector.extract_strided_slice %301 {offsets = [0, 64], sizes = [8, 32], strides = [1, 1]} : vector<8x128xf32> to vector<8x32xf32>
    %319 = math.tanh %318 : vector<8x32xf32>
    %320 = vector.extract_strided_slice %301 {offsets = [0, 96], sizes = [8, 32], strides = [1, 1]} : vector<8x128xf32> to vector<8x32xf32>
    %321 = arith.negf %320 : vector<8x32xf32>
    %322 = math.exp %321 : vector<8x32xf32>
    %cst_71 = arith.constant 1.000000e+00 : f32
    %323 = vector.broadcast %cst_71 : f32 to vector<8x32xf32>
    %324 = arith.addf %323, %322 : vector<8x32xf32>
    %325 = arith.divf %323, %324 : vector<8x32xf32>
    %326 = arith.mulf %317, %258 : vector<8x32xf32>
    %327 = arith.mulf %311, %319 : vector<8x32xf32>
    %328 = arith.addf %326, %327 : vector<8x32xf32>
    %329 = math.tanh %328 : vector<8x32xf32>
    %330 = arith.mulf %325, %329 : vector<8x32xf32>
    %331 = vector.extract_strided_slice %305 {offsets = [0, 0], sizes = [8, 32], strides = [1, 1]} : vector<8x128xf32> to vector<8x32xf32>
    %332 = arith.negf %331 : vector<8x32xf32>
    %333 = math.exp %332 : vector<8x32xf32>
    %cst_72 = arith.constant 1.000000e+00 : f32
    %334 = vector.broadcast %cst_72 : f32 to vector<8x32xf32>
    %335 = arith.addf %334, %333 : vector<8x32xf32>
    %336 = arith.divf %334, %335 : vector<8x32xf32>
    %337 = vector.extract_strided_slice %305 {offsets = [0, 32], sizes = [8, 32], strides = [1, 1]} : vector<8x128xf32> to vector<8x32xf32>
    %338 = arith.negf %337 : vector<8x32xf32>
    %339 = math.exp %338 : vector<8x32xf32>
    %cst_73 = arith.constant 1.000000e+00 : f32
    %340 = vector.broadcast %cst_73 : f32 to vector<8x32xf32>
    %341 = arith.addf %340, %339 : vector<8x32xf32>
    %342 = arith.divf %340, %341 : vector<8x32xf32>
    %343 = vector.extract_strided_slice %305 {offsets = [0, 64], sizes = [8, 32], strides = [1, 1]} : vector<8x128xf32> to vector<8x32xf32>
    %344 = math.tanh %343 : vector<8x32xf32>
    %345 = vector.extract_strided_slice %305 {offsets = [0, 96], sizes = [8, 32], strides = [1, 1]} : vector<8x128xf32> to vector<8x32xf32>
    %346 = arith.negf %345 : vector<8x32xf32>
    %347 = math.exp %346 : vector<8x32xf32>
    %cst_74 = arith.constant 1.000000e+00 : f32
    %348 = vector.broadcast %cst_74 : f32 to vector<8x32xf32>
    %349 = arith.addf %348, %347 : vector<8x32xf32>
    %350 = arith.divf %348, %349 : vector<8x32xf32>
    %351 = arith.mulf %342, %283 : vector<8x32xf32>
    %352 = arith.mulf %336, %344 : vector<8x32xf32>
    %353 = arith.addf %351, %352 : vector<8x32xf32>
    %354 = math.tanh %353 : vector<8x32xf32>
    %355 = arith.mulf %350, %354 : vector<8x32xf32>
    %356 = arith.index_cast %292 : i32 to index
    %c0_75 = arith.constant 0 : index
    %357 = vector.load %arg11[%356, %c0_75] : memref<64x64xf32, #tpu.memory_space<vmem>>, vector<8x32xf32>
    tpu.vector_store %arg11[%356, %c0_75], %330 {strides = array<i32>} : memref<64x64xf32, #tpu.memory_space<vmem>>, vector<8x32xf32>,
    %358 = arith.index_cast %295 : i32 to index
    %c32_76 = arith.constant 32 : index
    %359 = vector.load %arg11[%358, %c32_76] : memref<64x64xf32, #tpu.memory_space<vmem>>, vector<8x32xf32>
    tpu.vector_store %arg11[%358, %c32_76], %355 {strides = array<i32>} : memref<64x64xf32, #tpu.memory_space<vmem>>, vector<8x32xf32>,
    %360 = tpu.concatenate %330, %355 in 1 : vector<8x32xf32>, vector<8x32xf32> -> vector<8x64xf32>
    %c5_i32 = arith.constant 5 : i32
    %c8_i32_77 = arith.constant 8 : i32
    %361 = arith.muli %c5_i32, %c8_i32_77 : i32
    %362 = tpu.assume_multiple %361, 8 : i32
    %c7_i32_78 = arith.constant 7 : i32
    %363 = arith.subi %c7_i32_78, %c5_i32 : i32
    %c8_i32_79 = arith.constant 8 : i32
    %364 = arith.muli %363, %c8_i32_79 : i32
    %365 = tpu.assume_multiple %364, 8 : i32
    %366 = arith.truncf %360 : vector<8x64xf32> to vector<8x64xbf16>
    %cst_80 = arith.constant dense<0.000000e+00> : vector<8x256xf32>
    %367 = tpu.matmul %366, %9, %cst_80 {dimension_numbers = #tpu.dot_dimension_numbers<[1], [0], [0], [1], [0, 0, 1, 1], [], []>} : vector<8x64xbf16>, vector<64x256xbf16>, vector<8x256xf32> -> vector<8x256xf32>
    %368 = arith.index_cast %362 : i32 to index
    %c0_81 = arith.constant 0 : index
    %369 = vector.load %arg10[%368, %c0_81] : memref<64x256xf32, #tpu.memory_space<vmem>>, vector<8x128xf32>
    %370 = vector.extract_strided_slice %367 {offsets = [0, 0], sizes = [8, 128], strides = [1, 1]} : vector<8x256xf32> to vector<8x128xf32>
    %371 = arith.addf %369, %370 : vector<8x128xf32>
    %372 = arith.index_cast %365 : i32 to index
    %c128_82 = arith.constant 128 : index
    %373 = vector.load %arg10[%372, %c128_82] : memref<64x256xf32, #tpu.memory_space<vmem>>, vector<8x128xf32>
    %374 = vector.extract_strided_slice %367 {offsets = [0, 128], sizes = [8, 128], strides = [1, 1]} : vector<8x256xf32> to vector<8x128xf32>
    %375 = arith.addf %373, %374 : vector<8x128xf32>
    %376 = vector.extract_strided_slice %371 {offsets = [0, 0], sizes = [8, 32], strides = [1, 1]} : vector<8x128xf32> to vector<8x32xf32>
    %377 = arith.negf %376 : vector<8x32xf32>
    %378 = math.exp %377 : vector<8x32xf32>
    %cst_83 = arith.constant 1.000000e+00 : f32
    %379 = vector.broadcast %cst_83 : f32 to vector<8x32xf32>
    %380 = arith.addf %379, %378 : vector<8x32xf32>
    %381 = arith.divf %379, %380 : vector<8x32xf32>
    %382 = vector.extract_strided_slice %371 {offsets = [0, 32], sizes = [8, 32], strides = [1, 1]} : vector<8x128xf32> to vector<8x32xf32>
    %383 = arith.negf %382 : vector<8x32xf32>
    %384 = math.exp %383 : vector<8x32xf32>
    %cst_84 = arith.constant 1.000000e+00 : f32
    %385 = vector.broadcast %cst_84 : f32 to vector<8x32xf32>
    %386 = arith.addf %385, %384 : vector<8x32xf32>
    %387 = arith.divf %385, %386 : vector<8x32xf32>
    %388 = vector.extract_strided_slice %371 {offsets = [0, 64], sizes = [8, 32], strides = [1, 1]} : vector<8x128xf32> to vector<8x32xf32>
    %389 = math.tanh %388 : vector<8x32xf32>
    %390 = vector.extract_strided_slice %371 {offsets = [0, 96], sizes = [8, 32], strides = [1, 1]} : vector<8x128xf32> to vector<8x32xf32>
    %391 = arith.negf %390 : vector<8x32xf32>
    %392 = math.exp %391 : vector<8x32xf32>
    %cst_85 = arith.constant 1.000000e+00 : f32
    %393 = vector.broadcast %cst_85 : f32 to vector<8x32xf32>
    %394 = arith.addf %393, %392 : vector<8x32xf32>
    %395 = arith.divf %393, %394 : vector<8x32xf32>
    %396 = arith.mulf %387, %328 : vector<8x32xf32>
    %397 = arith.mulf %381, %389 : vector<8x32xf32>
    %398 = arith.addf %396, %397 : vector<8x32xf32>
    %399 = math.tanh %398 : vector<8x32xf32>
    %400 = arith.mulf %395, %399 : vector<8x32xf32>
    %401 = vector.extract_strided_slice %375 {offsets = [0, 0], sizes = [8, 32], strides = [1, 1]} : vector<8x128xf32> to vector<8x32xf32>
    %402 = arith.negf %401 : vector<8x32xf32>
    %403 = math.exp %402 : vector<8x32xf32>
    %cst_86 = arith.constant 1.000000e+00 : f32
    %404 = vector.broadcast %cst_86 : f32 to vector<8x32xf32>
    %405 = arith.addf %404, %403 : vector<8x32xf32>
    %406 = arith.divf %404, %405 : vector<8x32xf32>
    %407 = vector.extract_strided_slice %375 {offsets = [0, 32], sizes = [8, 32], strides = [1, 1]} : vector<8x128xf32> to vector<8x32xf32>
    %408 = arith.negf %407 : vector<8x32xf32>
    %409 = math.exp %408 : vector<8x32xf32>
    %cst_87 = arith.constant 1.000000e+00 : f32
    %410 = vector.broadcast %cst_87 : f32 to vector<8x32xf32>
    %411 = arith.addf %410, %409 : vector<8x32xf32>
    %412 = arith.divf %410, %411 : vector<8x32xf32>
    %413 = vector.extract_strided_slice %375 {offsets = [0, 64], sizes = [8, 32], strides = [1, 1]} : vector<8x128xf32> to vector<8x32xf32>
    %414 = math.tanh %413 : vector<8x32xf32>
    %415 = vector.extract_strided_slice %375 {offsets = [0, 96], sizes = [8, 32], strides = [1, 1]} : vector<8x128xf32> to vector<8x32xf32>
    %416 = arith.negf %415 : vector<8x32xf32>
    %417 = math.exp %416 : vector<8x32xf32>
    %cst_88 = arith.constant 1.000000e+00 : f32
    %418 = vector.broadcast %cst_88 : f32 to vector<8x32xf32>
    %419 = arith.addf %418, %417 : vector<8x32xf32>
    %420 = arith.divf %418, %419 : vector<8x32xf32>
    %421 = arith.mulf %412, %353 : vector<8x32xf32>
    %422 = arith.mulf %406, %414 : vector<8x32xf32>
    %423 = arith.addf %421, %422 : vector<8x32xf32>
    %424 = math.tanh %423 : vector<8x32xf32>
    %425 = arith.mulf %420, %424 : vector<8x32xf32>
    %426 = arith.index_cast %362 : i32 to index
    %c0_89 = arith.constant 0 : index
    %427 = vector.load %arg11[%426, %c0_89] : memref<64x64xf32, #tpu.memory_space<vmem>>, vector<8x32xf32>
    tpu.vector_store %arg11[%426, %c0_89], %400 {strides = array<i32>} : memref<64x64xf32, #tpu.memory_space<vmem>>, vector<8x32xf32>,
    %428 = arith.index_cast %365 : i32 to index
    %c32_90 = arith.constant 32 : index
    %429 = vector.load %arg11[%428, %c32_90] : memref<64x64xf32, #tpu.memory_space<vmem>>, vector<8x32xf32>
    tpu.vector_store %arg11[%428, %c32_90], %425 {strides = array<i32>} : memref<64x64xf32, #tpu.memory_space<vmem>>, vector<8x32xf32>,
    %430 = tpu.concatenate %400, %425 in 1 : vector<8x32xf32>, vector<8x32xf32> -> vector<8x64xf32>
    %c6_i32 = arith.constant 6 : i32
    %c8_i32_91 = arith.constant 8 : i32
    %431 = arith.muli %c6_i32, %c8_i32_91 : i32
    %432 = tpu.assume_multiple %431, 8 : i32
    %c7_i32_92 = arith.constant 7 : i32
    %433 = arith.subi %c7_i32_92, %c6_i32 : i32
    %c8_i32_93 = arith.constant 8 : i32
    %434 = arith.muli %433, %c8_i32_93 : i32
    %435 = tpu.assume_multiple %434, 8 : i32
    %436 = arith.truncf %430 : vector<8x64xf32> to vector<8x64xbf16>
    %cst_94 = arith.constant dense<0.000000e+00> : vector<8x256xf32>
    %437 = tpu.matmul %436, %9, %cst_94 {dimension_numbers = #tpu.dot_dimension_numbers<[1], [0], [0], [1], [0, 0, 1, 1], [], []>} : vector<8x64xbf16>, vector<64x256xbf16>, vector<8x256xf32> -> vector<8x256xf32>
    %438 = arith.index_cast %432 : i32 to index
    %c0_95 = arith.constant 0 : index
    %439 = vector.load %arg10[%438, %c0_95] : memref<64x256xf32, #tpu.memory_space<vmem>>, vector<8x128xf32>
    %440 = vector.extract_strided_slice %437 {offsets = [0, 0], sizes = [8, 128], strides = [1, 1]} : vector<8x256xf32> to vector<8x128xf32>
    %441 = arith.addf %439, %440 : vector<8x128xf32>
    %442 = arith.index_cast %435 : i32 to index
    %c128_96 = arith.constant 128 : index
    %443 = vector.load %arg10[%442, %c128_96] : memref<64x256xf32, #tpu.memory_space<vmem>>, vector<8x128xf32>
    %444 = vector.extract_strided_slice %437 {offsets = [0, 128], sizes = [8, 128], strides = [1, 1]} : vector<8x256xf32> to vector<8x128xf32>
    %445 = arith.addf %443, %444 : vector<8x128xf32>
    %446 = vector.extract_strided_slice %441 {offsets = [0, 0], sizes = [8, 32], strides = [1, 1]} : vector<8x128xf32> to vector<8x32xf32>
    %447 = arith.negf %446 : vector<8x32xf32>
    %448 = math.exp %447 : vector<8x32xf32>
    %cst_97 = arith.constant 1.000000e+00 : f32
    %449 = vector.broadcast %cst_97 : f32 to vector<8x32xf32>
    %450 = arith.addf %449, %448 : vector<8x32xf32>
    %451 = arith.divf %449, %450 : vector<8x32xf32>
    %452 = vector.extract_strided_slice %441 {offsets = [0, 32], sizes = [8, 32], strides = [1, 1]} : vector<8x128xf32> to vector<8x32xf32>
    %453 = arith.negf %452 : vector<8x32xf32>
    %454 = math.exp %453 : vector<8x32xf32>
    %cst_98 = arith.constant 1.000000e+00 : f32
    %455 = vector.broadcast %cst_98 : f32 to vector<8x32xf32>
    %456 = arith.addf %455, %454 : vector<8x32xf32>
    %457 = arith.divf %455, %456 : vector<8x32xf32>
    %458 = vector.extract_strided_slice %441 {offsets = [0, 64], sizes = [8, 32], strides = [1, 1]} : vector<8x128xf32> to vector<8x32xf32>
    %459 = math.tanh %458 : vector<8x32xf32>
    %460 = vector.extract_strided_slice %441 {offsets = [0, 96], sizes = [8, 32], strides = [1, 1]} : vector<8x128xf32> to vector<8x32xf32>
    %461 = arith.negf %460 : vector<8x32xf32>
    %462 = math.exp %461 : vector<8x32xf32>
    %cst_99 = arith.constant 1.000000e+00 : f32
    %463 = vector.broadcast %cst_99 : f32 to vector<8x32xf32>
    %464 = arith.addf %463, %462 : vector<8x32xf32>
    %465 = arith.divf %463, %464 : vector<8x32xf32>
    %466 = arith.mulf %457, %398 : vector<8x32xf32>
    %467 = arith.mulf %451, %459 : vector<8x32xf32>
    %468 = arith.addf %466, %467 : vector<8x32xf32>
    %469 = math.tanh %468 : vector<8x32xf32>
    %470 = arith.mulf %465, %469 : vector<8x32xf32>
    %471 = vector.extract_strided_slice %445 {offsets = [0, 0], sizes = [8, 32], strides = [1, 1]} : vector<8x128xf32> to vector<8x32xf32>
    %472 = arith.negf %471 : vector<8x32xf32>
    %473 = math.exp %472 : vector<8x32xf32>
    %cst_100 = arith.constant 1.000000e+00 : f32
    %474 = vector.broadcast %cst_100 : f32 to vector<8x32xf32>
    %475 = arith.addf %474, %473 : vector<8x32xf32>
    %476 = arith.divf %474, %475 : vector<8x32xf32>
    %477 = vector.extract_strided_slice %445 {offsets = [0, 32], sizes = [8, 32], strides = [1, 1]} : vector<8x128xf32> to vector<8x32xf32>
    %478 = arith.negf %477 : vector<8x32xf32>
    %479 = math.exp %478 : vector<8x32xf32>
    %cst_101 = arith.constant 1.000000e+00 : f32
    %480 = vector.broadcast %cst_101 : f32 to vector<8x32xf32>
    %481 = arith.addf %480, %479 : vector<8x32xf32>
    %482 = arith.divf %480, %481 : vector<8x32xf32>
    %483 = vector.extract_strided_slice %445 {offsets = [0, 64], sizes = [8, 32], strides = [1, 1]} : vector<8x128xf32> to vector<8x32xf32>
    %484 = math.tanh %483 : vector<8x32xf32>
    %485 = vector.extract_strided_slice %445 {offsets = [0, 96], sizes = [8, 32], strides = [1, 1]} : vector<8x128xf32> to vector<8x32xf32>
    %486 = arith.negf %485 : vector<8x32xf32>
    %487 = math.exp %486 : vector<8x32xf32>
    %cst_102 = arith.constant 1.000000e+00 : f32
    %488 = vector.broadcast %cst_102 : f32 to vector<8x32xf32>
    %489 = arith.addf %488, %487 : vector<8x32xf32>
    %490 = arith.divf %488, %489 : vector<8x32xf32>
    %491 = arith.mulf %482, %423 : vector<8x32xf32>
    %492 = arith.mulf %476, %484 : vector<8x32xf32>
    %493 = arith.addf %491, %492 : vector<8x32xf32>
    %494 = math.tanh %493 : vector<8x32xf32>
    %495 = arith.mulf %490, %494 : vector<8x32xf32>
    %496 = arith.index_cast %432 : i32 to index
    %c0_103 = arith.constant 0 : index
    %497 = vector.load %arg11[%496, %c0_103] : memref<64x64xf32, #tpu.memory_space<vmem>>, vector<8x32xf32>
    tpu.vector_store %arg11[%496, %c0_103], %470 {strides = array<i32>} : memref<64x64xf32, #tpu.memory_space<vmem>>, vector<8x32xf32>,
    %498 = arith.index_cast %435 : i32 to index
    %c32_104 = arith.constant 32 : index
    %499 = vector.load %arg11[%498, %c32_104] : memref<64x64xf32, #tpu.memory_space<vmem>>, vector<8x32xf32>
    tpu.vector_store %arg11[%498, %c32_104], %495 {strides = array<i32>} : memref<64x64xf32, #tpu.memory_space<vmem>>, vector<8x32xf32>,
    %500 = tpu.concatenate %470, %495 in 1 : vector<8x32xf32>, vector<8x32xf32> -> vector<8x64xf32>
    %c7_i32_105 = arith.constant 7 : i32
    %c8_i32_106 = arith.constant 8 : i32
    %501 = arith.muli %c7_i32_105, %c8_i32_106 : i32
    %502 = tpu.assume_multiple %501, 8 : i32
    %c7_i32_107 = arith.constant 7 : i32
    %503 = arith.subi %c7_i32_107, %c7_i32_105 : i32
    %c8_i32_108 = arith.constant 8 : i32
    %504 = arith.muli %503, %c8_i32_108 : i32
    %505 = tpu.assume_multiple %504, 8 : i32
    %506 = arith.truncf %500 : vector<8x64xf32> to vector<8x64xbf16>
    %cst_109 = arith.constant dense<0.000000e+00> : vector<8x256xf32>
    %507 = tpu.matmul %506, %9, %cst_109 {dimension_numbers = #tpu.dot_dimension_numbers<[1], [0], [0], [1], [0, 0, 1, 1], [], []>} : vector<8x64xbf16>, vector<64x256xbf16>, vector<8x256xf32> -> vector<8x256xf32>
    %508 = arith.index_cast %502 : i32 to index
    %c0_110 = arith.constant 0 : index
    %509 = vector.load %arg10[%508, %c0_110] : memref<64x256xf32, #tpu.memory_space<vmem>>, vector<8x128xf32>
    %510 = vector.extract_strided_slice %507 {offsets = [0, 0], sizes = [8, 128], strides = [1, 1]} : vector<8x256xf32> to vector<8x128xf32>
    %511 = arith.addf %509, %510 : vector<8x128xf32>
    %512 = arith.index_cast %505 : i32 to index
    %c128_111 = arith.constant 128 : index
    %513 = vector.load %arg10[%512, %c128_111] : memref<64x256xf32, #tpu.memory_space<vmem>>, vector<8x128xf32>
    %514 = vector.extract_strided_slice %507 {offsets = [0, 128], sizes = [8, 128], strides = [1, 1]} : vector<8x256xf32> to vector<8x128xf32>
    %515 = arith.addf %513, %514 : vector<8x128xf32>
    %516 = vector.extract_strided_slice %511 {offsets = [0, 0], sizes = [8, 32], strides = [1, 1]} : vector<8x128xf32> to vector<8x32xf32>
    %517 = arith.negf %516 : vector<8x32xf32>
    %518 = math.exp %517 : vector<8x32xf32>
    %cst_112 = arith.constant 1.000000e+00 : f32
    %519 = vector.broadcast %cst_112 : f32 to vector<8x32xf32>
    %520 = arith.addf %519, %518 : vector<8x32xf32>
    %521 = arith.divf %519, %520 : vector<8x32xf32>
    %522 = vector.extract_strided_slice %511 {offsets = [0, 32], sizes = [8, 32], strides = [1, 1]} : vector<8x128xf32> to vector<8x32xf32>
    %523 = arith.negf %522 : vector<8x32xf32>
    %524 = math.exp %523 : vector<8x32xf32>
    %cst_113 = arith.constant 1.000000e+00 : f32
    %525 = vector.broadcast %cst_113 : f32 to vector<8x32xf32>
    %526 = arith.addf %525, %524 : vector<8x32xf32>
    %527 = arith.divf %525, %526 : vector<8x32xf32>
    %528 = vector.extract_strided_slice %511 {offsets = [0, 64], sizes = [8, 32], strides = [1, 1]} : vector<8x128xf32> to vector<8x32xf32>
    %529 = math.tanh %528 : vector<8x32xf32>
    %530 = vector.extract_strided_slice %511 {offsets = [0, 96], sizes = [8, 32], strides = [1, 1]} : vector<8x128xf32> to vector<8x32xf32>
    %531 = arith.negf %530 : vector<8x32xf32>
    %532 = math.exp %531 : vector<8x32xf32>
    %cst_114 = arith.constant 1.000000e+00 : f32
    %533 = vector.broadcast %cst_114 : f32 to vector<8x32xf32>
    %534 = arith.addf %533, %532 : vector<8x32xf32>
    %535 = arith.divf %533, %534 : vector<8x32xf32>
    %536 = arith.mulf %527, %468 : vector<8x32xf32>
    %537 = arith.mulf %521, %529 : vector<8x32xf32>
    %538 = arith.addf %536, %537 : vector<8x32xf32>
    %539 = math.tanh %538 : vector<8x32xf32>
    %540 = arith.mulf %535, %539 : vector<8x32xf32>
    %541 = vector.extract_strided_slice %515 {offsets = [0, 0], sizes = [8, 32], strides = [1, 1]} : vector<8x128xf32> to vector<8x32xf32>
    %542 = arith.negf %541 : vector<8x32xf32>
    %543 = math.exp %542 : vector<8x32xf32>
    %cst_115 = arith.constant 1.000000e+00 : f32
    %544 = vector.broadcast %cst_115 : f32 to vector<8x32xf32>
    %545 = arith.addf %544, %543 : vector<8x32xf32>
    %546 = arith.divf %544, %545 : vector<8x32xf32>
    %547 = vector.extract_strided_slice %515 {offsets = [0, 32], sizes = [8, 32], strides = [1, 1]} : vector<8x128xf32> to vector<8x32xf32>
    %548 = arith.negf %547 : vector<8x32xf32>
    %549 = math.exp %548 : vector<8x32xf32>
    %cst_116 = arith.constant 1.000000e+00 : f32
    %550 = vector.broadcast %cst_116 : f32 to vector<8x32xf32>
    %551 = arith.addf %550, %549 : vector<8x32xf32>
    %552 = arith.divf %550, %551 : vector<8x32xf32>
    %553 = vector.extract_strided_slice %515 {offsets = [0, 64], sizes = [8, 32], strides = [1, 1]} : vector<8x128xf32> to vector<8x32xf32>
    %554 = math.tanh %553 : vector<8x32xf32>
    %555 = vector.extract_strided_slice %515 {offsets = [0, 96], sizes = [8, 32], strides = [1, 1]} : vector<8x128xf32> to vector<8x32xf32>
    %556 = arith.negf %555 : vector<8x32xf32>
    %557 = math.exp %556 : vector<8x32xf32>
    %cst_117 = arith.constant 1.000000e+00 : f32
    %558 = vector.broadcast %cst_117 : f32 to vector<8x32xf32>
    %559 = arith.addf %558, %557 : vector<8x32xf32>
    %560 = arith.divf %558, %559 : vector<8x32xf32>
    %561 = arith.mulf %552, %493 : vector<8x32xf32>
    %562 = arith.mulf %546, %554 : vector<8x32xf32>
    %563 = arith.addf %561, %562 : vector<8x32xf32>
    %564 = math.tanh %563 : vector<8x32xf32>
    %565 = arith.mulf %560, %564 : vector<8x32xf32>
    %566 = arith.index_cast %502 : i32 to index
    %c0_118 = arith.constant 0 : index
    %567 = vector.load %arg11[%566, %c0_118] : memref<64x64xf32, #tpu.memory_space<vmem>>, vector<8x32xf32>
    tpu.vector_store %arg11[%566, %c0_118], %540 {strides = array<i32>} : memref<64x64xf32, #tpu.memory_space<vmem>>, vector<8x32xf32>,
    %568 = arith.index_cast %505 : i32 to index
    %c32_119 = arith.constant 32 : index
    %569 = vector.load %arg11[%568, %c32_119] : memref<64x64xf32, #tpu.memory_space<vmem>>, vector<8x32xf32>
    tpu.vector_store %arg11[%568, %c32_119], %565 {strides = array<i32>} : memref<64x64xf32, #tpu.memory_space<vmem>>, vector<8x32xf32>,
    %570 = tpu.concatenate %540, %565 in 1 : vector<8x32xf32>, vector<8x32xf32> -> vector<8x64xf32>
    %c8_i32_120 = arith.constant 8 : i32
    %c0_121 = arith.constant 0 : index
    %c0_122 = arith.constant 0 : index
    %571 = vector.load %arg11[%c0_121, %c0_122] : memref<64x64xf32, #tpu.memory_space<vmem>>, vector<64x64xf32>
    %572 = arith.truncf %571 : vector<64x64xf32> to vector<64x64xbf16>
    %c0_123 = arith.constant 0 : index
    %c0_124 = arith.constant 0 : index
    %573 = vector.load %arg4[%c0_123, %c0_124] : memref<64x256xbf16, #tpu.memory_space<vmem>>, vector<64x256xbf16>
    %cst_125 = arith.constant dense<0.000000e+00> : vector<64x256xf32>
    %574 = tpu.matmul %572, %573, %cst_125 {dimension_numbers = #tpu.dot_dimension_numbers<[1], [0], [0], [1], [0, 0, 1, 1], [], []>} : vector<64x64xbf16>, vector<64x256xbf16>, vector<64x256xf32> -> vector<64x256xf32>
    %c0_126 = arith.constant 0 : index
    %c0_127 = arith.constant 0 : index
    %575 = vector.load %arg5[%c0_126, %c0_127] : memref<1x256xf32, #tpu.memory_space<vmem>>, vector<1x256xf32>
    %576 = vector.broadcast %575 : vector<1x256xf32> to vector<64x256xf32>
    %577 = arith.addf %574, %576 : vector<64x256xf32>
    %c0_128 = arith.constant 0 : index
    %c0_129 = arith.constant 0 : index
    %578 = vector.load %arg10[%c0_128, %c0_129] : memref<64x256xf32, #tpu.memory_space<vmem>>, vector<64x256xf32>
    tpu.vector_store %arg10[%c0_128, %c0_129], %577 {strides = array<i32>} : memref<64x256xf32, #tpu.memory_space<vmem>>, vector<64x256xf32>,
    %c0_130 = arith.constant 0 : index
    %c0_131 = arith.constant 0 : index
    %579 = vector.load %arg6[%c0_130, %c0_131] : memref<64x256xbf16, #tpu.memory_space<vmem>>, vector<32x128xbf16>
    %c0_i32_132 = arith.constant 0 : i32
    %c8_i32_133 = arith.constant 8 : i32
    %580 = arith.muli %c0_i32_132, %c8_i32_133 : i32
    %581 = tpu.assume_multiple %580, 8 : i32
    %582 = arith.index_cast %581 : i32 to index
    %c0_134 = arith.constant 0 : index
    %583 = vector.load %arg10[%582, %c0_134] : memref<64x256xf32, #tpu.memory_space<vmem>>, vector<8x128xf32>
    %584 = arith.truncf %0 : vector<8x32xf32> to vector<8x32xbf16>
    %cst_135 = arith.constant dense<0.000000e+00> : vector<8x128xf32>
    %585 = tpu.matmul %584, %579, %cst_135 {dimension_numbers = #tpu.dot_dimension_numbers<[1], [0], [0], [1], [0, 0, 1, 1], [], []>} : vector<8x32xbf16>, vector<32x128xbf16>, vector<8x128xf32> -> vector<8x128xf32>
    %586 = arith.addf %583, %585 : vector<8x128xf32>
    %587 = vector.extract_strided_slice %586 {offsets = [0, 0], sizes = [8, 32], strides = [1, 1]} : vector<8x128xf32> to vector<8x32xf32>
    %588 = arith.negf %587 : vector<8x32xf32>
    %589 = math.exp %588 : vector<8x32xf32>
    %cst_136 = arith.constant 1.000000e+00 : f32
    %590 = vector.broadcast %cst_136 : f32 to vector<8x32xf32>
    %591 = arith.addf %590, %589 : vector<8x32xf32>
    %592 = arith.divf %590, %591 : vector<8x32xf32>
    %593 = vector.extract_strided_slice %586 {offsets = [0, 32], sizes = [8, 32], strides = [1, 1]} : vector<8x128xf32> to vector<8x32xf32>
    %594 = arith.negf %593 : vector<8x32xf32>
    %595 = math.exp %594 : vector<8x32xf32>
    %cst_137 = arith.constant 1.000000e+00 : f32
    %596 = vector.broadcast %cst_137 : f32 to vector<8x32xf32>
    %597 = arith.addf %596, %595 : vector<8x32xf32>
    %598 = arith.divf %596, %597 : vector<8x32xf32>
    %599 = vector.extract_strided_slice %586 {offsets = [0, 64], sizes = [8, 32], strides = [1, 1]} : vector<8x128xf32> to vector<8x32xf32>
    %600 = math.tanh %599 : vector<8x32xf32>
    %601 = vector.extract_strided_slice %586 {offsets = [0, 96], sizes = [8, 32], strides = [1, 1]} : vector<8x128xf32> to vector<8x32xf32>
    %602 = arith.negf %601 : vector<8x32xf32>
    %603 = math.exp %602 : vector<8x32xf32>
    %cst_138 = arith.constant 1.000000e+00 : f32
    %604 = vector.broadcast %cst_138 : f32 to vector<8x32xf32>
    %605 = arith.addf %604, %603 : vector<8x32xf32>
    %606 = arith.divf %604, %605 : vector<8x32xf32>
    %607 = arith.mulf %598, %0 : vector<8x32xf32>
    %608 = arith.mulf %592, %600 : vector<8x32xf32>
    %609 = arith.addf %607, %608 : vector<8x32xf32>
    %610 = math.tanh %609 : vector<8x32xf32>
    %611 = arith.mulf %606, %610 : vector<8x32xf32>
    %c1_i32_139 = arith.constant 1 : i32
    %c8_i32_140 = arith.constant 8 : i32
    %612 = arith.muli %c1_i32_139, %c8_i32_140 : i32
    %613 = tpu.assume_multiple %612, 8 : i32
    %614 = arith.index_cast %613 : i32 to index
    %c0_141 = arith.constant 0 : index
    %615 = vector.load %arg10[%614, %c0_141] : memref<64x256xf32, #tpu.memory_space<vmem>>, vector<8x128xf32>
    %616 = arith.truncf %611 : vector<8x32xf32> to vector<8x32xbf16>
    %cst_142 = arith.constant dense<0.000000e+00> : vector<8x128xf32>
    %617 = tpu.matmul %616, %579, %cst_142 {dimension_numbers = #tpu.dot_dimension_numbers<[1], [0], [0], [1], [0, 0, 1, 1], [], []>} : vector<8x32xbf16>, vector<32x128xbf16>, vector<8x128xf32> -> vector<8x128xf32>
    %618 = arith.addf %615, %617 : vector<8x128xf32>
    %619 = vector.extract_strided_slice %618 {offsets = [0, 0], sizes = [8, 32], strides = [1, 1]} : vector<8x128xf32> to vector<8x32xf32>
    %620 = arith.negf %619 : vector<8x32xf32>
    %621 = math.exp %620 : vector<8x32xf32>
    %cst_143 = arith.constant 1.000000e+00 : f32
    %622 = vector.broadcast %cst_143 : f32 to vector<8x32xf32>
    %623 = arith.addf %622, %621 : vector<8x32xf32>
    %624 = arith.divf %622, %623 : vector<8x32xf32>
    %625 = vector.extract_strided_slice %618 {offsets = [0, 32], sizes = [8, 32], strides = [1, 1]} : vector<8x128xf32> to vector<8x32xf32>
    %626 = arith.negf %625 : vector<8x32xf32>
    %627 = math.exp %626 : vector<8x32xf32>
    %cst_144 = arith.constant 1.000000e+00 : f32
    %628 = vector.broadcast %cst_144 : f32 to vector<8x32xf32>
    %629 = arith.addf %628, %627 : vector<8x32xf32>
    %630 = arith.divf %628, %629 : vector<8x32xf32>
    %631 = vector.extract_strided_slice %618 {offsets = [0, 64], sizes = [8, 32], strides = [1, 1]} : vector<8x128xf32> to vector<8x32xf32>
    %632 = math.tanh %631 : vector<8x32xf32>
    %633 = vector.extract_strided_slice %618 {offsets = [0, 96], sizes = [8, 32], strides = [1, 1]} : vector<8x128xf32> to vector<8x32xf32>
    %634 = arith.negf %633 : vector<8x32xf32>
    %635 = math.exp %634 : vector<8x32xf32>
    %cst_145 = arith.constant 1.000000e+00 : f32
    %636 = vector.broadcast %cst_145 : f32 to vector<8x32xf32>
    %637 = arith.addf %636, %635 : vector<8x32xf32>
    %638 = arith.divf %636, %637 : vector<8x32xf32>
    %639 = arith.mulf %630, %609 : vector<8x32xf32>
    %640 = arith.mulf %624, %632 : vector<8x32xf32>
    %641 = arith.addf %639, %640 : vector<8x32xf32>
    %642 = math.tanh %641 : vector<8x32xf32>
    %643 = arith.mulf %638, %642 : vector<8x32xf32>
    %c2_i32_146 = arith.constant 2 : i32
    %c8_i32_147 = arith.constant 8 : i32
    %644 = arith.muli %c2_i32_146, %c8_i32_147 : i32
    %645 = tpu.assume_multiple %644, 8 : i32
    %646 = arith.index_cast %645 : i32 to index
    %c0_148 = arith.constant 0 : index
    %647 = vector.load %arg10[%646, %c0_148] : memref<64x256xf32, #tpu.memory_space<vmem>>, vector<8x128xf32>
    %648 = arith.truncf %643 : vector<8x32xf32> to vector<8x32xbf16>
    %cst_149 = arith.constant dense<0.000000e+00> : vector<8x128xf32>
    %649 = tpu.matmul %648, %579, %cst_149 {dimension_numbers = #tpu.dot_dimension_numbers<[1], [0], [0], [1], [0, 0, 1, 1], [], []>} : vector<8x32xbf16>, vector<32x128xbf16>, vector<8x128xf32> -> vector<8x128xf32>
    %650 = arith.addf %647, %649 : vector<8x128xf32>
    %651 = vector.extract_strided_slice %650 {offsets = [0, 0], sizes = [8, 32], strides = [1, 1]} : vector<8x128xf32> to vector<8x32xf32>
    %652 = arith.negf %651 : vector<8x32xf32>
    %653 = math.exp %652 : vector<8x32xf32>
    %cst_150 = arith.constant 1.000000e+00 : f32
    %654 = vector.broadcast %cst_150 : f32 to vector<8x32xf32>
    %655 = arith.addf %654, %653 : vector<8x32xf32>
    %656 = arith.divf %654, %655 : vector<8x32xf32>
    %657 = vector.extract_strided_slice %650 {offsets = [0, 32], sizes = [8, 32], strides = [1, 1]} : vector<8x128xf32> to vector<8x32xf32>
    %658 = arith.negf %657 : vector<8x32xf32>
    %659 = math.exp %658 : vector<8x32xf32>
    %cst_151 = arith.constant 1.000000e+00 : f32
    %660 = vector.broadcast %cst_151 : f32 to vector<8x32xf32>
    %661 = arith.addf %660, %659 : vector<8x32xf32>
    %662 = arith.divf %660, %661 : vector<8x32xf32>
    %663 = vector.extract_strided_slice %650 {offsets = [0, 64], sizes = [8, 32], strides = [1, 1]} : vector<8x128xf32> to vector<8x32xf32>
    %664 = math.tanh %663 : vector<8x32xf32>
    %665 = vector.extract_strided_slice %650 {offsets = [0, 96], sizes = [8, 32], strides = [1, 1]} : vector<8x128xf32> to vector<8x32xf32>
    %666 = arith.negf %665 : vector<8x32xf32>
    %667 = math.exp %666 : vector<8x32xf32>
    %cst_152 = arith.constant 1.000000e+00 : f32
    %668 = vector.broadcast %cst_152 : f32 to vector<8x32xf32>
    %669 = arith.addf %668, %667 : vector<8x32xf32>
    %670 = arith.divf %668, %669 : vector<8x32xf32>
    %671 = arith.mulf %662, %641 : vector<8x32xf32>
    %672 = arith.mulf %656, %664 : vector<8x32xf32>
    %673 = arith.addf %671, %672 : vector<8x32xf32>
    %674 = math.tanh %673 : vector<8x32xf32>
    %675 = arith.mulf %670, %674 : vector<8x32xf32>
    %c3_i32_153 = arith.constant 3 : i32
    %c8_i32_154 = arith.constant 8 : i32
    %676 = arith.muli %c3_i32_153, %c8_i32_154 : i32
    %677 = tpu.assume_multiple %676, 8 : i32
    %678 = arith.index_cast %677 : i32 to index
    %c0_155 = arith.constant 0 : index
    %679 = vector.load %arg10[%678, %c0_155] : memref<64x256xf32, #tpu.memory_space<vmem>>, vector<8x128xf32>
    %680 = arith.truncf %675 : vector<8x32xf32> to vector<8x32xbf16>
    %cst_156 = arith.constant dense<0.000000e+00> : vector<8x128xf32>
    %681 = tpu.matmul %680, %579, %cst_156 {dimension_numbers = #tpu.dot_dimension_numbers<[1], [0], [0], [1], [0, 0, 1, 1], [], []>} : vector<8x32xbf16>, vector<32x128xbf16>, vector<8x128xf32> -> vector<8x128xf32>
    %682 = arith.addf %679, %681 : vector<8x128xf32>
    %683 = vector.extract_strided_slice %682 {offsets = [0, 0], sizes = [8, 32], strides = [1, 1]} : vector<8x128xf32> to vector<8x32xf32>
    %684 = arith.negf %683 : vector<8x32xf32>
    %685 = math.exp %684 : vector<8x32xf32>
    %cst_157 = arith.constant 1.000000e+00 : f32
    %686 = vector.broadcast %cst_157 : f32 to vector<8x32xf32>
    %687 = arith.addf %686, %685 : vector<8x32xf32>
    %688 = arith.divf %686, %687 : vector<8x32xf32>
    %689 = vector.extract_strided_slice %682 {offsets = [0, 32], sizes = [8, 32], strides = [1, 1]} : vector<8x128xf32> to vector<8x32xf32>
    %690 = arith.negf %689 : vector<8x32xf32>
    %691 = math.exp %690 : vector<8x32xf32>
    %cst_158 = arith.constant 1.000000e+00 : f32
    %692 = vector.broadcast %cst_158 : f32 to vector<8x32xf32>
    %693 = arith.addf %692, %691 : vector<8x32xf32>
    %694 = arith.divf %692, %693 : vector<8x32xf32>
    %695 = vector.extract_strided_slice %682 {offsets = [0, 64], sizes = [8, 32], strides = [1, 1]} : vector<8x128xf32> to vector<8x32xf32>
    %696 = math.tanh %695 : vector<8x32xf32>
    %697 = vector.extract_strided_slice %682 {offsets = [0, 96], sizes = [8, 32], strides = [1, 1]} : vector<8x128xf32> to vector<8x32xf32>
    %698 = arith.negf %697 : vector<8x32xf32>
    %699 = math.exp %698 : vector<8x32xf32>
    %cst_159 = arith.constant 1.000000e+00 : f32
    %700 = vector.broadcast %cst_159 : f32 to vector<8x32xf32>
    %701 = arith.addf %700, %699 : vector<8x32xf32>
    %702 = arith.divf %700, %701 : vector<8x32xf32>
    %703 = arith.mulf %694, %673 : vector<8x32xf32>
    %704 = arith.mulf %688, %696 : vector<8x32xf32>
    %705 = arith.addf %703, %704 : vector<8x32xf32>
    %706 = math.tanh %705 : vector<8x32xf32>
    %707 = arith.mulf %702, %706 : vector<8x32xf32>
    %c4_i32_160 = arith.constant 4 : i32
    %c8_i32_161 = arith.constant 8 : i32
    %708 = arith.muli %c4_i32_160, %c8_i32_161 : i32
    %709 = tpu.assume_multiple %708, 8 : i32
    %710 = arith.index_cast %709 : i32 to index
    %c0_162 = arith.constant 0 : index
    %711 = vector.load %arg10[%710, %c0_162] : memref<64x256xf32, #tpu.memory_space<vmem>>, vector<8x128xf32>
    %712 = arith.truncf %707 : vector<8x32xf32> to vector<8x32xbf16>
    %cst_163 = arith.constant dense<0.000000e+00> : vector<8x128xf32>
    %713 = tpu.matmul %712, %579, %cst_163 {dimension_numbers = #tpu.dot_dimension_numbers<[1], [0], [0], [1], [0, 0, 1, 1], [], []>} : vector<8x32xbf16>, vector<32x128xbf16>, vector<8x128xf32> -> vector<8x128xf32>
    %714 = arith.addf %711, %713 : vector<8x128xf32>
    %715 = vector.extract_strided_slice %714 {offsets = [0, 0], sizes = [8, 32], strides = [1, 1]} : vector<8x128xf32> to vector<8x32xf32>
    %716 = arith.negf %715 : vector<8x32xf32>
    %717 = math.exp %716 : vector<8x32xf32>
    %cst_164 = arith.constant 1.000000e+00 : f32
    %718 = vector.broadcast %cst_164 : f32 to vector<8x32xf32>
    %719 = arith.addf %718, %717 : vector<8x32xf32>
    %720 = arith.divf %718, %719 : vector<8x32xf32>
    %721 = vector.extract_strided_slice %714 {offsets = [0, 32], sizes = [8, 32], strides = [1, 1]} : vector<8x128xf32> to vector<8x32xf32>
    %722 = arith.negf %721 : vector<8x32xf32>
    %723 = math.exp %722 : vector<8x32xf32>
    %cst_165 = arith.constant 1.000000e+00 : f32
    %724 = vector.broadcast %cst_165 : f32 to vector<8x32xf32>
    %725 = arith.addf %724, %723 : vector<8x32xf32>
    %726 = arith.divf %724, %725 : vector<8x32xf32>
    %727 = vector.extract_strided_slice %714 {offsets = [0, 64], sizes = [8, 32], strides = [1, 1]} : vector<8x128xf32> to vector<8x32xf32>
    %728 = math.tanh %727 : vector<8x32xf32>
    %729 = vector.extract_strided_slice %714 {offsets = [0, 96], sizes = [8, 32], strides = [1, 1]} : vector<8x128xf32> to vector<8x32xf32>
    %730 = arith.negf %729 : vector<8x32xf32>
    %731 = math.exp %730 : vector<8x32xf32>
    %cst_166 = arith.constant 1.000000e+00 : f32
    %732 = vector.broadcast %cst_166 : f32 to vector<8x32xf32>
    %733 = arith.addf %732, %731 : vector<8x32xf32>
    %734 = arith.divf %732, %733 : vector<8x32xf32>
    %735 = arith.mulf %726, %705 : vector<8x32xf32>
    %736 = arith.mulf %720, %728 : vector<8x32xf32>
    %737 = arith.addf %735, %736 : vector<8x32xf32>
    %738 = math.tanh %737 : vector<8x32xf32>
    %739 = arith.mulf %734, %738 : vector<8x32xf32>
    %c5_i32_167 = arith.constant 5 : i32
    %c8_i32_168 = arith.constant 8 : i32
    %740 = arith.muli %c5_i32_167, %c8_i32_168 : i32
    %741 = tpu.assume_multiple %740, 8 : i32
    %742 = arith.index_cast %741 : i32 to index
    %c0_169 = arith.constant 0 : index
    %743 = vector.load %arg10[%742, %c0_169] : memref<64x256xf32, #tpu.memory_space<vmem>>, vector<8x128xf32>
    %744 = arith.truncf %739 : vector<8x32xf32> to vector<8x32xbf16>
    %cst_170 = arith.constant dense<0.000000e+00> : vector<8x128xf32>
    %745 = tpu.matmul %744, %579, %cst_170 {dimension_numbers = #tpu.dot_dimension_numbers<[1], [0], [0], [1], [0, 0, 1, 1], [], []>} : vector<8x32xbf16>, vector<32x128xbf16>, vector<8x128xf32> -> vector<8x128xf32>
    %746 = arith.addf %743, %745 : vector<8x128xf32>
    %747 = vector.extract_strided_slice %746 {offsets = [0, 0], sizes = [8, 32], strides = [1, 1]} : vector<8x128xf32> to vector<8x32xf32>
    %748 = arith.negf %747 : vector<8x32xf32>
    %749 = math.exp %748 : vector<8x32xf32>
    %cst_171 = arith.constant 1.000000e+00 : f32
    %750 = vector.broadcast %cst_171 : f32 to vector<8x32xf32>
    %751 = arith.addf %750, %749 : vector<8x32xf32>
    %752 = arith.divf %750, %751 : vector<8x32xf32>
    %753 = vector.extract_strided_slice %746 {offsets = [0, 32], sizes = [8, 32], strides = [1, 1]} : vector<8x128xf32> to vector<8x32xf32>
    %754 = arith.negf %753 : vector<8x32xf32>
    %755 = math.exp %754 : vector<8x32xf32>
    %cst_172 = arith.constant 1.000000e+00 : f32
    %756 = vector.broadcast %cst_172 : f32 to vector<8x32xf32>
    %757 = arith.addf %756, %755 : vector<8x32xf32>
    %758 = arith.divf %756, %757 : vector<8x32xf32>
    %759 = vector.extract_strided_slice %746 {offsets = [0, 64], sizes = [8, 32], strides = [1, 1]} : vector<8x128xf32> to vector<8x32xf32>
    %760 = math.tanh %759 : vector<8x32xf32>
    %761 = vector.extract_strided_slice %746 {offsets = [0, 96], sizes = [8, 32], strides = [1, 1]} : vector<8x128xf32> to vector<8x32xf32>
    %762 = arith.negf %761 : vector<8x32xf32>
    %763 = math.exp %762 : vector<8x32xf32>
    %cst_173 = arith.constant 1.000000e+00 : f32
    %764 = vector.broadcast %cst_173 : f32 to vector<8x32xf32>
    %765 = arith.addf %764, %763 : vector<8x32xf32>
    %766 = arith.divf %764, %765 : vector<8x32xf32>
    %767 = arith.mulf %758, %737 : vector<8x32xf32>
    %768 = arith.mulf %752, %760 : vector<8x32xf32>
    %769 = arith.addf %767, %768 : vector<8x32xf32>
    %770 = math.tanh %769 : vector<8x32xf32>
    %771 = arith.mulf %766, %770 : vector<8x32xf32>
    %c6_i32_174 = arith.constant 6 : i32
    %c8_i32_175 = arith.constant 8 : i32
    %772 = arith.muli %c6_i32_174, %c8_i32_175 : i32
    %773 = tpu.assume_multiple %772, 8 : i32
    %774 = arith.index_cast %773 : i32 to index
    %c0_176 = arith.constant 0 : index
    %775 = vector.load %arg10[%774, %c0_176] : memref<64x256xf32, #tpu.memory_space<vmem>>, vector<8x128xf32>
    %776 = arith.truncf %771 : vector<8x32xf32> to vector<8x32xbf16>
    %cst_177 = arith.constant dense<0.000000e+00> : vector<8x128xf32>
    %777 = tpu.matmul %776, %579, %cst_177 {dimension_numbers = #tpu.dot_dimension_numbers<[1], [0], [0], [1], [0, 0, 1, 1], [], []>} : vector<8x32xbf16>, vector<32x128xbf16>, vector<8x128xf32> -> vector<8x128xf32>
    %778 = arith.addf %775, %777 : vector<8x128xf32>
    %779 = vector.extract_strided_slice %778 {offsets = [0, 0], sizes = [8, 32], strides = [1, 1]} : vector<8x128xf32> to vector<8x32xf32>
    %780 = arith.negf %779 : vector<8x32xf32>
    %781 = math.exp %780 : vector<8x32xf32>
    %cst_178 = arith.constant 1.000000e+00 : f32
    %782 = vector.broadcast %cst_178 : f32 to vector<8x32xf32>
    %783 = arith.addf %782, %781 : vector<8x32xf32>
    %784 = arith.divf %782, %783 : vector<8x32xf32>
    %785 = vector.extract_strided_slice %778 {offsets = [0, 32], sizes = [8, 32], strides = [1, 1]} : vector<8x128xf32> to vector<8x32xf32>
    %786 = arith.negf %785 : vector<8x32xf32>
    %787 = math.exp %786 : vector<8x32xf32>
    %cst_179 = arith.constant 1.000000e+00 : f32
    %788 = vector.broadcast %cst_179 : f32 to vector<8x32xf32>
    %789 = arith.addf %788, %787 : vector<8x32xf32>
    %790 = arith.divf %788, %789 : vector<8x32xf32>
    %791 = vector.extract_strided_slice %778 {offsets = [0, 64], sizes = [8, 32], strides = [1, 1]} : vector<8x128xf32> to vector<8x32xf32>
    %792 = math.tanh %791 : vector<8x32xf32>
    %793 = vector.extract_strided_slice %778 {offsets = [0, 96], sizes = [8, 32], strides = [1, 1]} : vector<8x128xf32> to vector<8x32xf32>
    %794 = arith.negf %793 : vector<8x32xf32>
    %795 = math.exp %794 : vector<8x32xf32>
    %cst_180 = arith.constant 1.000000e+00 : f32
    %796 = vector.broadcast %cst_180 : f32 to vector<8x32xf32>
    %797 = arith.addf %796, %795 : vector<8x32xf32>
    %798 = arith.divf %796, %797 : vector<8x32xf32>
    %799 = arith.mulf %790, %769 : vector<8x32xf32>
    %800 = arith.mulf %784, %792 : vector<8x32xf32>
    %801 = arith.addf %799, %800 : vector<8x32xf32>
    %802 = math.tanh %801 : vector<8x32xf32>
    %803 = arith.mulf %798, %802 : vector<8x32xf32>
    %c7_i32_181 = arith.constant 7 : i32
    %c8_i32_182 = arith.constant 8 : i32
    %804 = arith.muli %c7_i32_181, %c8_i32_182 : i32
    %805 = tpu.assume_multiple %804, 8 : i32
    %806 = arith.index_cast %805 : i32 to index
    %c0_183 = arith.constant 0 : index
    %807 = vector.load %arg10[%806, %c0_183] : memref<64x256xf32, #tpu.memory_space<vmem>>, vector<8x128xf32>
    %808 = arith.truncf %803 : vector<8x32xf32> to vector<8x32xbf16>
    %cst_184 = arith.constant dense<0.000000e+00> : vector<8x128xf32>
    %809 = tpu.matmul %808, %579, %cst_184 {dimension_numbers = #tpu.dot_dimension_numbers<[1], [0], [0], [1], [0, 0, 1, 1], [], []>} : vector<8x32xbf16>, vector<32x128xbf16>, vector<8x128xf32> -> vector<8x128xf32>
    %810 = arith.addf %807, %809 : vector<8x128xf32>
    %811 = vector.extract_strided_slice %810 {offsets = [0, 0], sizes = [8, 32], strides = [1, 1]} : vector<8x128xf32> to vector<8x32xf32>
    %812 = arith.negf %811 : vector<8x32xf32>
    %813 = math.exp %812 : vector<8x32xf32>
    %cst_185 = arith.constant 1.000000e+00 : f32
    %814 = vector.broadcast %cst_185 : f32 to vector<8x32xf32>
    %815 = arith.addf %814, %813 : vector<8x32xf32>
    %816 = arith.divf %814, %815 : vector<8x32xf32>
    %817 = vector.extract_strided_slice %810 {offsets = [0, 32], sizes = [8, 32], strides = [1, 1]} : vector<8x128xf32> to vector<8x32xf32>
    %818 = arith.negf %817 : vector<8x32xf32>
    %819 = math.exp %818 : vector<8x32xf32>
    %cst_186 = arith.constant 1.000000e+00 : f32
    %820 = vector.broadcast %cst_186 : f32 to vector<8x32xf32>
    %821 = arith.addf %820, %819 : vector<8x32xf32>
    %822 = arith.divf %820, %821 : vector<8x32xf32>
    %823 = vector.extract_strided_slice %810 {offsets = [0, 64], sizes = [8, 32], strides = [1, 1]} : vector<8x128xf32> to vector<8x32xf32>
    %824 = math.tanh %823 : vector<8x32xf32>
    %825 = vector.extract_strided_slice %810 {offsets = [0, 96], sizes = [8, 32], strides = [1, 1]} : vector<8x128xf32> to vector<8x32xf32>
    %826 = arith.negf %825 : vector<8x32xf32>
    %827 = math.exp %826 : vector<8x32xf32>
    %cst_187 = arith.constant 1.000000e+00 : f32
    %828 = vector.broadcast %cst_187 : f32 to vector<8x32xf32>
    %829 = arith.addf %828, %827 : vector<8x32xf32>
    %830 = arith.divf %828, %829 : vector<8x32xf32>
    %831 = arith.mulf %822, %801 : vector<8x32xf32>
    %832 = arith.mulf %816, %824 : vector<8x32xf32>
    %833 = arith.addf %831, %832 : vector<8x32xf32>
    %834 = math.tanh %833 : vector<8x32xf32>
    %835 = arith.mulf %830, %834 : vector<8x32xf32>
    %c8_i32_188 = arith.constant 8 : i32
    %c56 = arith.constant 56 : index
    %c128_189 = arith.constant 128 : index
    %836 = vector.load %arg10[%c56, %c128_189] : memref<64x256xf32, #tpu.memory_space<vmem>>, vector<8x128xf32>
    %837 = vector.extract_strided_slice %836 {offsets = [0, 0], sizes = [8, 32], strides = [1, 1]} : vector<8x128xf32> to vector<8x32xf32>
    %838 = arith.negf %837 : vector<8x32xf32>
    %839 = math.exp %838 : vector<8x32xf32>
    %cst_190 = arith.constant 1.000000e+00 : f32
    %840 = vector.broadcast %cst_190 : f32 to vector<8x32xf32>
    %841 = arith.addf %840, %839 : vector<8x32xf32>
    %842 = arith.divf %840, %841 : vector<8x32xf32>
    %843 = vector.extract_strided_slice %836 {offsets = [0, 32], sizes = [8, 32], strides = [1, 1]} : vector<8x128xf32> to vector<8x32xf32>
    %844 = arith.negf %843 : vector<8x32xf32>
    %845 = math.exp %844 : vector<8x32xf32>
    %cst_191 = arith.constant 1.000000e+00 : f32
    %846 = vector.broadcast %cst_191 : f32 to vector<8x32xf32>
    %847 = arith.addf %846, %845 : vector<8x32xf32>
    %848 = arith.divf %846, %847 : vector<8x32xf32>
    %849 = vector.extract_strided_slice %836 {offsets = [0, 64], sizes = [8, 32], strides = [1, 1]} : vector<8x128xf32> to vector<8x32xf32>
    %850 = math.tanh %849 : vector<8x32xf32>
    %851 = vector.extract_strided_slice %836 {offsets = [0, 96], sizes = [8, 32], strides = [1, 1]} : vector<8x128xf32> to vector<8x32xf32>
    %852 = arith.negf %851 : vector<8x32xf32>
    %853 = math.exp %852 : vector<8x32xf32>
    %cst_192 = arith.constant 1.000000e+00 : f32
    %854 = vector.broadcast %cst_192 : f32 to vector<8x32xf32>
    %855 = arith.addf %854, %853 : vector<8x32xf32>
    %856 = arith.divf %854, %855 : vector<8x32xf32>
    %857 = arith.mulf %848, %0 : vector<8x32xf32>
    %858 = arith.mulf %842, %850 : vector<8x32xf32>
    %859 = arith.addf %857, %858 : vector<8x32xf32>
    %860 = math.tanh %859 : vector<8x32xf32>
    %861 = arith.mulf %856, %860 : vector<8x32xf32>
    %862 = tpu.concatenate %835, %861 in 1 : vector<8x32xf32>, vector<8x32xf32> -> vector<8x64xf32>
    %863 = arith.truncf %862 : vector<8x64xf32> to vector<8x64xbf16>
    %c0_193 = arith.constant 0 : index
    %c0_194 = arith.constant 0 : index
    %864 = vector.load %arg7[%c0_193, %c0_194] : memref<64x10xbf16, #tpu.memory_space<vmem>>, vector<64x10xbf16>
    %cst_195 = arith.constant dense<0.000000e+00> : vector<8x10xf32>
    %865 = tpu.matmul %863, %864, %cst_195 {dimension_numbers = #tpu.dot_dimension_numbers<[1], [0], [0], [1], [0, 0, 1, 1], [], []>} : vector<8x64xbf16>, vector<64x10xbf16>, vector<8x10xf32> -> vector<8x10xf32>
    %c0_196 = arith.constant 0 : index
    %c0_197 = arith.constant 0 : index
    %866 = vector.load %arg8[%c0_196, %c0_197] : memref<1x10xf32, #tpu.memory_space<vmem>>, vector<1x10xf32>
    %867 = vector.broadcast %866 : vector<1x10xf32> to vector<8x10xf32>
    %868 = arith.addf %865, %867 : vector<8x10xf32>
    %cst_198 = arith.constant 0.000000e+00 : f32
    %869 = vector.broadcast %cst_198 : f32 to vector<8x10xf32>
    %870 = arith.maximumf %868, %869 : vector<8x10xf32>
    %c0_199 = arith.constant 0 : index
    %c0_200 = arith.constant 0 : index
    %871 = vector.load %arg9[%c0_199, %c0_200] : memref<8x10xf32, #tpu.memory_space<vmem>>, vector<8x10xf32>
    tpu.vector_store %arg9[%c0_199, %c0_200], %870 {strides = array<i32>} : memref<8x10xf32, #tpu.memory_space<vmem>>, vector<8x10xf32>,
    return
  }
}

</mosaic_0001>

<llo_original>
// kernel: lstm_model_forward.1
$region0: #{lstm_model_forward.1}
  #allocation0 [shape = 'u32[]', space=smem, size = 0x4, offset = 0x4, fixed_abs, tag = 'smem constant byte address 0x4 - core index']
  #allocation1 [shape = 'u32[72,128]{1,0:T(1,128)}', space=vmem, size = 0x9000, scoped, tag = 'internal scratch']
  #allocation2 [shape = 'f32[64,256]{1,0:T(8,128)}', space=vmem, size = 0x10000, scoped, tag = 'scratch operand']
  #allocation3 [shape = 'f32[64,64]{1,0:T(8,128)}', space=vmem, size = 0x8000, scoped, tag = 'scratch operand']
  %s0 = inlined_call_operand.vmem [shape: f32[64,16], index: 0, kind: input, shape index: {}]
  %s1 = inlined_call_operand.vmem [shape: bf16[16,256], index: 1, kind: input, shape index: {}]
  %s2 = inlined_call_operand.vmem [shape: f32[1,256], index: 2, kind: input, shape index: {}]
  %s3 = inlined_call_operand.vmem [shape: bf16[64,256], index: 3, kind: input, shape index: {}]
  %s4 = inlined_call_operand.vmem [shape: bf16[64,256], index: 4, kind: input, shape index: {}]
  %s5 = inlined_call_operand.hbm [shape: f32[1,256], index: 5, kind: input, shape index: {}]
  %s6 = inlined_call_operand.hbm [shape: bf16[64,256], index: 6, kind: input, shape index: {}]
  %s7 = inlined_call_operand.vmem [shape: bf16[64,10], index: 7, kind: input, shape index: {}]
  %s8 = inlined_call_operand.vmem [shape: f32[1,10], index: 8, kind: input, shape index: {}]
  %s9 = inlined_call_operand.vmem [shape: f32[8,10], index: 9, kind: output, shape index: {}]
  %s10 = sld [smem:[#allocation0]]
  $region54: #{lstm_model_forward.1} parent=0
    _
  %s12 = ssub.s32 1, %s10
  %s13 = scalar_select 0, %s12, %s10
  $region1: #{lstm_model_forward.1} parent=0
    #allocation4 [shape = 'u8[1024]{0}', space=vmem, size = 0x400, scoped, tag = 'input window, operand 5, single buffered']
    #allocation5 [shape = 's32[1]{0}', space=sflag, size = 0x4, scoped, tag = 'scoped memory for lstm_model_forward.1']
    #allocation6 [shape = 'u8[32768]{0}', space=vmem, size = 0x8000, scoped, tag = 'input window, operand 6, single buffered']
    #allocation7 [shape = 's32[1]{0}', space=sflag, size = 0x4, scoped, tag = 'scoped memory for lstm_model_forward.1']
    %14 = vsyncpa [#allocation5], 0
    %15 = vsyncpa [#allocation7], 0
    // Predicated region
    $region2: #{lstm_model_forward.1} parent=1 // pred_check
      _
    $region3: #{lstm_model_forward.1} parent=1 // pred_check_branch
      %17 = sbr.rel (0) target = $region5
    $region4: #{lstm_model_forward.1} parent=1 // pred_region
      _
    $region5: #{lstm_model_forward.1} parent=1 // pred_fallthru
      _
    // Predicated region
    $region6: #{lstm_model_forward.1} parent=1 // pred_check
      _
    $region7: #{lstm_model_forward.1} parent=1 // pred_check_branch
      %19 = sbr.rel (0) target = $region9
    $region8: #{lstm_model_forward.1} parent=1 // pred_region
      _
    $region9: #{lstm_model_forward.1} parent=1 // pred_fallthru
      _
    // Predicated region
    $region10: #{lstm_model_forward.1} parent=1 // pred_check
      _
    $region11: #{lstm_model_forward.1} parent=1 // pred_check_branch
      %21 = sbr.rel (0) target = $region13
    $region12: #{lstm_model_forward.1} parent=1 // pred_region
      _
    $region13: #{lstm_model_forward.1} parent=1 // pred_fallthru
      _
    // Predicated region
    $region14: #{lstm_model_forward.1} parent=1 // pred_check
      _
    $region15: #{lstm_model_forward.1} parent=1 // pred_check_branch
      %23 = sbr.rel (0) target = $region17
    $region16: #{lstm_model_forward.1} parent=1 // pred_region
      _
    $region17: #{lstm_model_forward.1} parent=1 // pred_fallthru
      _
    // Predicated region
    $region18: #{lstm_model_forward.1} parent=1 // pred_check
      _
    $region19: #{lstm_model_forward.1} parent=1 // pred_check_branch
      %25 = sbr.rel (0) target = $region21
    $region20: #{lstm_model_forward.1} parent=1 // pred_region
      _
    $region21: #{lstm_model_forward.1} parent=1 // pred_fallthru
      _
    // Predicated region
    $region22: #{lstm_model_forward.1} parent=1 // pred_check
      _
    $region23: #{lstm_model_forward.1} parent=1 // pred_check_branch
      %27 = sbr.rel (0) target = $region25
    $region24: #{lstm_model_forward.1} parent=1 // pred_region
      %29 = vsyncadd [#allocation5], 0
      %s31 = sshll.u32 %s5, 4
      %s32 = int_to_ptr.hbm [resolvable:$true] %s31
      %s33 = sshll.u32 [#allocation4], 4
      %s34 = int_to_ptr.vmem [resolvable:$true] %s33
      %36 = dma.hbm_to_vmem [thread:$0]  %s32, 32, %s34, [#allocation5]
    $region25: #{lstm_model_forward.1} parent=1 // pred_fallthru
      _
    // Predicated region
    $region26: #{lstm_model_forward.1} parent=1 // pred_check
      _
    $region27: #{lstm_model_forward.1} parent=1 // pred_check_branch
      %38 = sbr.rel (0) target = $region29
    $region28: #{lstm_model_forward.1} parent=1 // pred_region
      %40 = vsyncadd [#allocation7], 0
      %s41 = sshll.u32 %s6, 4
      %s42 = int_to_ptr.hbm [resolvable:$true] %s41
      %s43 = sshll.u32 [#allocation6], 4
      %s44 = int_to_ptr.vmem [resolvable:$true] %s43
      %49 = dma.hbm_to_vmem [thread:$0]  %s42, 1024, %s44, [#allocation7], 128, 128, 8
    $region29: #{lstm_model_forward.1} parent=1 // pred_fallthru
      _
    // Predicated region
    $region30: #{lstm_model_forward.1} parent=1 // pred_check
      _
    $region31: #{lstm_model_forward.1} parent=1 // pred_check_branch
      %51 = sbr.rel (0) target = $region33
    $region32: #{lstm_model_forward.1} parent=1 // pred_region
      _
    $region33: #{lstm_model_forward.1} parent=1 // pred_fallthru
      _
    // Predicated region
    $region34: #{lstm_model_forward.1} parent=1 // pred_check
      _
    $region35: #{lstm_model_forward.1} parent=1 // pred_check_branch
      %53 = sbr.rel (0) target = $region37
    $region36: #{lstm_model_forward.1} parent=1 // pred_region
      _
    $region37: #{lstm_model_forward.1} parent=1 // pred_fallthru
      _
    // Predicated region
    $region38: #{lstm_model_forward.1} parent=1 // pred_check
      _
    $region39: #{lstm_model_forward.1} parent=1 // pred_check_branch
      %55 = sbr.rel (0) target = $region41
    $region40: #{lstm_model_forward.1} parent=1 // pred_region
      %57 = dma.done [#allocation5], 32
    $region41: #{lstm_model_forward.1} parent=1 // pred_fallthru
      _
    // Predicated region
    $region42: #{lstm_model_forward.1} parent=1 // pred_check
      _
    $region43: #{lstm_model_forward.1} parent=1 // pred_check_branch
      %59 = sbr.rel (0) target = $region45
    $region44: #{lstm_model_forward.1} parent=1 // pred_region
      %61 = dma.done [#allocation7], 1024
    $region45: #{lstm_model_forward.1} parent=1 // pred_fallthru
      _
    %v63 = vld [vmem:[%s0] sm:$0xff]
    %v64 = vld [vmem:[%s0 + $0x8] sm:$0xff]
    %v65 = vld [vmem:[%s0 + $0x10] sm:$0xff]
    %v66 = vld [vmem:[%s0 + $0x18] sm:$0xff]
    %v67 = vld [vmem:[%s0 + $0x20] sm:$0xff]
    %v68 = vld [vmem:[%s0 + $0x28] sm:$0xff]
    %v69 = vld [vmem:[%s0 + $0x30] sm:$0xff]
    %v70 = vld [vmem:[%s0 + $0x38] sm:$0xff]
    %v71 = vpack.c.bf16 %v64, %v63
    %v72 = vpack.c.bf16 %v66, %v65
    %v73 = vpack.c.bf16 %v68, %v67
    %v74 = vpack.c.bf16 %v70, %v69
    %v75 = vld [vmem:[%s1] sm:$0xff]
    %v76 = vld [vmem:[%s1 + $0x8] sm:$0xff]
    %v77 = vld [vmem:[%s2] sm:$0x3]
    %v79 = vperm.slane %v77, 0
    %v80 = vperm.slane %v77, 1
    %v85 = vunpack.c.l.b16 %v75
    %v86 = vunpack.c.h.b16 %v75
    %v87 = vunpack.c.l.b16 %v76
    %v88 = vunpack.c.h.b16 %v76
    %v89 = vpack.c.b16 %v87, %v85
    %v90 = vpack.c.b16 %v88, %v86
    %vm93 = vcmask 130048
    %v95 = vsel %vm93, %v71, 0
    %v98 = vsel %vm93, %v72, 0
    %v101 = vsel %vm93, %v73, 0
    %v104 = vsel %vm93, %v74, 0
    %106 = vmatpush.bf16.msra.mxu0 0
    %107 = vmatpush.bf16.msra.mxu0 0
    %108 = vmatpush.bf16.msra.mxu0 0
    %109 = vmatpush.bf16.msra.mxu0 0
    %110 = vmatpush.bf16.msra.mxu0 0
    %111 = vmatpush.bf16.msra.mxu0 0
    %112 = vmatpush.bf16.msra.mxu0 0
    %113 = vmatpush.bf16.msra.mxu0 %v89
    %114 = vmatmul.bf16.gmra.mxu0 %v95
    %v115 = vpop.f32.mrf.mxu0
    %v116 = vadd.f32 %v79, %v115
    %v117 = vpop.f32.mrf.mxu0
    %v118 = vadd.f32 %v79, %v117
    %119 = vmatmul.bf16.gmra.mxu0 %v98
    %v120 = vpop.f32.mrf.mxu0
    %v121 = vadd.f32 %v79, %v120
    %v122 = vpop.f32.mrf.mxu0
    %v123 = vadd.f32 %v79, %v122
    %124 = vmatmul.bf16.gmra.mxu0 %v101
    %v125 = vpop.f32.mrf.mxu0
    %v126 = vadd.f32 %v79, %v125
    %v127 = vpop.f32.mrf.mxu0
    %v128 = vadd.f32 %v79, %v127
    %129 = vmatmul.bf16.gmra.mxu0 %v104
    %v130 = vpop.f32.mrf.mxu0
    %v131 = vadd.f32 %v79, %v130
    %v132 = vpop.f32.mrf.mxu0
    %v133 = vadd.f32 %v79, %v132
    %134 = vdwg.mxu0
    %135 = vmatpush.bf16.msra.mxu0 0
    %136 = vmatpush.bf16.msra.mxu0 0
    %137 = vmatpush.bf16.msra.mxu0 0
    %138 = vmatpush.bf16.msra.mxu0 0
    %139 = vmatpush.bf16.msra.mxu0 0
    %140 = vmatpush.bf16.msra.mxu0 0
    %141 = vmatpush.bf16.msra.mxu0 0
    %142 = vmatpush.bf16.msra.mxu0 %v90
    %143 = vmatmul.bf16.gmra.mxu0 %v95
    %v144 = vpop.f32.mrf.mxu0
    %v145 = vadd.f32 %v80, %v144
    %v146 = vpop.f32.mrf.mxu0
    %v147 = vadd.f32 %v80, %v146
    %148 = vmatmul.bf16.gmra.mxu0 %v98
    %v149 = vpop.f32.mrf.mxu0
    %v150 = vadd.f32 %v80, %v149
    %v151 = vpop.f32.mrf.mxu0
    %v152 = vadd.f32 %v80, %v151
    %153 = vmatmul.bf16.gmra.mxu0 %v101
    %v154 = vpop.f32.mrf.mxu0
    %v155 = vadd.f32 %v80, %v154
    %v156 = vpop.f32.mrf.mxu0
    %v157 = vadd.f32 %v80, %v156
    %158 = vmatmul.bf16.gmra.mxu0 %v104
    %v159 = vpop.f32.mrf.mxu0
    %v160 = vadd.f32 %v80, %v159
    %v161 = vpop.f32.mrf.mxu0
    %v162 = vadd.f32 %v80, %v161
    %163 = vdwg.mxu0
    %164 = vst [vmem:[#allocation2] sm:$0xff] %v116
    %165 = vst [vmem:[#allocation2 + $0x8] sm:$0xff] %v145
    %166 = vst [vmem:[#allocation2 + $0x10] sm:$0xff] %v118
    %167 = vst [vmem:[#allocation2 + $0x18] sm:$0xff] %v147
    %168 = vst [vmem:[#allocation2 + $0x20] sm:$0xff] %v121
    %169 = vst [vmem:[#allocation2 + $0x28] sm:$0xff] %v150
    %170 = vst [vmem:[#allocation2 + $0x30] sm:$0xff] %v123
    %171 = vst [vmem:[#allocation2 + $0x38] sm:$0xff] %v152
    %172 = vst [vmem:[#allocation2 + $0x40] sm:$0xff] %v126
    %173 = vst [vmem:[#allocation2 + $0x48] sm:$0xff] %v155
    %174 = vst [vmem:[#allocation2 + $0x50] sm:$0xff] %v128
    %175 = vst [vmem:[#allocation2 + $0x58] sm:$0xff] %v157
    %176 = vst [vmem:[#allocation2 + $0x60] sm:$0xff] %v131
    %177 = vst [vmem:[#allocation2 + $0x68] sm:$0xff] %v160
    %178 = vst [vmem:[#allocation2 + $0x70] sm:$0xff] %v133
    %179 = vst [vmem:[#allocation2 + $0x78] sm:$0xff] %v162
    %v180 = vld [vmem:[%s3] sm:$0xff]
    %v181 = vld [vmem:[%s3 + $0x8] sm:$0xff]
    %v182 = vld [vmem:[%s3 + $0x10] sm:$0xff]
    %v183 = vld [vmem:[%s3 + $0x18] sm:$0xff]
    %v184 = vld [vmem:[%s3 + $0x20] sm:$0xff]
    %v185 = vld [vmem:[%s3 + $0x28] sm:$0xff]
    %v186 = vld [vmem:[%s3 + $0x30] sm:$0xff]
    %v187 = vld [vmem:[%s3 + $0x38] sm:$0xff]
    %v196 = vunpack.c.l.b16 %v180
    %v197 = vunpack.c.h.b16 %v180
    %v198 = vunpack.c.l.b16 %v181
    %v199 = vunpack.c.h.b16 %v181
    %v200 = vunpack.c.l.b16 %v182
    %v201 = vunpack.c.h.b16 %v182
    %v202 = vunpack.c.l.b16 %v183
    %v203 = vunpack.c.h.b16 %v183
    %v204 = vunpack.c.l.b16 %v184
    %v205 = vunpack.c.h.b16 %v184
    %v206 = vunpack.c.l.b16 %v185
    %v207 = vunpack.c.h.b16 %v185
    %v208 = vunpack.c.l.b16 %v186
    %v209 = vunpack.c.h.b16 %v186
    %v210 = vunpack.c.l.b16 %v187
    %v211 = vunpack.c.h.b16 %v187
    %v212 = vpack.c.b16 %v198, %v196
    %v213 = vpack.c.b16 %v199, %v197
    %v214 = vpack.c.b16 %v202, %v200
    %v215 = vpack.c.b16 %v203, %v201
    %v216 = vpack.c.b16 %v206, %v204
    %v217 = vpack.c.b16 %v207, %v205
    %v218 = vpack.c.b16 %v210, %v208
    %v219 = vpack.c.b16 %v211, %v209
    %vm228 = vcmask 523264
    %v230 = vsel %vm228, 0, 0
    %232 = vmatpush.bf16.msra.mxu0 0
    %233 = vmatpush.bf16.msra.mxu0 0
    %234 = vmatpush.bf16.msra.mxu0 0
    %235 = vmatpush.bf16.msra.mxu0 0
    %236 = vmatpush.bf16.msra.mxu0 %v218
    %237 = vmatpush.bf16.msra.mxu0 %v216
    %238 = vmatpush.bf16.msra.mxu0 %v214
    %239 = vmatpush.bf16.msra.mxu0 %v212
    %240 = vmatmul.bf16.gmra.mxu0 %v230
    %v241 = vpop.f32.mrf.mxu0
    %v242 = vadd.f32 0.0, %v241
    %v243 = vpop.f32.mrf.mxu0
    %244 = vdwg.mxu0
    %245 = vmatpush.bf16.msra.mxu0 0
    %246 = vmatpush.bf16.msra.mxu0 0
    %247 = vmatpush.bf16.msra.mxu0 0
    %248 = vmatpush.bf16.msra.mxu0 0
    %249 = vmatpush.bf16.msra.mxu0 %v219
    %250 = vmatpush.bf16.msra.mxu0 %v217
    %251 = vmatpush.bf16.msra.mxu0 %v215
    %252 = vmatpush.bf16.msra.mxu0 %v213
    %253 = vmatmul.bf16.gmra.mxu0 %v230
    %v254 = vpop.f32.mrf.mxu0
    %v255 = vadd.f32 0.0, %v254
    %v256 = vpop.f32.mrf.mxu0
    %257 = vdwg.mxu0
    %s258 = smul.u32 0, 2
    %s259 = smul.addr %s258, 8
    %s260 = scalar_lea.vmem [#allocation2], %s259
    %v261 = vld [vmem:[%s260] sm:$0xff]
    %v262 = vadd.f32 %v261, %v242
    %s263 = smul.u32 7, 2
    %s264 = smul.addr %s263, 8
    %s265 = scalar_lea.vmem [#allocation2], %s264
    %v266 = vld [vmem:[%s265 + $0x8] sm:$0xff]
    %v267 = vadd.f32 %v266, %v255
    %v268 = vxor.u32 %v262, 2147483648
    %v269 = vmul.f32 %v268, 1.442695
    %v270 = vpow.pop %v269
    %v271 = vadd.f32 %v270, 1.0
    %v272 = vrcp.pop %v271
    %v273 = vmul.f32 %v271, %v272
    %v274 = vsub.f32 1.0, %v273
    %v275 = vmul.f32 %v272, %v274
    %v276 = vadd.f32 %v272, %v275
    %vm277 = vweird.f32 %v271
    %vm278 = vweird.f32 %v272
    %vm279 = vmor %vm277, %vm278
    %v280 = vsel %vm279, %v272, %v276
    %v281 = vand.u32 2147483647, %v271
    %vm282 = vcmp.eq.f32.partialorder %v281, 8.507059e+37
    %v283 = vand.u32 %v271, 2147483648
    %v284 = vor.u32 1.1754944e-38, %v283
    %v285 = vsel %vm282, %v284, %v280
    %v286 = vmul.f32 1.0, %v285
    %v287 = vtanh.pop %v262
    %v288 = vmul.f32 %v286, 0.0
    %290 = vrot.lane.b32.xlu0 %v287, 64
    %v291 = vpop.permute.xlu0 %290
    %v293 = vmul.f32 %v286, %v291
    %295 = vrot.lane.b32.xlu0 %v293, 32
    %v296 = vpop.permute.xlu0 %295
    %v298 = vadd.f32 %v288, %v296
    %v299 = vtanh.pop %v298
    %301 = vrot.lane.b32.xlu0 %v299, 64
    %v302 = vpop.permute.xlu0 %301
    %v304 = vmul.f32 %v286, %v302
    %v305 = vxor.u32 %v267, 2147483648
    %v306 = vmul.f32 %v305, 1.442695
    %v307 = vpow.pop %v306
    %v308 = vadd.f32 %v307, 1.0
    %v309 = vrcp.pop %v308
    %v310 = vmul.f32 %v308, %v309
    %v311 = vsub.f32 1.0, %v310
    %v312 = vmul.f32 %v309, %v311
    %v313 = vadd.f32 %v309, %v312
    %vm314 = vweird.f32 %v308
    %vm315 = vweird.f32 %v309
    %vm316 = vmor %vm314, %vm315
    %v317 = vsel %vm316, %v309, %v313
    %v318 = vand.u32 2147483647, %v308
    %vm319 = vcmp.eq.f32.partialorder %v318, 8.507059e+37
    %v320 = vand.u32 %v308, 2147483648
    %v321 = vor.u32 1.1754944e-38, %v320
    %v322 = vsel %vm319, %v321, %v317
    %v323 = vmul.f32 1.0, %v322
    %v324 = vtanh.pop %v267
    %v325 = vmul.f32 %v323, 0.0
    %327 = vrot.lane.b32.xlu0 %v324, 64
    %v328 = vpop.permute.xlu0 %327
    %v330 = vmul.f32 %v323, %v328
    %332 = vrot.lane.b32.xlu0 %v330, 32
    %v333 = vpop.permute.xlu0 %332
    %v335 = vadd.f32 %v325, %v333
    %v336 = vtanh.pop %v335
    %338 = vrot.lane.b32.xlu0 %v336, 64
    %v339 = vpop.permute.xlu0 %338
    %v341 = vmul.f32 %v323, %v339
    %343 = vrot.lane.b32.xlu0 %v304, 32
    %v344 = vpop.permute.xlu0 %343
    %vm346 = vcmask 261120
    %347 = vst.msk [vmem:[#allocation3] sm:$0xff] %vm346, %v344
    %349 = vrot.lane.b32.xlu0 %v341, 64
    %v350 = vpop.permute.xlu0 %349
    %s352 = scalar_lea.vmem [#allocation3], 56
    %vm353 = vcmask 523520
    %354 = vst.msk [vmem:[%s352] sm:$0xff] %vm353, %v350
    %v355 = vsel %vm346, %v344, %v350
    %v356 = vpack.c.bf16 %v355, %v355
    %v358 = vsel %vm228, %v356, 0
    %360 = vmatpush.bf16.msra.mxu0 0
    %361 = vmatpush.bf16.msra.mxu0 0
    %362 = vmatpush.bf16.msra.mxu0 0
    %363 = vmatpush.bf16.msra.mxu0 0
    %364 = vmatpush.bf16.msra.mxu0 %v218
    %365 = vmatpush.bf16.msra.mxu0 %v216
    %366 = vmatpush.bf16.msra.mxu0 %v214
    %367 = vmatpush.bf16.msra.mxu0 %v212
    %368 = vmatmul.bf16.gmra.mxu0 %v358
    %v369 = vpop.f32.mrf.mxu0
    %v370 = vadd.f32 0.0, %v369
    %v371 = vpop.f32.mrf.mxu0
    %372 = vdwg.mxu0
    %373 = vmatpush.bf16.msra.mxu0 0
    %374 = vmatpush.bf16.msra.mxu0 0
    %375 = vmatpush.bf16.msra.mxu0 0
    %376 = vmatpush.bf16.msra.mxu0 0
    %377 = vmatpush.bf16.msra.mxu0 %v219
    %378 = vmatpush.bf16.msra.mxu0 %v217
    %379 = vmatpush.bf16.msra.mxu0 %v215
    %380 = vmatpush.bf16.msra.mxu0 %v213
    %381 = vmatmul.bf16.gmra.mxu0 %v358
    %v382 = vpop.f32.mrf.mxu0
    %v383 = vadd.f32 0.0, %v382
    %v384 = vpop.f32.mrf.mxu0
    %385 = vdwg.mxu0
    %s386 = smul.u32 1, 2
    %s387 = smul.addr %s386, 8
    %s388 = scalar_lea.vmem [#allocation2], %s387
    %v389 = vld [vmem:[%s388] sm:$0xff]
    %v390 = vadd.f32 %v389, %v370
    %s391 = smul.u32 6, 2
    %s392 = smul.addr %s391, 8
    %s393 = scalar_lea.vmem [#allocation2], %s392
    %v394 = vld [vmem:[%s393 + $0x8] sm:$0xff]
    %v395 = vadd.f32 %v394, %v383
    %v396 = vxor.u32 %v390, 2147483648
    %v397 = vmul.f32 %v396, 1.442695
    %v398 = vpow.pop %v397
    %v399 = vadd.f32 %v398, 1.0
    %v400 = vrcp.pop %v399
    %v401 = vmul.f32 %v399, %v400
    %v402 = vsub.f32 1.0, %v401
    %v403 = vmul.f32 %v400, %v402
    %v404 = vadd.f32 %v400, %v403
    %vm405 = vweird.f32 %v399
    %vm406 = vweird.f32 %v400
    %vm407 = vmor %vm405, %vm406
    %v408 = vsel %vm407, %v400, %v404
    %v409 = vand.u32 2147483647, %v399
    %vm410 = vcmp.eq.f32.partialorder %v409, 8.507059e+37
    %v411 = vand.u32 %v399, 2147483648
    %v412 = vor.u32 1.1754944e-38, %v411
    %v413 = vsel %vm410, %v412, %v408
    %v414 = vmul.f32 1.0, %v413
    %v415 = vtanh.pop %v390
    %v416 = vmul.f32 %v414, %v298
    %418 = vrot.lane.b32.xlu0 %v415, 64
    %v419 = vpop.permute.xlu0 %418
    %v421 = vmul.f32 %v414, %v419
    %423 = vrot.lane.b32.xlu0 %v421, 32
    %v424 = vpop.permute.xlu0 %423
    %v426 = vadd.f32 %v416, %v424
    %v427 = vtanh.pop %v426
    %429 = vrot.lane.b32.xlu0 %v427, 64
    %v430 = vpop.permute.xlu0 %429
    %v432 = vmul.f32 %v414, %v430
    %v433 = vxor.u32 %v395, 2147483648
    %v434 = vmul.f32 %v433, 1.442695
    %v435 = vpow.pop %v434
    %v436 = vadd.f32 %v435, 1.0
    %v437 = vrcp.pop %v436
    %v438 = vmul.f32 %v436, %v437
    %v439 = vsub.f32 1.0, %v438
    %v440 = vmul.f32 %v437, %v439
    %v441 = vadd.f32 %v437, %v440
    %vm442 = vweird.f32 %v436
    %vm443 = vweird.f32 %v437
    %vm444 = vmor %vm442, %vm443
    %v445 = vsel %vm444, %v437, %v441
    %v446 = vand.u32 2147483647, %v436
    %vm447 = vcmp.eq.f32.partialorder %v446, 8.507059e+37
    %v448 = vand.u32 %v436, 2147483648
    %v449 = vor.u32 1.1754944e-38, %v448
    %v450 = vsel %vm447, %v449, %v445
    %v451 = vmul.f32 1.0, %v450
    %v452 = vtanh.pop %v395
    %v453 = vmul.f32 %v451, %v335
    %455 = vrot.lane.b32.xlu0 %v452, 64
    %v456 = vpop.permute.xlu0 %455
    %v458 = vmul.f32 %v451, %v456
    %460 = vrot.lane.b32.xlu0 %v458, 32
    %v461 = vpop.permute.xlu0 %460
    %v463 = vadd.f32 %v453, %v461
    %v464 = vtanh.pop %v463
    %466 = vrot.lane.b32.xlu0 %v464, 64
    %v467 = vpop.permute.xlu0 %466
    %v469 = vmul.f32 %v451, %v467
    %471 = vrot.lane.b32.xlu0 %v432, 32
    %v472 = vpop.permute.xlu0 %471
    %s474 = scalar_lea.vmem [#allocation3], 8
    %475 = vst.msk [vmem:[%s474] sm:$0xff] %vm346, %v472
    %477 = vrot.lane.b32.xlu0 %v469, 64
    %v478 = vpop.permute.xlu0 %477
    %s480 = scalar_lea.vmem [#allocation3], 48
    %481 = vst.msk [vmem:[%s480] sm:$0xff] %vm353, %v478
    %v482 = vsel %vm346, %v472, %v478
    %v483 = vpack.c.bf16 %v482, %v482
    %v485 = vsel %vm228, %v483, 0
    %487 = vmatpush.bf16.msra.mxu0 0
    %488 = vmatpush.bf16.msra.mxu0 0
    %489 = vmatpush.bf16.msra.mxu0 0
    %490 = vmatpush.bf16.msra.mxu0 0
    %491 = vmatpush.bf16.msra.mxu0 %v218
    %492 = vmatpush.bf16.msra.mxu0 %v216
    %493 = vmatpush.bf16.msra.mxu0 %v214
    %494 = vmatpush.bf16.msra.mxu0 %v212
    %495 = vmatmul.bf16.gmra.mxu0 %v485
    %v496 = vpop.f32.mrf.mxu0
    %v497 = vadd.f32 0.0, %v496
    %v498 = vpop.f32.mrf.mxu0
    %499 = vdwg.mxu0
    %500 = vmatpush.bf16.msra.mxu0 0
    %501 = vmatpush.bf16.msra.mxu0 0
    %502 = vmatpush.bf16.msra.mxu0 0
    %503 = vmatpush.bf16.msra.mxu0 0
    %504 = vmatpush.bf16.msra.mxu0 %v219
    %505 = vmatpush.bf16.msra.mxu0 %v217
    %506 = vmatpush.bf16.msra.mxu0 %v215
    %507 = vmatpush.bf16.msra.mxu0 %v213
    %508 = vmatmul.bf16.gmra.mxu0 %v485
    %v509 = vpop.f32.mrf.mxu0
    %v510 = vadd.f32 0.0, %v509
    %v511 = vpop.f32.mrf.mxu0
    %512 = vdwg.mxu0
    %s513 = smul.u32 2, 2
    %s514 = smul.addr %s513, 8
    %s515 = scalar_lea.vmem [#allocation2], %s514
    %v516 = vld [vmem:[%s515] sm:$0xff]
    %v517 = vadd.f32 %v516, %v497
    %s518 = smul.u32 5, 2
    %s519 = smul.addr %s518, 8
    %s520 = scalar_lea.vmem [#allocation2], %s519
    %v521 = vld [vmem:[%s520 + $0x8] sm:$0xff]
    %v522 = vadd.f32 %v521, %v510
    %v523 = vxor.u32 %v517, 2147483648
    %v524 = vmul.f32 %v523, 1.442695
    %v525 = vpow.pop %v524
    %v526 = vadd.f32 %v525, 1.0
    %v527 = vrcp.pop %v526
    %v528 = vmul.f32 %v526, %v527
    %v529 = vsub.f32 1.0, %v528
    %v530 = vmul.f32 %v527, %v529
    %v531 = vadd.f32 %v527, %v530
    %vm532 = vweird.f32 %v526
    %vm533 = vweird.f32 %v527
    %vm534 = vmor %vm532, %vm533
    %v535 = vsel %vm534, %v527, %v531
    %v536 = vand.u32 2147483647, %v526
    %vm537 = vcmp.eq.f32.partialorder %v536, 8.507059e+37
    %v538 = vand.u32 %v526, 2147483648
    %v539 = vor.u32 1.1754944e-38, %v538
    %v540 = vsel %vm537, %v539, %v535
    %v541 = vmul.f32 1.0, %v540
    %v542 = vtanh.pop %v517
    %v543 = vmul.f32 %v541, %v426
    %545 = vrot.lane.b32.xlu0 %v542, 64
    %v546 = vpop.permute.xlu0 %545
    %v548 = vmul.f32 %v541, %v546
    %550 = vrot.lane.b32.xlu0 %v548, 32
    %v551 = vpop.permute.xlu0 %550
    %v553 = vadd.f32 %v543, %v551
    %v554 = vtanh.pop %v553
    %556 = vrot.lane.b32.xlu0 %v554, 64
    %v557 = vpop.permute.xlu0 %556
    %v559 = vmul.f32 %v541, %v557
    %v560 = vxor.u32 %v522, 2147483648
    %v561 = vmul.f32 %v560, 1.442695
    %v562 = vpow.pop %v561
    %v563 = vadd.f32 %v562, 1.0
    %v564 = vrcp.pop %v563
    %v565 = vmul.f32 %v563, %v564
    %v566 = vsub.f32 1.0, %v565
    %v567 = vmul.f32 %v564, %v566
    %v568 = vadd.f32 %v564, %v567
    %vm569 = vweird.f32 %v563
    %vm570 = vweird.f32 %v564
    %vm571 = vmor %vm569, %vm570
    %v572 = vsel %vm571, %v564, %v568
    %v573 = vand.u32 2147483647, %v563
    %vm574 = vcmp.eq.f32.partialorder %v573, 8.507059e+37
    %v575 = vand.u32 %v563, 2147483648
    %v576 = vor.u32 1.1754944e-38, %v575
    %v577 = vsel %vm574, %v576, %v572
    %v578 = vmul.f32 1.0, %v577
    %v579 = vtanh.pop %v522
    %v580 = vmul.f32 %v578, %v463
    %582 = vrot.lane.b32.xlu0 %v579, 64
    %v583 = vpop.permute.xlu0 %582
    %v585 = vmul.f32 %v578, %v583
    %587 = vrot.lane.b32.xlu0 %v585, 32
    %v588 = vpop.permute.xlu0 %587
    %v590 = vadd.f32 %v580, %v588
    %v591 = vtanh.pop %v590
    %593 = vrot.lane.b32.xlu0 %v591, 64
    %v594 = vpop.permute.xlu0 %593
    %v596 = vmul.f32 %v578, %v594
    %598 = vrot.lane.b32.xlu0 %v559, 32
    %v599 = vpop.permute.xlu0 %598
    %s601 = scalar_lea.vmem [#allocation3], 16
    %602 = vst.msk [vmem:[%s601] sm:$0xff] %vm346, %v599
    %604 = vrot.lane.b32.xlu0 %v596, 64
    %v605 = vpop.permute.xlu0 %604
    %s607 = scalar_lea.vmem [#allocation3], 40
    %608 = vst.msk [vmem:[%s607] sm:$0xff] %vm353, %v605
    %v609 = vsel %vm346, %v599, %v605
    %v610 = vpack.c.bf16 %v609, %v609
    %v612 = vsel %vm228, %v610, 0
    %614 = vmatpush.bf16.msra.mxu0 0
    %615 = vmatpush.bf16.msra.mxu0 0
    %616 = vmatpush.bf16.msra.mxu0 0
    %617 = vmatpush.bf16.msra.mxu0 0
    %618 = vmatpush.bf16.msra.mxu0 %v218
    %619 = vmatpush.bf16.msra.mxu0 %v216
    %620 = vmatpush.bf16.msra.mxu0 %v214
    %621 = vmatpush.bf16.msra.mxu0 %v212
    %622 = vmatmul.bf16.gmra.mxu0 %v612
    %v623 = vpop.f32.mrf.mxu0
    %v624 = vadd.f32 0.0, %v623
    %v625 = vpop.f32.mrf.mxu0
    %626 = vdwg.mxu0
    %627 = vmatpush.bf16.msra.mxu0 0
    %628 = vmatpush.bf16.msra.mxu0 0
    %629 = vmatpush.bf16.msra.mxu0 0
    %630 = vmatpush.bf16.msra.mxu0 0
    %631 = vmatpush.bf16.msra.mxu0 %v219
    %632 = vmatpush.bf16.msra.mxu0 %v217
    %633 = vmatpush.bf16.msra.mxu0 %v215
    %634 = vmatpush.bf16.msra.mxu0 %v213
    %635 = vmatmul.bf16.gmra.mxu0 %v612
    %v636 = vpop.f32.mrf.mxu0
    %v637 = vadd.f32 0.0, %v636
    %v638 = vpop.f32.mrf.mxu0
    %639 = vdwg.mxu0
    %s640 = smul.u32 3, 2
    %s641 = smul.addr %s640, 8
    %s642 = scalar_lea.vmem [#allocation2], %s641
    %v643 = vld [vmem:[%s642] sm:$0xff]
    %v644 = vadd.f32 %v643, %v624
    %s645 = smul.u32 4, 2
    %s646 = smul.addr %s645, 8
    %s647 = scalar_lea.vmem [#allocation2], %s646
    %v648 = vld [vmem:[%s647 + $0x8] sm:$0xff]
    %v649 = vadd.f32 %v648, %v637
    %v650 = vxor.u32 %v644, 2147483648
    %v651 = vmul.f32 %v650, 1.442695
    %v652 = vpow.pop %v651
    %v653 = vadd.f32 %v652, 1.0
    %v654 = vrcp.pop %v653
    %v655 = vmul.f32 %v653, %v654
    %v656 = vsub.f32 1.0, %v655
    %v657 = vmul.f32 %v654, %v656
    %v658 = vadd.f32 %v654, %v657
    %vm659 = vweird.f32 %v653
    %vm660 = vweird.f32 %v654
    %vm661 = vmor %vm659, %vm660
    %v662 = vsel %vm661, %v654, %v658
    %v663 = vand.u32 2147483647, %v653
    %vm664 = vcmp.eq.f32.partialorder %v663, 8.507059e+37
    %v665 = vand.u32 %v653, 2147483648
    %v666 = vor.u32 1.1754944e-38, %v665
    %v667 = vsel %vm664, %v666, %v662
    %v668 = vmul.f32 1.0, %v667
    %v669 = vtanh.pop %v644
    %v670 = vmul.f32 %v668, %v553
    %672 = vrot.lane.b32.xlu0 %v669, 64
    %v673 = vpop.permute.xlu0 %672
    %v675 = vmul.f32 %v668, %v673
    %677 = vrot.lane.b32.xlu0 %v675, 32
    %v678 = vpop.permute.xlu0 %677
    %v680 = vadd.f32 %v670, %v678
    %v681 = vtanh.pop %v680
    %683 = vrot.lane.b32.xlu0 %v681, 64
    %v684 = vpop.permute.xlu0 %683
    %v686 = vmul.f32 %v668, %v684
    %v687 = vxor.u32 %v649, 2147483648
    %v688 = vmul.f32 %v687, 1.442695
    %v689 = vpow.pop %v688
    %v690 = vadd.f32 %v689, 1.0
    %v691 = vrcp.pop %v690
    %v692 = vmul.f32 %v690, %v691
    %v693 = vsub.f32 1.0, %v692
    %v694 = vmul.f32 %v691, %v693
    %v695 = vadd.f32 %v691, %v694
    %vm696 = vweird.f32 %v690
    %vm697 = vweird.f32 %v691
    %vm698 = vmor %vm696, %vm697
    %v699 = vsel %vm698, %v691, %v695
    %v700 = vand.u32 2147483647, %v690
    %vm701 = vcmp.eq.f32.partialorder %v700, 8.507059e+37
    %v702 = vand.u32 %v690, 2147483648
    %v703 = vor.u32 1.1754944e-38, %v702
    %v704 = vsel %vm701, %v703, %v699
    %v705 = vmul.f32 1.0, %v704
    %v706 = vtanh.pop %v649
    %v707 = vmul.f32 %v705, %v590
    %709 = vrot.lane.b32.xlu0 %v706, 64
    %v710 = vpop.permute.xlu0 %709
    %v712 = vmul.f32 %v705, %v710
    %714 = vrot.lane.b32.xlu0 %v712, 32
    %v715 = vpop.permute.xlu0 %714
    %v717 = vadd.f32 %v707, %v715
    %v718 = vtanh.pop %v717
    %720 = vrot.lane.b32.xlu0 %v718, 64
    %v721 = vpop.permute.xlu0 %720
    %v723 = vmul.f32 %v705, %v721
    %725 = vrot.lane.b32.xlu0 %v686, 32
    %v726 = vpop.permute.xlu0 %725
    %s728 = scalar_lea.vmem [#allocation3], 24
    %729 = vst.msk [vmem:[%s728] sm:$0xff] %vm346, %v726
    %731 = vrot.lane.b32.xlu0 %v723, 64
    %v732 = vpop.permute.xlu0 %731
    %s734 = scalar_lea.vmem [#allocation3], 32
    %735 = vst.msk [vmem:[%s734] sm:$0xff] %vm353, %v732
    %v736 = vsel %vm346, %v726, %v732
    %v737 = vpack.c.bf16 %v736, %v736
    %v739 = vsel %vm228, %v737, 0
    %741 = vmatpush.bf16.msra.mxu0 0
    %742 = vmatpush.bf16.msra.mxu0 0
    %743 = vmatpush.bf16.msra.mxu0 0
    %744 = vmatpush.bf16.msra.mxu0 0
    %745 = vmatpush.bf16.msra.mxu0 %v218
    %746 = vmatpush.bf16.msra.mxu0 %v216
    %747 = vmatpush.bf16.msra.mxu0 %v214
    %748 = vmatpush.bf16.msra.mxu0 %v212
    %749 = vmatmul.bf16.gmra.mxu0 %v739
    %v750 = vpop.f32.mrf.mxu0
    %v751 = vadd.f32 0.0, %v750
    %v752 = vpop.f32.mrf.mxu0
    %753 = vdwg.mxu0
    %754 = vmatpush.bf16.msra.mxu0 0
    %755 = vmatpush.bf16.msra.mxu0 0
    %756 = vmatpush.bf16.msra.mxu0 0
    %757 = vmatpush.bf16.msra.mxu0 0
    %758 = vmatpush.bf16.msra.mxu0 %v219
    %759 = vmatpush.bf16.msra.mxu0 %v217
    %760 = vmatpush.bf16.msra.mxu0 %v215
    %761 = vmatpush.bf16.msra.mxu0 %v213
    %762 = vmatmul.bf16.gmra.mxu0 %v739
    %v763 = vpop.f32.mrf.mxu0
    %v764 = vadd.f32 0.0, %v763
    %v765 = vpop.f32.mrf.mxu0
    %766 = vdwg.mxu0
    %v767 = vld [vmem:[%s647] sm:$0xff]
    %v768 = vadd.f32 %v767, %v751
    %v769 = vld [vmem:[%s642 + $0x8] sm:$0xff]
    %v770 = vadd.f32 %v769, %v764
    %v771 = vxor.u32 %v768, 2147483648
    %v772 = vmul.f32 %v771, 1.442695
    %v773 = vpow.pop %v772
    %v774 = vadd.f32 %v773, 1.0
    %v775 = vrcp.pop %v774
    %v776 = vmul.f32 %v774, %v775
    %v777 = vsub.f32 1.0, %v776
    %v778 = vmul.f32 %v775, %v777
    %v779 = vadd.f32 %v775, %v778
    %vm780 = vweird.f32 %v774
    %vm781 = vweird.f32 %v775
    %vm782 = vmor %vm780, %vm781
    %v783 = vsel %vm782, %v775, %v779
    %v784 = vand.u32 2147483647, %v774
    %vm785 = vcmp.eq.f32.partialorder %v784, 8.507059e+37
    %v786 = vand.u32 %v774, 2147483648
    %v787 = vor.u32 1.1754944e-38, %v786
    %v788 = vsel %vm785, %v787, %v783
    %v789 = vmul.f32 1.0, %v788
    %v790 = vtanh.pop %v768
    %v791 = vmul.f32 %v789, %v680
    %793 = vrot.lane.b32.xlu0 %v790, 64
    %v794 = vpop.permute.xlu0 %793
    %v796 = vmul.f32 %v789, %v794
    %798 = vrot.lane.b32.xlu0 %v796, 32
    %v799 = vpop.permute.xlu0 %798
    %v801 = vadd.f32 %v791, %v799
    %v802 = vtanh.pop %v801
    %804 = vrot.lane.b32.xlu0 %v802, 64
    %v805 = vpop.permute.xlu0 %804
    %v807 = vmul.f32 %v789, %v805
    %v808 = vxor.u32 %v770, 2147483648
    %v809 = vmul.f32 %v808, 1.442695
    %v810 = vpow.pop %v809
    %v811 = vadd.f32 %v810, 1.0
    %v812 = vrcp.pop %v811
    %v813 = vmul.f32 %v811, %v812
    %v814 = vsub.f32 1.0, %v813
    %v815 = vmul.f32 %v812, %v814
    %v816 = vadd.f32 %v812, %v815
    %vm817 = vweird.f32 %v811
    %vm818 = vweird.f32 %v812
    %vm819 = vmor %vm817, %vm818
    %v820 = vsel %vm819, %v812, %v816
    %v821 = vand.u32 2147483647, %v811
    %vm822 = vcmp.eq.f32.partialorder %v821, 8.507059e+37
    %v823 = vand.u32 %v811, 2147483648
    %v824 = vor.u32 1.1754944e-38, %v823
    %v825 = vsel %vm822, %v824, %v820
    %v826 = vmul.f32 1.0, %v825
    %v827 = vtanh.pop %v770
    %v828 = vmul.f32 %v826, %v717
    %830 = vrot.lane.b32.xlu0 %v827, 64
    %v831 = vpop.permute.xlu0 %830
    %v833 = vmul.f32 %v826, %v831
    %835 = vrot.lane.b32.xlu0 %v833, 32
    %v836 = vpop.permute.xlu0 %835
    %v838 = vadd.f32 %v828, %v836
    %v839 = vtanh.pop %v838
    %841 = vrot.lane.b32.xlu0 %v839, 64
    %v842 = vpop.permute.xlu0 %841
    %v844 = vmul.f32 %v826, %v842
    %846 = vrot.lane.b32.xlu0 %v807, 32
    %v847 = vpop.permute.xlu0 %846
    %849 = vst.msk [vmem:[%s734] sm:$0xff] %vm346, %v847
    %851 = vrot.lane.b32.xlu0 %v844, 64
    %v852 = vpop.permute.xlu0 %851
    %854 = vst.msk [vmem:[%s728] sm:$0xff] %vm353, %v852
    %v855 = vsel %vm346, %v847, %v852
    %v856 = vpack.c.bf16 %v855, %v855
    %v858 = vsel %vm228, %v856, 0
    %860 = vmatpush.bf16.msra.mxu0 0
    %861 = vmatpush.bf16.msra.mxu0 0
    %862 = vmatpush.bf16.msra.mxu0 0
    %863 = vmatpush.bf16.msra.mxu0 0
    %864 = vmatpush.bf16.msra.mxu0 %v218
    %865 = vmatpush.bf16.msra.mxu0 %v216
    %866 = vmatpush.bf16.msra.mxu0 %v214
    %867 = vmatpush.bf16.msra.mxu0 %v212
    %868 = vmatmul.bf16.gmra.mxu0 %v858
    %v869 = vpop.f32.mrf.mxu0
    %v870 = vadd.f32 0.0, %v869
    %v871 = vpop.f32.mrf.mxu0
    %872 = vdwg.mxu0
    %873 = vmatpush.bf16.msra.mxu0 0
    %874 = vmatpush.bf16.msra.mxu0 0
    %875 = vmatpush.bf16.msra.mxu0 0
    %876 = vmatpush.bf16.msra.mxu0 0
    %877 = vmatpush.bf16.msra.mxu0 %v219
    %878 = vmatpush.bf16.msra.mxu0 %v217
    %879 = vmatpush.bf16.msra.mxu0 %v215
    %880 = vmatpush.bf16.msra.mxu0 %v213
    %881 = vmatmul.bf16.gmra.mxu0 %v858
    %v882 = vpop.f32.mrf.mxu0
    %v883 = vadd.f32 0.0, %v882
    %v884 = vpop.f32.mrf.mxu0
    %885 = vdwg.mxu0
    %v886 = vld [vmem:[%s520] sm:$0xff]
    %v887 = vadd.f32 %v886, %v870
    %v888 = vld [vmem:[%s515 + $0x8] sm:$0xff]
    %v889 = vadd.f32 %v888, %v883
    %v890 = vxor.u32 %v887, 2147483648
    %v891 = vmul.f32 %v890, 1.442695
    %v892 = vpow.pop %v891
    %v893 = vadd.f32 %v892, 1.0
    %v894 = vrcp.pop %v893
    %v895 = vmul.f32 %v893, %v894
    %v896 = vsub.f32 1.0, %v895
    %v897 = vmul.f32 %v894, %v896
    %v898 = vadd.f32 %v894, %v897
    %vm899 = vweird.f32 %v893
    %vm900 = vweird.f32 %v894
    %vm901 = vmor %vm899, %vm900
    %v902 = vsel %vm901, %v894, %v898
    %v903 = vand.u32 2147483647, %v893
    %vm904 = vcmp.eq.f32.partialorder %v903, 8.507059e+37
    %v905 = vand.u32 %v893, 2147483648
    %v906 = vor.u32 1.1754944e-38, %v905
    %v907 = vsel %vm904, %v906, %v902
    %v908 = vmul.f32 1.0, %v907
    %v909 = vtanh.pop %v887
    %v910 = vmul.f32 %v908, %v801
    %912 = vrot.lane.b32.xlu0 %v909, 64
    %v913 = vpop.permute.xlu0 %912
    %v915 = vmul.f32 %v908, %v913
    %917 = vrot.lane.b32.xlu0 %v915, 32
    %v918 = vpop.permute.xlu0 %917
    %v920 = vadd.f32 %v910, %v918
    %v921 = vtanh.pop %v920
    %923 = vrot.lane.b32.xlu0 %v921, 64
    %v924 = vpop.permute.xlu0 %923
    %v926 = vmul.f32 %v908, %v924
    %v927 = vxor.u32 %v889, 2147483648
    %v928 = vmul.f32 %v927, 1.442695
    %v929 = vpow.pop %v928
    %v930 = vadd.f32 %v929, 1.0
    %v931 = vrcp.pop %v930
    %v932 = vmul.f32 %v930, %v931
    %v933 = vsub.f32 1.0, %v932
    %v934 = vmul.f32 %v931, %v933
    %v935 = vadd.f32 %v931, %v934
    %vm936 = vweird.f32 %v930
    %vm937 = vweird.f32 %v931
    %vm938 = vmor %vm936, %vm937
    %v939 = vsel %vm938, %v931, %v935
    %v940 = vand.u32 2147483647, %v930
    %vm941 = vcmp.eq.f32.partialorder %v940, 8.507059e+37
    %v942 = vand.u32 %v930, 2147483648
    %v943 = vor.u32 1.1754944e-38, %v942
    %v944 = vsel %vm941, %v943, %v939
    %v945 = vmul.f32 1.0, %v944
    %v946 = vtanh.pop %v889
    %v947 = vmul.f32 %v945, %v838
    %949 = vrot.lane.b32.xlu0 %v946, 64
    %v950 = vpop.permute.xlu0 %949
    %v952 = vmul.f32 %v945, %v950
    %954 = vrot.lane.b32.xlu0 %v952, 32
    %v955 = vpop.permute.xlu0 %954
    %v957 = vadd.f32 %v947, %v955
    %v958 = vtanh.pop %v957
    %960 = vrot.lane.b32.xlu0 %v958, 64
    %v961 = vpop.permute.xlu0 %960
    %v963 = vmul.f32 %v945, %v961
    %965 = vrot.lane.b32.xlu0 %v926, 32
    %v966 = vpop.permute.xlu0 %965
    %968 = vst.msk [vmem:[%s607] sm:$0xff] %vm346, %v966
    %970 = vrot.lane.b32.xlu0 %v963, 64
    %v971 = vpop.permute.xlu0 %970
    %973 = vst.msk [vmem:[%s601] sm:$0xff] %vm353, %v971
    %v974 = vsel %vm346, %v966, %v971
    %v975 = vpack.c.bf16 %v974, %v974
    %v977 = vsel %vm228, %v975, 0
    %979 = vmatpush.bf16.msra.mxu0 0
    %980 = vmatpush.bf16.msra.mxu0 0
    %981 = vmatpush.bf16.msra.mxu0 0
    %982 = vmatpush.bf16.msra.mxu0 0
    %983 = vmatpush.bf16.msra.mxu0 %v218
    %984 = vmatpush.bf16.msra.mxu0 %v216
    %985 = vmatpush.bf16.msra.mxu0 %v214
    %986 = vmatpush.bf16.msra.mxu0 %v212
    %987 = vmatmul.bf16.gmra.mxu0 %v977
    %v988 = vpop.f32.mrf.mxu0
    %v989 = vadd.f32 0.0, %v988
    %v990 = vpop.f32.mrf.mxu0
    %991 = vdwg.mxu0
    %992 = vmatpush.bf16.msra.mxu0 0
    %993 = vmatpush.bf16.msra.mxu0 0
    %994 = vmatpush.bf16.msra.mxu0 0
    %995 = vmatpush.bf16.msra.mxu0 0
    %996 = vmatpush.bf16.msra.mxu0 %v219
    %997 = vmatpush.bf16.msra.mxu0 %v217
    %998 = vmatpush.bf16.msra.mxu0 %v215
    %999 = vmatpush.bf16.msra.mxu0 %v213
    %1000 = vmatmul.bf16.gmra.mxu0 %v977
    %v1001 = vpop.f32.mrf.mxu0
    %v1002 = vadd.f32 0.0, %v1001
    %v1003 = vpop.f32.mrf.mxu0
    %1004 = vdwg.mxu0
    %v1005 = vld [vmem:[%s393] sm:$0xff]
    %v1006 = vadd.f32 %v1005, %v989
    %v1007 = vld [vmem:[%s388 + $0x8] sm:$0xff]
    %v1008 = vadd.f32 %v1007, %v1002
    %v1009 = vxor.u32 %v1006, 2147483648
    %v1010 = vmul.f32 %v1009, 1.442695
    %v1011 = vpow.pop %v1010
    %v1012 = vadd.f32 %v1011, 1.0
    %v1013 = vrcp.pop %v1012
    %v1014 = vmul.f32 %v1012, %v1013
    %v1015 = vsub.f32 1.0, %v1014
    %v1016 = vmul.f32 %v1013, %v1015
    %v1017 = vadd.f32 %v1013, %v1016
    %vm1018 = vweird.f32 %v1012
    %vm1019 = vweird.f32 %v1013
    %vm1020 = vmor %vm1018, %vm1019
    %v1021 = vsel %vm1020, %v1013, %v1017
    %v1022 = vand.u32 2147483647, %v1012
    %vm1023 = vcmp.eq.f32.partialorder %v1022, 8.507059e+37
    %v1024 = vand.u32 %v1012, 2147483648
    %v1025 = vor.u32 1.1754944e-38, %v1024
    %v1026 = vsel %vm1023, %v1025, %v1021
    %v1027 = vmul.f32 1.0, %v1026
    %v1028 = vtanh.pop %v1006
    %v1029 = vmul.f32 %v1027, %v920
    %1031 = vrot.lane.b32.xlu0 %v1028, 64
    %v1032 = vpop.permute.xlu0 %1031
    %v1034 = vmul.f32 %v1027, %v1032
    %1036 = vrot.lane.b32.xlu0 %v1034, 32
    %v1037 = vpop.permute.xlu0 %1036
    %v1039 = vadd.f32 %v1029, %v1037
    %v1040 = vtanh.pop %v1039
    %1042 = vrot.lane.b32.xlu0 %v1040, 64
    %v1043 = vpop.permute.xlu0 %1042
    %v1045 = vmul.f32 %v1027, %v1043
    %v1046 = vxor.u32 %v1008, 2147483648
    %v1047 = vmul.f32 %v1046, 1.442695
    %v1048 = vpow.pop %v1047
    %v1049 = vadd.f32 %v1048, 1.0
    %v1050 = vrcp.pop %v1049
    %v1051 = vmul.f32 %v1049, %v1050
    %v1052 = vsub.f32 1.0, %v1051
    %v1053 = vmul.f32 %v1050, %v1052
    %v1054 = vadd.f32 %v1050, %v1053
    %vm1055 = vweird.f32 %v1049
    %vm1056 = vweird.f32 %v1050
    %vm1057 = vmor %vm1055, %vm1056
    %v1058 = vsel %vm1057, %v1050, %v1054
    %v1059 = vand.u32 2147483647, %v1049
    %vm1060 = vcmp.eq.f32.partialorder %v1059, 8.507059e+37
    %v1061 = vand.u32 %v1049, 2147483648
    %v1062 = vor.u32 1.1754944e-38, %v1061
    %v1063 = vsel %vm1060, %v1062, %v1058
    %v1064 = vmul.f32 1.0, %v1063
    %v1065 = vtanh.pop %v1008
    %v1066 = vmul.f32 %v1064, %v957
    %1068 = vrot.lane.b32.xlu0 %v1065, 64
    %v1069 = vpop.permute.xlu0 %1068
    %v1071 = vmul.f32 %v1064, %v1069
    %1073 = vrot.lane.b32.xlu0 %v1071, 32
    %v1074 = vpop.permute.xlu0 %1073
    %v1076 = vadd.f32 %v1066, %v1074
    %v1077 = vtanh.pop %v1076
    %1079 = vrot.lane.b32.xlu0 %v1077, 64
    %v1080 = vpop.permute.xlu0 %1079
    %v1082 = vmul.f32 %v1064, %v1080
    %1084 = vrot.lane.b32.xlu0 %v1045, 32
    %v1085 = vpop.permute.xlu0 %1084
    %1087 = vst.msk [vmem:[%s480] sm:$0xff] %vm346, %v1085
    %1089 = vrot.lane.b32.xlu0 %v1082, 64
    %v1090 = vpop.permute.xlu0 %1089
    %1092 = vst.msk [vmem:[%s474] sm:$0xff] %vm353, %v1090
    %v1093 = vsel %vm346, %v1085, %v1090
    %v1094 = vpack.c.bf16 %v1093, %v1093
    %v1096 = vsel %vm228, %v1094, 0
    %1098 = vmatpush.bf16.msra.mxu0 0
    %1099 = vmatpush.bf16.msra.mxu0 0
    %1100 = vmatpush.bf16.msra.mxu0 0
    %1101 = vmatpush.bf16.msra.mxu0 0
    %1102 = vmatpush.bf16.msra.mxu0 %v218
    %1103 = vmatpush.bf16.msra.mxu0 %v216
    %1104 = vmatpush.bf16.msra.mxu0 %v214
    %1105 = vmatpush.bf16.msra.mxu0 %v212
    %1106 = vmatmul.bf16.gmra.mxu0 %v1096
    %v1107 = vpop.f32.mrf.mxu0
    %v1108 = vadd.f32 0.0, %v1107
    %v1109 = vpop.f32.mrf.mxu0
    %1110 = vdwg.mxu0
    %1111 = vmatpush.bf16.msra.mxu0 0
    %1112 = vmatpush.bf16.msra.mxu0 0
    %1113 = vmatpush.bf16.msra.mxu0 0
    %1114 = vmatpush.bf16.msra.mxu0 0
    %1115 = vmatpush.bf16.msra.mxu0 %v219
    %1116 = vmatpush.bf16.msra.mxu0 %v217
    %1117 = vmatpush.bf16.msra.mxu0 %v215
    %1118 = vmatpush.bf16.msra.mxu0 %v213
    %1119 = vmatmul.bf16.gmra.mxu0 %v1096
    %v1120 = vpop.f32.mrf.mxu0
    %v1121 = vadd.f32 0.0, %v1120
    %v1122 = vpop.f32.mrf.mxu0
    %1123 = vdwg.mxu0
    %v1124 = vld [vmem:[%s265] sm:$0xff]
    %v1125 = vadd.f32 %v1124, %v1108
    %v1126 = vld [vmem:[%s260 + $0x8] sm:$0xff]
    %v1127 = vadd.f32 %v1126, %v1121
    %v1128 = vxor.u32 %v1125, 2147483648
    %v1129 = vmul.f32 %v1128, 1.442695
    %v1130 = vpow.pop %v1129
    %v1131 = vadd.f32 %v1130, 1.0
    %v1132 = vrcp.pop %v1131
    %v1133 = vmul.f32 %v1131, %v1132
    %v1134 = vsub.f32 1.0, %v1133
    %v1135 = vmul.f32 %v1132, %v1134
    %v1136 = vadd.f32 %v1132, %v1135
    %vm1137 = vweird.f32 %v1131
    %vm1138 = vweird.f32 %v1132
    %vm1139 = vmor %vm1137, %vm1138
    %v1140 = vsel %vm1139, %v1132, %v1136
    %v1141 = vand.u32 2147483647, %v1131
    %vm1142 = vcmp.eq.f32.partialorder %v1141, 8.507059e+37
    %v1143 = vand.u32 %v1131, 2147483648
    %v1144 = vor.u32 1.1754944e-38, %v1143
    %v1145 = vsel %vm1142, %v1144, %v1140
    %v1146 = vmul.f32 1.0, %v1145
    %v1147 = vtanh.pop %v1125
    %v1148 = vmul.f32 %v1146, %v1039
    %1150 = vrot.lane.b32.xlu0 %v1147, 64
    %v1151 = vpop.permute.xlu0 %1150
    %v1153 = vmul.f32 %v1146, %v1151
    %1155 = vrot.lane.b32.xlu0 %v1153, 32
    %v1156 = vpop.permute.xlu0 %1155
    %v1158 = vadd.f32 %v1148, %v1156
    %v1159 = vtanh.pop %v1158
    %1161 = vrot.lane.b32.xlu0 %v1159, 64
    %v1162 = vpop.permute.xlu0 %1161
    %v1164 = vmul.f32 %v1146, %v1162
    %v1165 = vxor.u32 %v1127, 2147483648
    %v1166 = vmul.f32 %v1165, 1.442695
    %v1167 = vpow.pop %v1166
    %v1168 = vadd.f32 %v1167, 1.0
    %v1169 = vrcp.pop %v1168
    %v1170 = vmul.f32 %v1168, %v1169
    %v1171 = vsub.f32 1.0, %v1170
    %v1172 = vmul.f32 %v1169, %v1171
    %v1173 = vadd.f32 %v1169, %v1172
    %vm1174 = vweird.f32 %v1168
    %vm1175 = vweird.f32 %v1169
    %vm1176 = vmor %vm1174, %vm1175
    %v1177 = vsel %vm1176, %v1169, %v1173
    %v1178 = vand.u32 2147483647, %v1168
    %vm1179 = vcmp.eq.f32.partialorder %v1178, 8.507059e+37
    %v1180 = vand.u32 %v1168, 2147483648
    %v1181 = vor.u32 1.1754944e-38, %v1180
    %v1182 = vsel %vm1179, %v1181, %v1177
    %v1183 = vmul.f32 1.0, %v1182
    %v1184 = vtanh.pop %v1127
    %v1185 = vmul.f32 %v1183, %v1076
    %1187 = vrot.lane.b32.xlu0 %v1184, 64
    %v1188 = vpop.permute.xlu0 %1187
    %v1190 = vmul.f32 %v1183, %v1188
    %1192 = vrot.lane.b32.xlu0 %v1190, 32
    %v1193 = vpop.permute.xlu0 %1192
    %v1195 = vadd.f32 %v1185, %v1193
    %v1196 = vtanh.pop %v1195
    %1198 = vrot.lane.b32.xlu0 %v1196, 64
    %v1199 = vpop.permute.xlu0 %1198
    %v1201 = vmul.f32 %v1183, %v1199
    %1203 = vrot.lane.b32.xlu0 %v1164, 32
    %v1204 = vpop.permute.xlu0 %1203
    %1206 = vst.msk [vmem:[%s352] sm:$0xff] %vm346, %v1204
    %1208 = vrot.lane.b32.xlu0 %v1201, 64
    %v1209 = vpop.permute.xlu0 %1208
    %1211 = vst.msk [vmem:[#allocation3] sm:$0xff] %vm353, %v1209
    %v1212 = vld [vmem:[#allocation3] sm:$0xff]
    %v1213 = vld [vmem:[#allocation3 + $0x8] sm:$0xff]
    %v1214 = vld [vmem:[#allocation3 + $0x10] sm:$0xff]
    %v1215 = vld [vmem:[#allocation3 + $0x18] sm:$0xff]
    %v1216 = vld [vmem:[#allocation3 + $0x20] sm:$0xff]
    %v1217 = vld [vmem:[#allocation3 + $0x28] sm:$0xff]
    %v1218 = vld [vmem:[#allocation3 + $0x30] sm:$0xff]
    %v1219 = vld [vmem:[#allocation3 + $0x38] sm:$0xff]
    %v1220 = vpack.c.bf16 %v1213, %v1212
    %v1221 = vpack.c.bf16 %v1215, %v1214
    %v1222 = vpack.c.bf16 %v1217, %v1216
    %v1223 = vpack.c.bf16 %v1219, %v1218
    %v1224 = vld [vmem:[%s4] sm:$0xff]
    %v1225 = vld [vmem:[%s4 + $0x8] sm:$0xff]
    %v1226 = vld [vmem:[%s4 + $0x10] sm:$0xff]
    %v1227 = vld [vmem:[%s4 + $0x18] sm:$0xff]
    %v1228 = vld [vmem:[%s4 + $0x20] sm:$0xff]
    %v1229 = vld [vmem:[%s4 + $0x28] sm:$0xff]
    %v1230 = vld [vmem:[%s4 + $0x30] sm:$0xff]
    %v1231 = vld [vmem:[%s4 + $0x38] sm:$0xff]
    %v1232 = vld [vmem:[#allocation4] sm:$0x3]
    %v1234 = vperm.slane %v1232, 0
    %v1235 = vperm.slane %v1232, 1
    %v1246 = vunpack.c.l.b16 %v1224
    %v1247 = vunpack.c.h.b16 %v1224
    %v1248 = vunpack.c.l.b16 %v1225
    %v1249 = vunpack.c.h.b16 %v1225
    %v1250 = vunpack.c.l.b16 %v1226
    %v1251 = vunpack.c.h.b16 %v1226
    %v1252 = vunpack.c.l.b16 %v1227
    %v1253 = vunpack.c.h.b16 %v1227
    %v1254 = vunpack.c.l.b16 %v1228
    %v1255 = vunpack.c.h.b16 %v1228
    %v1256 = vunpack.c.l.b16 %v1229
    %v1257 = vunpack.c.h.b16 %v1229
    %v1258 = vunpack.c.l.b16 %v1230
    %v1259 = vunpack.c.h.b16 %v1230
    %v1260 = vunpack.c.l.b16 %v1231
    %v1261 = vunpack.c.h.b16 %v1231
    %v1262 = vpack.c.b16 %v1248, %v1246
    %v1263 = vpack.c.b16 %v1249, %v1247
    %v1264 = vpack.c.b16 %v1252, %v1250
    %v1265 = vpack.c.b16 %v1253, %v1251
    %v1266 = vpack.c.b16 %v1256, %v1254
    %v1267 = vpack.c.b16 %v1257, %v1255
    %v1268 = vpack.c.b16 %v1260, %v1258
    %v1269 = vpack.c.b16 %v1261, %v1259
    %v1279 = vsel %vm228, %v1220, 0
    %v1282 = vsel %vm228, %v1221, 0
    %v1285 = vsel %vm228, %v1222, 0
    %v1288 = vsel %vm228, %v1223, 0
    %1290 = vmatpush.bf16.msra.mxu0 0
    %1291 = vmatpush.bf16.msra.mxu0 0
    %1292 = vmatpush.bf16.msra.mxu0 0
    %1293 = vmatpush.bf16.msra.mxu0 0
    %1294 = vmatpush.bf16.msra.mxu0 %v1268
    %1295 = vmatpush.bf16.msra.mxu0 %v1266
    %1296 = vmatpush.bf16.msra.mxu0 %v1264
    %1297 = vmatpush.bf16.msra.mxu0 %v1262
    %1298 = vmatmul.bf16.gmra.mxu0 %v1279
    %v1299 = vpop.f32.mrf.mxu0
    %v1300 = vadd.f32 %v1234, %v1299
    %v1301 = vpop.f32.mrf.mxu0
    %v1302 = vadd.f32 %v1234, %v1301
    %1303 = vmatmul.bf16.gmra.mxu0 %v1282
    %v1304 = vpop.f32.mrf.mxu0
    %v1305 = vadd.f32 %v1234, %v1304
    %v1306 = vpop.f32.mrf.mxu0
    %v1307 = vadd.f32 %v1234, %v1306
    %1308 = vmatmul.bf16.gmra.mxu0 %v1285
    %v1309 = vpop.f32.mrf.mxu0
    %v1310 = vadd.f32 %v1234, %v1309
    %v1311 = vpop.f32.mrf.mxu0
    %v1312 = vadd.f32 %v1234, %v1311
    %1313 = vmatmul.bf16.gmra.mxu0 %v1288
    %v1314 = vpop.f32.mrf.mxu0
    %v1315 = vadd.f32 %v1234, %v1314
    %v1316 = vpop.f32.mrf.mxu0
    %v1317 = vadd.f32 %v1234, %v1316
    %1318 = vdwg.mxu0
    %1319 = vmatpush.bf16.msra.mxu0 0
    %1320 = vmatpush.bf16.msra.mxu0 0
    %1321 = vmatpush.bf16.msra.mxu0 0
    %1322 = vmatpush.bf16.msra.mxu0 0
    %1323 = vmatpush.bf16.msra.mxu0 %v1269
    %1324 = vmatpush.bf16.msra.mxu0 %v1267
    %1325 = vmatpush.bf16.msra.mxu0 %v1265
    %1326 = vmatpush.bf16.msra.mxu0 %v1263
    %1327 = vmatmul.bf16.gmra.mxu0 %v1279
    %v1328 = vpop.f32.mrf.mxu0
    %v1329 = vadd.f32 %v1235, %v1328
    %v1330 = vpop.f32.mrf.mxu0
    %v1331 = vadd.f32 %v1235, %v1330
    %1332 = vmatmul.bf16.gmra.mxu0 %v1282
    %v1333 = vpop.f32.mrf.mxu0
    %v1334 = vadd.f32 %v1235, %v1333
    %v1335 = vpop.f32.mrf.mxu0
    %v1336 = vadd.f32 %v1235, %v1335
    %1337 = vmatmul.bf16.gmra.mxu0 %v1285
    %v1338 = vpop.f32.mrf.mxu0
    %v1339 = vadd.f32 %v1235, %v1338
    %v1340 = vpop.f32.mrf.mxu0
    %v1341 = vadd.f32 %v1235, %v1340
    %1342 = vmatmul.bf16.gmra.mxu0 %v1288
    %v1343 = vpop.f32.mrf.mxu0
    %v1344 = vadd.f32 %v1235, %v1343
    %v1345 = vpop.f32.mrf.mxu0
    %v1346 = vadd.f32 %v1235, %v1345
    %1347 = vdwg.mxu0
    %1348 = vst [vmem:[#allocation2] sm:$0xff] %v1300
    %1349 = vst [vmem:[#allocation2 + $0x8] sm:$0xff] %v1329
    %1350 = vst [vmem:[#allocation2 + $0x10] sm:$0xff] %v1302
    %1351 = vst [vmem:[#allocation2 + $0x18] sm:$0xff] %v1331
    %1352 = vst [vmem:[#allocation2 + $0x20] sm:$0xff] %v1305
    %1353 = vst [vmem:[#allocation2 + $0x28] sm:$0xff] %v1334
    %1354 = vst [vmem:[#allocation2 + $0x30] sm:$0xff] %v1307
    %1355 = vst [vmem:[#allocation2 + $0x38] sm:$0xff] %v1336
    %1356 = vst [vmem:[#allocation2 + $0x40] sm:$0xff] %v1310
    %1357 = vst [vmem:[#allocation2 + $0x48] sm:$0xff] %v1339
    %1358 = vst [vmem:[#allocation2 + $0x50] sm:$0xff] %v1312
    %1359 = vst [vmem:[#allocation2 + $0x58] sm:$0xff] %v1341
    %1360 = vst [vmem:[#allocation2 + $0x60] sm:$0xff] %v1315
    %1361 = vst [vmem:[#allocation2 + $0x68] sm:$0xff] %v1344
    %1362 = vst [vmem:[#allocation2 + $0x70] sm:$0xff] %v1317
    %1363 = vst [vmem:[#allocation2 + $0x78] sm:$0xff] %v1346
    %v1364 = vld [vmem:[#allocation6] sm:$0xf]
    %v1365 = vld [vmem:[#allocation6 + $0x8] sm:$0xf]
    %v1366 = vld [vmem:[#allocation6 + $0x10] sm:$0xf]
    %v1367 = vld [vmem:[#allocation6 + $0x18] sm:$0xf]
    %v1368 = vld [vmem:[%s260] sm:$0xff]
    %v1373 = vunpack.c.l.b16 %v1364
    %v1374 = vunpack.c.l.b16 %v1365
    %v1375 = vunpack.c.l.b16 %v1366
    %v1376 = vunpack.c.l.b16 %v1367
    %v1377 = vpack.c.b16 %v1374, %v1373
    %v1378 = vpack.c.b16 %v1376, %v1375
    %v1381 = vsel %vm346, 0, 0
    %1383 = vmatpush.bf16.msra.mxu0 0
    %1384 = vmatpush.bf16.msra.mxu0 0
    %1385 = vmatpush.bf16.msra.mxu0 0
    %1386 = vmatpush.bf16.msra.mxu0 0
    %1387 = vmatpush.bf16.msra.mxu0 0
    %1388 = vmatpush.bf16.msra.mxu0 0
    %1389 = vmatpush.bf16.msra.mxu0 %v1378
    %1390 = vmatpush.bf16.msra.mxu0 %v1377
    %1391 = vmatmul.bf16.gmra.mxu0 %v1381
    %v1392 = vpop.f32.mrf.mxu0
    %v1393 = vadd.f32 0.0, %v1392
    %v1394 = vpop.f32.mrf.mxu0
    %1395 = vdwg.mxu0
    %v1396 = vadd.f32 %v1368, %v1393
    %v1397 = vxor.u32 %v1396, 2147483648
    %v1398 = vmul.f32 %v1397, 1.442695
    %v1399 = vpow.pop %v1398
    %v1400 = vadd.f32 %v1399, 1.0
    %v1401 = vrcp.pop %v1400
    %v1402 = vmul.f32 %v1400, %v1401
    %v1403 = vsub.f32 1.0, %v1402
    %v1404 = vmul.f32 %v1401, %v1403
    %v1405 = vadd.f32 %v1401, %v1404
    %vm1406 = vweird.f32 %v1400
    %vm1407 = vweird.f32 %v1401
    %vm1408 = vmor %vm1406, %vm1407
    %v1409 = vsel %vm1408, %v1401, %v1405
    %v1410 = vand.u32 2147483647, %v1400
    %vm1411 = vcmp.eq.f32.partialorder %v1410, 8.507059e+37
    %v1412 = vand.u32 %v1400, 2147483648
    %v1413 = vor.u32 1.1754944e-38, %v1412
    %v1414 = vsel %vm1411, %v1413, %v1409
    %v1415 = vmul.f32 1.0, %v1414
    %v1416 = vtanh.pop %v1396
    %v1417 = vmul.f32 %v1415, 0.0
    %1419 = vrot.lane.b32.xlu0 %v1416, 64
    %v1420 = vpop.permute.xlu0 %1419
    %v1422 = vmul.f32 %v1415, %v1420
    %1424 = vrot.lane.b32.xlu0 %v1422, 32
    %v1425 = vpop.permute.xlu0 %1424
    %v1427 = vadd.f32 %v1417, %v1425
    %v1428 = vtanh.pop %v1427
    %1430 = vrot.lane.b32.xlu0 %v1428, 64
    %v1431 = vpop.permute.xlu0 %1430
    %v1433 = vmul.f32 %v1415, %v1431
    %v1434 = vld [vmem:[%s388] sm:$0xff]
    %v1435 = vpack.c.bf16 %v1433, %v1433
    %1437 = vrot.lane.b32.xlu0 %v1435, 32
    %v1438 = vpop.permute.xlu0 %1437
    %v1440 = vsel %vm346, %v1438, 0
    %1442 = vmatpush.bf16.msra.mxu0 0
    %1443 = vmatpush.bf16.msra.mxu0 0
    %1444 = vmatpush.bf16.msra.mxu0 0
    %1445 = vmatpush.bf16.msra.mxu0 0
    %1446 = vmatpush.bf16.msra.mxu0 0
    %1447 = vmatpush.bf16.msra.mxu0 0
    %1448 = vmatpush.bf16.msra.mxu0 %v1378
    %1449 = vmatpush.bf16.msra.mxu0 %v1377
    %1450 = vmatmul.bf16.gmra.mxu0 %v1440
    %v1451 = vpop.f32.mrf.mxu0
    %v1452 = vadd.f32 0.0, %v1451
    %v1453 = vpop.f32.mrf.mxu0
    %1454 = vdwg.mxu0
    %v1455 = vadd.f32 %v1434, %v1452
    %v1456 = vxor.u32 %v1455, 2147483648
    %v1457 = vmul.f32 %v1456, 1.442695
    %v1458 = vpow.pop %v1457
    %v1459 = vadd.f32 %v1458, 1.0
    %v1460 = vrcp.pop %v1459
    %v1461 = vmul.f32 %v1459, %v1460
    %v1462 = vsub.f32 1.0, %v1461
    %v1463 = vmul.f32 %v1460, %v1462
    %v1464 = vadd.f32 %v1460, %v1463
    %vm1465 = vweird.f32 %v1459
    %vm1466 = vweird.f32 %v1460
    %vm1467 = vmor %vm1465, %vm1466
    %v1468 = vsel %vm1467, %v1460, %v1464
    %v1469 = vand.u32 2147483647, %v1459
    %vm1470 = vcmp.eq.f32.partialorder %v1469, 8.507059e+37
    %v1471 = vand.u32 %v1459, 2147483648
    %v1472 = vor.u32 1.1754944e-38, %v1471
    %v1473 = vsel %vm1470, %v1472, %v1468
    %v1474 = vmul.f32 1.0, %v1473
    %v1475 = vtanh.pop %v1455
    %v1476 = vmul.f32 %v1474, %v1427
    %1478 = vrot.lane.b32.xlu0 %v1475, 64
    %v1479 = vpop.permute.xlu0 %1478
    %v1481 = vmul.f32 %v1474, %v1479
    %1483 = vrot.lane.b32.xlu0 %v1481, 32
    %v1484 = vpop.permute.xlu0 %1483
    %v1486 = vadd.f32 %v1476, %v1484
    %v1487 = vtanh.pop %v1486
    %1489 = vrot.lane.b32.xlu0 %v1487, 64
    %v1490 = vpop.permute.xlu0 %1489
    %v1492 = vmul.f32 %v1474, %v1490
    %v1493 = vld [vmem:[%s515] sm:$0xff]
    %v1494 = vpack.c.bf16 %v1492, %v1492
    %1496 = vrot.lane.b32.xlu0 %v1494, 32
    %v1497 = vpop.permute.xlu0 %1496
    %v1499 = vsel %vm346, %v1497, 0
    %1501 = vmatpush.bf16.msra.mxu0 0
    %1502 = vmatpush.bf16.msra.mxu0 0
    %1503 = vmatpush.bf16.msra.mxu0 0
    %1504 = vmatpush.bf16.msra.mxu0 0
    %1505 = vmatpush.bf16.msra.mxu0 0
    %1506 = vmatpush.bf16.msra.mxu0 0
    %1507 = vmatpush.bf16.msra.mxu0 %v1378
    %1508 = vmatpush.bf16.msra.mxu0 %v1377
    %1509 = vmatmul.bf16.gmra.mxu0 %v1499
    %v1510 = vpop.f32.mrf.mxu0
    %v1511 = vadd.f32 0.0, %v1510
    %v1512 = vpop.f32.mrf.mxu0
    %1513 = vdwg.mxu0
    %v1514 = vadd.f32 %v1493, %v1511
    %v1515 = vxor.u32 %v1514, 2147483648
    %v1516 = vmul.f32 %v1515, 1.442695
    %v1517 = vpow.pop %v1516
    %v1518 = vadd.f32 %v1517, 1.0
    %v1519 = vrcp.pop %v1518
    %v1520 = vmul.f32 %v1518, %v1519
    %v1521 = vsub.f32 1.0, %v1520
    %v1522 = vmul.f32 %v1519, %v1521
    %v1523 = vadd.f32 %v1519, %v1522
    %vm1524 = vweird.f32 %v1518
    %vm1525 = vweird.f32 %v1519
    %vm1526 = vmor %vm1524, %vm1525
    %v1527 = vsel %vm1526, %v1519, %v1523
    %v1528 = vand.u32 2147483647, %v1518
    %vm1529 = vcmp.eq.f32.partialorder %v1528, 8.507059e+37
    %v1530 = vand.u32 %v1518, 2147483648
    %v1531 = vor.u32 1.1754944e-38, %v1530
    %v1532 = vsel %vm1529, %v1531, %v1527
    %v1533 = vmul.f32 1.0, %v1532
    %v1534 = vtanh.pop %v1514
    %v1535 = vmul.f32 %v1533, %v1486
    %1537 = vrot.lane.b32.xlu0 %v1534, 64
    %v1538 = vpop.permute.xlu0 %1537
    %v1540 = vmul.f32 %v1533, %v1538
    %1542 = vrot.lane.b32.xlu0 %v1540, 32
    %v1543 = vpop.permute.xlu0 %1542
    %v1545 = vadd.f32 %v1535, %v1543
    %v1546 = vtanh.pop %v1545
    %1548 = vrot.lane.b32.xlu0 %v1546, 64
    %v1549 = vpop.permute.xlu0 %1548
    %v1551 = vmul.f32 %v1533, %v1549
    %v1552 = vld [vmem:[%s642] sm:$0xff]
    %v1553 = vpack.c.bf16 %v1551, %v1551
    %1555 = vrot.lane.b32.xlu0 %v1553, 32
    %v1556 = vpop.permute.xlu0 %1555
    %v1558 = vsel %vm346, %v1556, 0
    %1560 = vmatpush.bf16.msra.mxu0 0
    %1561 = vmatpush.bf16.msra.mxu0 0
    %1562 = vmatpush.bf16.msra.mxu0 0
    %1563 = vmatpush.bf16.msra.mxu0 0
    %1564 = vmatpush.bf16.msra.mxu0 0
    %1565 = vmatpush.bf16.msra.mxu0 0
    %1566 = vmatpush.bf16.msra.mxu0 %v1378
    %1567 = vmatpush.bf16.msra.mxu0 %v1377
    %1568 = vmatmul.bf16.gmra.mxu0 %v1558
    %v1569 = vpop.f32.mrf.mxu0
    %v1570 = vadd.f32 0.0, %v1569
    %v1571 = vpop.f32.mrf.mxu0
    %1572 = vdwg.mxu0
    %v1573 = vadd.f32 %v1552, %v1570
    %v1574 = vxor.u32 %v1573, 2147483648
    %v1575 = vmul.f32 %v1574, 1.442695
    %v1576 = vpow.pop %v1575
    %v1577 = vadd.f32 %v1576, 1.0
    %v1578 = vrcp.pop %v1577
    %v1579 = vmul.f32 %v1577, %v1578
    %v1580 = vsub.f32 1.0, %v1579
    %v1581 = vmul.f32 %v1578, %v1580
    %v1582 = vadd.f32 %v1578, %v1581
    %vm1583 = vweird.f32 %v1577
    %vm1584 = vweird.f32 %v1578
    %vm1585 = vmor %vm1583, %vm1584
    %v1586 = vsel %vm1585, %v1578, %v1582
    %v1587 = vand.u32 2147483647, %v1577
    %vm1588 = vcmp.eq.f32.partialorder %v1587, 8.507059e+37
    %v1589 = vand.u32 %v1577, 2147483648
    %v1590 = vor.u32 1.1754944e-38, %v1589
    %v1591 = vsel %vm1588, %v1590, %v1586
    %v1592 = vmul.f32 1.0, %v1591
    %v1593 = vtanh.pop %v1573
    %v1594 = vmul.f32 %v1592, %v1545
    %1596 = vrot.lane.b32.xlu0 %v1593, 64
    %v1597 = vpop.permute.xlu0 %1596
    %v1599 = vmul.f32 %v1592, %v1597
    %1601 = vrot.lane.b32.xlu0 %v1599, 32
    %v1602 = vpop.permute.xlu0 %1601
    %v1604 = vadd.f32 %v1594, %v1602
    %v1605 = vtanh.pop %v1604
    %1607 = vrot.lane.b32.xlu0 %v1605, 64
    %v1608 = vpop.permute.xlu0 %1607
    %v1610 = vmul.f32 %v1592, %v1608
    %v1611 = vld [vmem:[%s647] sm:$0xff]
    %v1612 = vpack.c.bf16 %v1610, %v1610
    %1614 = vrot.lane.b32.xlu0 %v1612, 32
    %v1615 = vpop.permute.xlu0 %1614
    %v1617 = vsel %vm346, %v1615, 0
    %1619 = vmatpush.bf16.msra.mxu0 0
    %1620 = vmatpush.bf16.msra.mxu0 0
    %1621 = vmatpush.bf16.msra.mxu0 0
    %1622 = vmatpush.bf16.msra.mxu0 0
    %1623 = vmatpush.bf16.msra.mxu0 0
    %1624 = vmatpush.bf16.msra.mxu0 0
    %1625 = vmatpush.bf16.msra.mxu0 %v1378
    %1626 = vmatpush.bf16.msra.mxu0 %v1377
    %1627 = vmatmul.bf16.gmra.mxu0 %v1617
    %v1628 = vpop.f32.mrf.mxu0
    %v1629 = vadd.f32 0.0, %v1628
    %v1630 = vpop.f32.mrf.mxu0
    %1631 = vdwg.mxu0
    %v1632 = vadd.f32 %v1611, %v1629
    %v1633 = vxor.u32 %v1632, 2147483648
    %v1634 = vmul.f32 %v1633, 1.442695
    %v1635 = vpow.pop %v1634
    %v1636 = vadd.f32 %v1635, 1.0
    %v1637 = vrcp.pop %v1636
    %v1638 = vmul.f32 %v1636, %v1637
    %v1639 = vsub.f32 1.0, %v1638
    %v1640 = vmul.f32 %v1637, %v1639
    %v1641 = vadd.f32 %v1637, %v1640
    %vm1642 = vweird.f32 %v1636
    %vm1643 = vweird.f32 %v1637
    %vm1644 = vmor %vm1642, %vm1643
    %v1645 = vsel %vm1644, %v1637, %v1641
    %v1646 = vand.u32 2147483647, %v1636
    %vm1647 = vcmp.eq.f32.partialorder %v1646, 8.507059e+37
    %v1648 = vand.u32 %v1636, 2147483648
    %v1649 = vor.u32 1.1754944e-38, %v1648
    %v1650 = vsel %vm1647, %v1649, %v1645
    %v1651 = vmul.f32 1.0, %v1650
    %v1652 = vtanh.pop %v1632
    %v1653 = vmul.f32 %v1651, %v1604
    %1655 = vrot.lane.b32.xlu0 %v1652, 64
    %v1656 = vpop.permute.xlu0 %1655
    %v1658 = vmul.f32 %v1651, %v1656
    %1660 = vrot.lane.b32.xlu0 %v1658, 32
    %v1661 = vpop.permute.xlu0 %1660
    %v1663 = vadd.f32 %v1653, %v1661
    %v1664 = vtanh.pop %v1663
    %1666 = vrot.lane.b32.xlu0 %v1664, 64
    %v1667 = vpop.permute.xlu0 %1666
    %v1669 = vmul.f32 %v1651, %v1667
    %v1670 = vld [vmem:[%s520] sm:$0xff]
    %v1671 = vpack.c.bf16 %v1669, %v1669
    %1673 = vrot.lane.b32.xlu0 %v1671, 32
    %v1674 = vpop.permute.xlu0 %1673
    %v1676 = vsel %vm346, %v1674, 0
    %1678 = vmatpush.bf16.msra.mxu0 0
    %1679 = vmatpush.bf16.msra.mxu0 0
    %1680 = vmatpush.bf16.msra.mxu0 0
    %1681 = vmatpush.bf16.msra.mxu0 0
    %1682 = vmatpush.bf16.msra.mxu0 0
    %1683 = vmatpush.bf16.msra.mxu0 0
    %1684 = vmatpush.bf16.msra.mxu0 %v1378
    %1685 = vmatpush.bf16.msra.mxu0 %v1377
    %1686 = vmatmul.bf16.gmra.mxu0 %v1676
    %v1687 = vpop.f32.mrf.mxu0
    %v1688 = vadd.f32 0.0, %v1687
    %v1689 = vpop.f32.mrf.mxu0
    %1690 = vdwg.mxu0
    %v1691 = vadd.f32 %v1670, %v1688
    %v1692 = vxor.u32 %v1691, 2147483648
    %v1693 = vmul.f32 %v1692, 1.442695
    %v1694 = vpow.pop %v1693
    %v1695 = vadd.f32 %v1694, 1.0
    %v1696 = vrcp.pop %v1695
    %v1697 = vmul.f32 %v1695, %v1696
    %v1698 = vsub.f32 1.0, %v1697
    %v1699 = vmul.f32 %v1696, %v1698
    %v1700 = vadd.f32 %v1696, %v1699
    %vm1701 = vweird.f32 %v1695
    %vm1702 = vweird.f32 %v1696
    %vm1703 = vmor %vm1701, %vm1702
    %v1704 = vsel %vm1703, %v1696, %v1700
    %v1705 = vand.u32 2147483647, %v1695
    %vm1706 = vcmp.eq.f32.partialorder %v1705, 8.507059e+37
    %v1707 = vand.u32 %v1695, 2147483648
    %v1708 = vor.u32 1.1754944e-38, %v1707
    %v1709 = vsel %vm1706, %v1708, %v1704
    %v1710 = vmul.f32 1.0, %v1709
    %v1711 = vtanh.pop %v1691
    %v1712 = vmul.f32 %v1710, %v1663
    %1714 = vrot.lane.b32.xlu0 %v1711, 64
    %v1715 = vpop.permute.xlu0 %1714
    %v1717 = vmul.f32 %v1710, %v1715
    %1719 = vrot.lane.b32.xlu0 %v1717, 32
    %v1720 = vpop.permute.xlu0 %1719
    %v1722 = vadd.f32 %v1712, %v1720
    %v1723 = vtanh.pop %v1722
    %1725 = vrot.lane.b32.xlu0 %v1723, 64
    %v1726 = vpop.permute.xlu0 %1725
    %v1728 = vmul.f32 %v1710, %v1726
    %v1729 = vld [vmem:[%s393] sm:$0xff]
    %v1730 = vpack.c.bf16 %v1728, %v1728
    %1732 = vrot.lane.b32.xlu0 %v1730, 32
    %v1733 = vpop.permute.xlu0 %1732
    %v1735 = vsel %vm346, %v1733, 0
    %1737 = vmatpush.bf16.msra.mxu0 0
    %1738 = vmatpush.bf16.msra.mxu0 0
    %1739 = vmatpush.bf16.msra.mxu0 0
    %1740 = vmatpush.bf16.msra.mxu0 0
    %1741 = vmatpush.bf16.msra.mxu0 0
    %1742 = vmatpush.bf16.msra.mxu0 0
    %1743 = vmatpush.bf16.msra.mxu0 %v1378
    %1744 = vmatpush.bf16.msra.mxu0 %v1377
    %1745 = vmatmul.bf16.gmra.mxu0 %v1735
    %v1746 = vpop.f32.mrf.mxu0
    %v1747 = vadd.f32 0.0, %v1746
    %v1748 = vpop.f32.mrf.mxu0
    %1749 = vdwg.mxu0
    %v1750 = vadd.f32 %v1729, %v1747
    %v1751 = vxor.u32 %v1750, 2147483648
    %v1752 = vmul.f32 %v1751, 1.442695
    %v1753 = vpow.pop %v1752
    %v1754 = vadd.f32 %v1753, 1.0
    %v1755 = vrcp.pop %v1754
    %v1756 = vmul.f32 %v1754, %v1755
    %v1757 = vsub.f32 1.0, %v1756
    %v1758 = vmul.f32 %v1755, %v1757
    %v1759 = vadd.f32 %v1755, %v1758
    %vm1760 = vweird.f32 %v1754
    %vm1761 = vweird.f32 %v1755
    %vm1762 = vmor %vm1760, %vm1761
    %v1763 = vsel %vm1762, %v1755, %v1759
    %v1764 = vand.u32 2147483647, %v1754
    %vm1765 = vcmp.eq.f32.partialorder %v1764, 8.507059e+37
    %v1766 = vand.u32 %v1754, 2147483648
    %v1767 = vor.u32 1.1754944e-38, %v1766
    %v1768 = vsel %vm1765, %v1767, %v1763
    %v1769 = vmul.f32 1.0, %v1768
    %v1770 = vtanh.pop %v1750
    %v1771 = vmul.f32 %v1769, %v1722
    %1773 = vrot.lane.b32.xlu0 %v1770, 64
    %v1774 = vpop.permute.xlu0 %1773
    %v1776 = vmul.f32 %v1769, %v1774
    %1778 = vrot.lane.b32.xlu0 %v1776, 32
    %v1779 = vpop.permute.xlu0 %1778
    %v1781 = vadd.f32 %v1771, %v1779
    %v1782 = vtanh.pop %v1781
    %1784 = vrot.lane.b32.xlu0 %v1782, 64
    %v1785 = vpop.permute.xlu0 %1784
    %v1787 = vmul.f32 %v1769, %v1785
    %v1788 = vld [vmem:[%s265] sm:$0xff]
    %v1789 = vpack.c.bf16 %v1787, %v1787
    %1791 = vrot.lane.b32.xlu0 %v1789, 32
    %v1792 = vpop.permute.xlu0 %1791
    %v1794 = vsel %vm346, %v1792, 0
    %1796 = vmatpush.bf16.msra.mxu0 0
    %1797 = vmatpush.bf16.msra.mxu0 0
    %1798 = vmatpush.bf16.msra.mxu0 0
    %1799 = vmatpush.bf16.msra.mxu0 0
    %1800 = vmatpush.bf16.msra.mxu0 0
    %1801 = vmatpush.bf16.msra.mxu0 0
    %1802 = vmatpush.bf16.msra.mxu0 %v1378
    %1803 = vmatpush.bf16.msra.mxu0 %v1377
    %1804 = vmatmul.bf16.gmra.mxu0 %v1794
    %v1805 = vpop.f32.mrf.mxu0
    %v1806 = vadd.f32 0.0, %v1805
    %v1807 = vpop.f32.mrf.mxu0
    %1808 = vdwg.mxu0
    %v1809 = vadd.f32 %v1788, %v1806
    %v1810 = vxor.u32 %v1809, 2147483648
    %v1811 = vmul.f32 %v1810, 1.442695
    %v1812 = vpow.pop %v1811
    %v1813 = vadd.f32 %v1812, 1.0
    %v1814 = vrcp.pop %v1813
    %v1815 = vmul.f32 %v1813, %v1814
    %v1816 = vsub.f32 1.0, %v1815
    %v1817 = vmul.f32 %v1814, %v1816
    %v1818 = vadd.f32 %v1814, %v1817
    %vm1819 = vweird.f32 %v1813
    %vm1820 = vweird.f32 %v1814
    %vm1821 = vmor %vm1819, %vm1820
    %v1822 = vsel %vm1821, %v1814, %v1818
    %v1823 = vand.u32 2147483647, %v1813
    %vm1824 = vcmp.eq.f32.partialorder %v1823, 8.507059e+37
    %v1825 = vand.u32 %v1813, 2147483648
    %v1826 = vor.u32 1.1754944e-38, %v1825
    %v1827 = vsel %vm1824, %v1826, %v1822
    %v1828 = vmul.f32 1.0, %v1827
    %v1829 = vtanh.pop %v1809
    %v1830 = vmul.f32 %v1828, %v1781
    %1832 = vrot.lane.b32.xlu0 %v1829, 64
    %v1833 = vpop.permute.xlu0 %1832
    %v1835 = vmul.f32 %v1828, %v1833
    %1837 = vrot.lane.b32.xlu0 %v1835, 32
    %v1838 = vpop.permute.xlu0 %1837
    %v1840 = vadd.f32 %v1830, %v1838
    %v1841 = vtanh.pop %v1840
    %1843 = vrot.lane.b32.xlu0 %v1841, 64
    %v1844 = vpop.permute.xlu0 %1843
    %v1846 = vmul.f32 %v1828, %v1844
    %v1847 = vld [vmem:[#allocation2 + $0x78] sm:$0xff]
    %v1848 = vxor.u32 %v1847, 2147483648
    %v1849 = vmul.f32 %v1848, 1.442695
    %v1850 = vpow.pop %v1849
    %v1851 = vadd.f32 %v1850, 1.0
    %v1852 = vrcp.pop %v1851
    %v1853 = vmul.f32 %v1851, %v1852
    %v1854 = vsub.f32 1.0, %v1853
    %v1855 = vmul.f32 %v1852, %v1854
    %v1856 = vadd.f32 %v1852, %v1855
    %vm1857 = vweird.f32 %v1851
    %vm1858 = vweird.f32 %v1852
    %vm1859 = vmor %vm1857, %vm1858
    %v1860 = vsel %vm1859, %v1852, %v1856
    %v1861 = vand.u32 2147483647, %v1851
    %vm1862 = vcmp.eq.f32.partialorder %v1861, 8.507059e+37
    %v1863 = vand.u32 %v1851, 2147483648
    %v1864 = vor.u32 1.1754944e-38, %v1863
    %v1865 = vsel %vm1862, %v1864, %v1860
    %v1866 = vmul.f32 1.0, %v1865
    %v1867 = vtanh.pop %v1847
    %v1868 = vmul.f32 %v1866, 0.0
    %1870 = vrot.lane.b32.xlu0 %v1867, 64
    %v1871 = vpop.permute.xlu0 %1870
    %v1873 = vmul.f32 %v1866, %v1871
    %1875 = vrot.lane.b32.xlu0 %v1873, 32
    %v1876 = vpop.permute.xlu0 %1875
    %v1878 = vadd.f32 %v1868, %v1876
    %v1879 = vtanh.pop %v1878
    %1881 = vrot.lane.b32.xlu0 %v1879, 64
    %v1882 = vpop.permute.xlu0 %1881
    %v1884 = vmul.f32 %v1866, %v1882
    %1886 = vrot.lane.b32.xlu0 %v1846, 32
    %v1887 = vpop.permute.xlu0 %1886
    %1890 = vrot.lane.b32.xlu0 %v1884, 64
    %v1891 = vpop.permute.xlu0 %1890
    %v1893 = vsel %vm346, %v1887, %v1891
    %v1894 = vpack.c.bf16 %v1893, %v1893
    %v1895 = vld [vmem:[%s7] sm:$0xf]
    %v1896 = vld [vmem:[%s7 + $0x4] sm:$0xf]
    %v1897 = vld [vmem:[%s7 + $0x8] sm:$0xf]
    %v1898 = vld [vmem:[%s7 + $0xc] sm:$0xf]
    %v1899 = vld [vmem:[%s7 + $0x10] sm:$0xf]
    %v1900 = vld [vmem:[%s7 + $0x14] sm:$0xf]
    %v1901 = vld [vmem:[%s7 + $0x18] sm:$0xf]
    %v1902 = vld [vmem:[%s7 + $0x1c] sm:$0xf]
    %v1903 = vld [vmem:[%s8] sm:$0x1]
    %v1905 = vperm.slane %v1903, 0
    %v1915 = vunpack.c.l.b16 %v1895
    %v1916 = vunpack.c.l.b16 %v1896
    %v1917 = vunpack.c.l.b16 %v1897
    %v1918 = vunpack.c.l.b16 %v1898
    %v1919 = vunpack.c.l.b16 %v1899
    %v1920 = vunpack.c.l.b16 %v1900
    %v1921 = vunpack.c.l.b16 %v1901
    %v1922 = vunpack.c.l.b16 %v1902
    %v1923 = vpack.c.b16 %v1916, %v1915
    %v1924 = vpack.c.b16 %v1918, %v1917
    %v1925 = vpack.c.b16 %v1920, %v1919
    %v1926 = vpack.c.b16 %v1922, %v1921
    %v1932 = vsel %vm228, %v1894, 0
    %1934 = vmatpush.bf16.msra.mxu0 0
    %1935 = vmatpush.bf16.msra.mxu0 0
    %1936 = vmatpush.bf16.msra.mxu0 0
    %1937 = vmatpush.bf16.msra.mxu0 0
    %1938 = vmatpush.bf16.msra.mxu0 %v1926
    %1939 = vmatpush.bf16.msra.mxu0 %v1925
    %1940 = vmatpush.bf16.msra.mxu0 %v1924
    %1941 = vmatpush.bf16.msra.mxu0 %v1923
    %1942 = vmatmul.bf16.gmra.mxu0 %v1932
    %v1943 = vpop.f32.mrf.mxu0
    %v1944 = vadd.f32 %v1905, %v1943
    %v1945 = vpop.f32.mrf.mxu0
    %1946 = vdwg.mxu0
    %v1947 = vmax.f32 %v1944, 0.0
    %vm1948 = vcmask 80896
    %1949 = vst.msk [vmem:[%s9] sm:$0xff] %vm1948, %v1947
    // Predicated region
    $region46: #{lstm_model_forward.1} parent=1 // pred_check
      _
    $region47: #{lstm_model_forward.1} parent=1 // pred_check_branch
      %1951 = sbr.rel (0) target = $region49
    $region48: #{lstm_model_forward.1} parent=1 // pred_region
      _
    $region49: #{lstm_model_forward.1} parent=1 // pred_fallthru
      _
    // Predicated region
    $region50: #{lstm_model_forward.1} parent=1 // pred_check
      _
    $region51: #{lstm_model_forward.1} parent=1 // pred_check_branch
      %1953 = sbr.rel (0) target = $region53
    $region52: #{lstm_model_forward.1} parent=1 // pred_region
      _
    $region53: #{lstm_model_forward.1} parent=1 // pred_fallthru
      _
    %1954 = vsyncpa [#allocation5], 1
    %1955 = vsyncpa [#allocation7], 1

</llo_original>
